<compile_context>
chip_gen: v5e
topology: v5e:2x2
jax: 0.10.0
libtpu: 0.0.40
codegen_flags: <defaults>
</compile_context>

<pallas_src>
import functools

import jax
import jax.numpy as jnp
from jax import lax
from jax.experimental import pallas as pl
from jax.experimental.pallas import tpu as pltpu

BN_EPS = 1e-5


# ----------------------------------------------------------------------------
# VMEM budgeting helpers (generation aware, with a safe fallback).
# ----------------------------------------------------------------------------
def _tpu_vmem_capacity_bytes():
    try:
        return int(pltpu.get_tpu_info().vmem_capacity_bytes)
    except Exception:
        return 64 * 1024 * 1024  # assume the smallest (v7x-sized) VMEM


def _pick_tile_rows(H, W, Cin, Cout, budget_bytes):
    """Largest row-tile TH (H itself, or a multiple-of-8 divisor of H) whose
    per-grid-step working set fits the VMEM budget."""
    def need(th):
        return (2 * th * W * Cin * 4            # double-buffered f32 input block
                + 2 * th * W * Cout * 4         # double-buffered f32 output block
                + (th + 2) * (W + 2) * Cin * 2  # bf16 padded tile scratch
                + 9 * Cin * th * W * 2          # bf16 im2col operand
                + th * W * Cout * 4)            # f32 matmul result
    if need(H) <= budget_bytes:
        return H
    for th in sorted((t for t in range(8, H, 8) if H % t == 0), reverse=True):
        if need(th) <= budget_bytes:
            return th
    return 8 if H % 8 == 0 else H


# ----------------------------------------------------------------------------
# Kernel 1: fused [optional input BN+ReLU] -> 3x3 conv (pad=1, no bias)
#           as a single im2col GEMM + per-image BatchNorm partial stats.
# Grid: (N, H // TH).  NCHW in, flattened NCHW (N, Cout, H*W) out (lane-dense).
# ----------------------------------------------------------------------------
def _conv3x3_stats_kernel(x_ref, x_hbm_ref, w_ref, sc_ref, sh_ref,
                          out_ref, stats_ref,
                          xpad_ref, halo_ref, dma_sem,
                          *, TH, W, Cin, Cout, nH, fuse_in):
    n = pl.program_id(0)
    h = pl.program_id(1)

    def act(v):
        # Previous layer's BatchNorm + ReLU fused into the load path (applied
        # to real pixels only; the zero border stays zero, matching PyTorch
        # where Conv2d zero-pads *after* BN+ReLU), then one f32->bf16 cast.
        if fuse_in:
            sc = sc_ref[...].reshape(Cin, 1, 1)
            sh = sh_ref[...].reshape(Cin, 1, 1)
            v = jnp.maximum(v * sc + sh, 0.0)
        return v.astype(jnp.bfloat16)

    # --- issue both halo-row DMAs up front so they overlap the body work ----
    if nH > 1:
        @pl.when(h > 0)
        def _():
            pltpu.make_async_copy(
                x_hbm_ref.at[n, :, pl.ds(h * TH - 1, 1), :],
                halo_ref.at[0], dma_sem.at[0]).start()

        @pl.when(h < nH - 1)
        def _():
            pltpu.make_async_copy(
                x_hbm_ref.at[n, :, pl.ds((h + 1) * TH, 1), :],
                halo_ref.at[1], dma_sem.at[1]).start()

    # --- assemble the zero-padded bf16 tile (Cin, TH+2, W+2) in VMEM --------
    zcol = jnp.zeros((Cin, TH + 2, 1), jnp.bfloat16)
    xpad_ref[:, :, 0:1] = zcol                      # left halo column
    xpad_ref[:, :, W + 1:W + 2] = zcol              # right halo column
    xpad_ref[:, 1:TH + 1, 1:W + 1] = act(x_ref[...].reshape(Cin, TH, W))

    zrow = jnp.zeros((Cin, 1, W + 2), jnp.bfloat16)
    if nH > 1:
        @pl.when(h == 0)
        def _():
            xpad_ref[:, 0:1, :] = zrow

        @pl.when(h > 0)
        def _():
            pltpu.make_async_copy(
                x_hbm_ref.at[n, :, pl.ds(h * TH - 1, 1), :],
                halo_ref.at[0], dma_sem.at[0]).wait()
            xpad_ref[:, 0:1, 1:W + 1] = act(halo_ref[0])

        @pl.when(h == nH - 1)
        def _():
            xpad_ref[:, TH + 1:TH + 2, :] = zrow

        @pl.when(h < nH - 1)
        def _():
            pltpu.make_async_copy(
                x_hbm_ref.at[n, :, pl.ds((h + 1) * TH, 1), :],
                halo_ref.at[1], dma_sem.at[1]).wait()
            xpad_ref[:, TH + 1:TH + 2, 1:W + 1] = act(halo_ref[1])
    else:
        # The whole image fits one tile: top/bottom padding is just zeros.
        xpad_ref[:, 0:1, :] = zrow
        xpad_ref[:, TH + 1:TH + 2, :] = zrow

    # --- im2col: one (9*Cin, TH*W) bf16 operand, single MXU matmul ----------
    slabs = [xpad_ref[:, dy:dy + TH, dx:dx + W]          # (Cin, TH, W) bf16
             for dy in range(3) for dx in range(3)]
    rhs = jnp.concatenate(slabs, axis=0).reshape(9 * Cin, TH * W)

    # Weight-stationary orientation: result (Cout, TH*W) is lane-dense and is
    # exactly the flattened NCHW output tile -> one unmasked store, no acc ref.
    res = jnp.dot(w_ref[...], rhs, preferred_element_type=jnp.float32)
    out_ref[...] = res.reshape(1, Cout, TH * W)

    # --- per-image BatchNorm partial stats, accumulated across the h axis ---
    ssum = jnp.sum(res, axis=1, keepdims=True)           # (Cout, 1)
    ssq = jnp.sum(res * res, axis=1, keepdims=True)      # (Cout, 1)
    part = jnp.concatenate([ssum, ssq], axis=1).reshape(1, Cout, 2)
    if nH > 1:
        @pl.when(h == 0)
        def _():
            stats_ref[...] = jnp.zeros_like(stats_ref)
        stats_ref[...] += part                            # written once per n
    else:
        stats_ref[...] = part


def conv3x3_bn_stats(x_nchw, w_oihw, in_scale=None, in_shift=None):
    """3x3 SAME conv (no bias) over an NCHW fp32 input.

    Returns (conv output as an (N, Cout, H*W) fp32 slab, per-channel sum,
    per-channel sum of squares).  If in_scale / in_shift are given,
    y = relu(x*scale + shift) (the previous layer's BN + ReLU) is fused into
    the input load path."""
    x_nchw = x_nchw.astype(jnp.float32)
    N, Cin, H, W = x_nchw.shape
    Cout = w_oihw.shape[0]

    vmem_cap = _tpu_vmem_capacity_bytes()
    TH = _pick_tile_rows(H, W, Cin, Cout, budget_bytes=vmem_cap // 4)
    nH = H // TH

    fuse = in_scale is not None
    if fuse:
        sc = in_scale.reshape(Cin, 1).astype(jnp.float32)
        sh = in_shift.reshape(Cin, 1).astype(jnp.float32)
    else:
        sc = jnp.ones((Cin, 1), jnp.float32)
        sh = jnp.zeros((Cin, 1), jnp.float32)

    # OIHW -> (Cout, 9*Cin) with tap-major ordering (dy, dx, ci), matching the
    # in-kernel im2col row order.
    w_flat = jnp.transpose(w_oihw, (0, 2, 3, 1)).reshape(Cout, 9 * Cin)
    w_flat = w_flat.astype(jnp.bfloat16)

    kernel = functools.partial(_conv3x3_stats_kernel, TH=TH, W=W, Cin=Cin,
                               Cout=Cout, nH=nH, fuse_in=fuse)

    grid_spec = pltpu.PrefetchScalarGridSpec(
        num_scalar_prefetch=0,
        grid=(N, nH),
        in_specs=[
            pl.BlockSpec((1, Cin, TH, W), lambda n, h: (n, 0, h, 0)),
            pl.BlockSpec(memory_space=pl.ANY),   # same array, for halo DMAs
            pl.BlockSpec((Cout, 9 * Cin), lambda n, h: (0, 0)),
            pl.BlockSpec((Cin, 1), lambda n, h: (0, 0)),
            pl.BlockSpec((Cin, 1), lambda n, h: (0, 0)),
        ],
        out_specs=[
            pl.BlockSpec((1, Cout, TH * W), lambda n, h: (n, 0, h)),
            pl.BlockSpec((1, Cout, 2), lambda n, h: (n, 0, 0)),
        ],
        scratch_shapes=[
            pltpu.VMEM((Cin, TH + 2, W + 2), jnp.bfloat16),   # padded tile
            pltpu.VMEM((2, Cin, 1, W), jnp.float32),          # halo staging
            pltpu.SemaphoreType.DMA((2,)),
        ],
    )

    conv_flat, stats = pl.pallas_call(
        kernel,
        out_shape=(jax.ShapeDtypeStruct((N, Cout, H * W), jnp.float32),
                   jax.ShapeDtypeStruct((N, Cout, 2), jnp.float32)),
        grid_spec=grid_spec,
        compiler_params=pltpu.CompilerParams(
            dimension_semantics=("parallel", "arbitrary"),
            vmem_limit_bytes=min(vmem_cap * 3 // 4, 112 * 1024 * 1024)),
    )(x_nchw, x_nchw, w_flat, sc, sh)

    ssum = jnp.sum(stats[:, :, 0], axis=0)    # (Cout,)
    ssq = jnp.sum(stats[:, :, 1], axis=0)     # (Cout,)
    return conv_flat, ssum, ssq


# ----------------------------------------------------------------------------
# Kernel 2: final BatchNorm (precomputed scale/shift) + ReLU on the flattened
# NCHW slab: rows = (n, c) pairs, lanes = H*W pixels  -> lane-dense.
# ----------------------------------------------------------------------------
def _bn_relu_kernel(x_ref, sc_ref, sh_ref, o_ref):
    o_ref[...] = jnp.maximum(x_ref[...] * sc_ref[...] + sh_ref[...], 0.0)


def bn_relu_rows(y_flat, scale, shift):
    N, C, HW = y_flat.shape
    rows = N * C
    x2d = y_flat.reshape(rows, HW)
    sc = jnp.tile(scale.reshape(1, C), (N, 1)).reshape(rows, 1).astype(jnp.float32)
    sh = jnp.tile(shift.reshape(1, C), (N, 1)).reshape(rows, 1).astype(jnp.float32)

    TR = rows
    for cand in (1024, 512, 256, 128, 64, 32, 16, 8):
        if rows % cand == 0:
            TR = cand
            break

    out2d = pl.pallas_call(
        _bn_relu_kernel,
        out_shape=jax.ShapeDtypeStruct((rows, HW), jnp.float32),
        grid=(rows // TR,),
        in_specs=[pl.BlockSpec((TR, HW), lambda i: (i, 0)),
                  pl.BlockSpec((TR, 1), lambda i: (i, 0)),
                  pl.BlockSpec((TR, 1), lambda i: (i, 0))],
        out_specs=pl.BlockSpec((TR, HW), lambda i: (i, 0)),
        compiler_params=pltpu.CompilerParams(
            dimension_semantics=("parallel",)),
    )(x2d, sc, sh)
    return out2d.reshape(N, C, HW)


# ----------------------------------------------------------------------------
# Glue: BN affine from global stats, bilinear upsample / pad / concat, params.
# ----------------------------------------------------------------------------
def _bn_scale_shift(ssum, ssq, count, gamma, beta):
    mean = ssum / count
    var = jnp.maximum(ssq / count - mean * mean, 0.0)   # clamp: one-pass var
    inv = lax.rsqrt(var + BN_EPS)                       # can go slightly < 0
    scale = gamma * inv
    shift = beta - mean * scale
    return scale, shift


def _bilinear_up2_align_corners(x):
    """PyTorch nn.Upsample(scale_factor=2, mode='bilinear', align_corners=True)."""
    N, C, H, W = x.shape
    Ho, Wo = 2 * H, 2 * W

    def coords(n_out, n_in):
        if n_in == 1:
            return jnp.zeros((n_out,), jnp.float32)
        return jnp.arange(n_out, dtype=jnp.float32) * ((n_in - 1) / (n_out - 1))

    sy, sx = coords(Ho, H), coords(Wo, W)
    y0 = jnp.floor(sy).astype(jnp.int32)
    y1 = jnp.minimum(y0 + 1, H - 1)
    x0 = jnp.floor(sx).astype(jnp.int32)
    x1 = jnp.minimum(x0 + 1, W - 1)
    wy = (sy - y0.astype(jnp.float32))[None, None, :, None]
    wx = (sx - x0.astype(jnp.float32))[None, None, None, :]
    r = x[:, :, y0, :] * (1.0 - wy) + x[:, :, y1, :] * wy       # (N,C,Ho,W)
    return r[:, :, :, x0] * (1.0 - wx) + r[:, :, :, x1] * wx     # (N,C,Ho,Wo)


def _upsample_pad_concat(x1, x2):
    # TODO(synk): the bilinear 2x upsample / F.pad / channel concat stay as
    # thin wrapper-side XLA data prep; they could be fused into conv1's input
    # path with two input BlockSpecs if the extra HBM pass ever matters.
    x1u = _bilinear_up2_align_corners(x1)
    dY = x2.shape[2] - x1u.shape[2]
    dX = x2.shape[3] - x1u.shape[3]
    x1u = jnp.pad(x1u, ((0, 0), (0, 0),
                        (dY // 2, dY - dY // 2), (dX // 2, dX - dX // 2)))
    return jnp.concatenate([x2, x1u], axis=1).astype(jnp.float32)   # NCHW


def up_forward(x1, x2, params):
    """Up.forward(x1, x2); NCHW in, NCHW out (no layout transposes needed)."""
    x = _upsample_pad_concat(x1, x2)                  # (N, Cin, H, W) fp32
    N, _, H, W = x.shape
    count = float(N * H * W)
    Cmid = params["w1"].shape[0]
    Cout = params["w2"].shape[0]

    # conv1 + partial stats, then global BN1 scale/shift
    c1, s1, q1 = conv3x3_bn_stats(x, params["w1"])
    sc1, sh1 = _bn_scale_shift(s1, q1, count, params["gamma1"], params["beta1"])

    # conv2 with BN1+ReLU fused into its input path, then global BN2
    c1_nchw = c1.reshape(N, Cmid, H, W)               # free metadata reshape
    c2, s2, q2 = conv3x3_bn_stats(c1_nchw, params["w2"],
                                  in_scale=sc1, in_shift=sh1)
    sc2, sh2 = _bn_scale_shift(s2, q2, count, params["gamma2"], params["beta2"])

    y = bn_relu_rows(c2, sc2, sh2)                    # (N, Cout, H*W)
    return y.reshape(N, Cout, H, W)                   # NCHW, like PyTorch


def init_up_params(key, in_channels, out_channels):
    """Up(in_channels, out_channels, bilinear=True): DoubleConv(in, out, in//2)."""
    mid = in_channels // 2
    k1, k2 = jax.random.split(key)
    return {
        "w1": jax.random.normal(k1, (mid, in_channels, 3, 3), jnp.float32) * 0.1,
        "w2": jax.random.normal(k2, (out_channels, mid, 3, 3), jnp.float32) * 0.1,
        "gamma1": jnp.ones((mid,), jnp.float32),
        "beta1": jnp.zeros((mid,), jnp.float32),
        "gamma2": jnp.ones((out_channels,), jnp.float32),
        "beta2": jnp.zeros((out_channels,), jnp.float32),
    }


# ----------------------------------------------------------------------------
# Pure-JAX reference (same bf16 matmul operands, f32 accumulation) for checking.
# ----------------------------------------------------------------------------
def _reference_up(x1, x2, params):
    x = _upsample_pad_concat(x1, x2)

    def conv(v, w):
        return lax.conv_general_dilated(
            v.astype(jnp.bfloat16), w.astype(jnp.bfloat16), (1, 1), "SAME",
            dimension_numbers=("NCHW", "OIHW", "NCHW"),
            preferred_element_type=jnp.float32)

    def bn_relu(v, g, b):
        mean = jnp.mean(v, axis=(0, 2, 3), keepdims=True)
        var = jnp.mean((v - mean) ** 2, axis=(0, 2, 3), keepdims=True)
        g = g.reshape(1, -1, 1, 1)
        b = b.reshape(1, -1, 1, 1)
        return jnp.maximum((v - mean) * lax.rsqrt(var + BN_EPS) * g + b, 0.0)

    y = bn_relu(conv(x, params["w1"]), params["gamma1"], params["beta1"])
    y = bn_relu(conv(y, params["w2"]), params["gamma2"], params["beta2"])
    return y


if __name__ == "__main__":
    key = jax.random.PRNGKey(0)
    k1, k2, kp = jax.random.split(key, 3)

    N = 2
    C_skip = 4                    # channels of x1 and of the skip x2
    H1 = W1 = 8                   # x1 spatial (pre-upsample)
    H2 = W2 = 16                  # x2 spatial
    in_channels = 2 * C_skip      # channels after concat([x2, up(x1)]) = 8
    out_channels = 8

    x1 = jax.random.normal(k1, (N, C_skip, H1, W1), jnp.float32)
    x2 = jax.random.normal(k2, (N, C_skip, H2, W2), jnp.float32)
    params = init_up_params(kp, in_channels, out_channels)

    up_fn = jax.jit(up_forward)
    out = jax.block_until_ready(up_fn(x1, x2, params))
    ref = jax.block_until_ready(_reference_up(x1, x2, params))

    assert out.shape == (N, out_channels, H2, W2), out.shape
    err = float(jnp.max(jnp.abs(out - ref)))
    assert err < 2e-2, f"max abs err {err}"
    print("KERNEL_OK")
</pallas_src>

<mosaic_0001>
module attributes {stable_mosaic.version = 11 : i64} {
  func.func @_conv3x3_stats_kernel(%arg0: i32, %arg1: i32, %arg2: memref<1x8x16x16xf32, #tpu.memory_space<vmem>>, %arg3: memref<2x8x16x16xf32, #tpu.memory_space<any>>, %arg4: memref<4x72xbf16, #tpu.memory_space<vmem>>, %arg5: memref<8x1xf32, #tpu.memory_space<vmem>>, %arg6: memref<8x1xf32, #tpu.memory_space<vmem>>, %arg7: memref<1x4x256xf32, #tpu.memory_space<vmem>>, %arg8: memref<1x4x2xf32, #tpu.memory_space<vmem>>, %arg9: memref<8x18x18xbf16, #tpu.memory_space<vmem>>, %arg10: memref<2x8x1x16xf32, #tpu.memory_space<vmem>>, %arg11: memref<2x!tpu.dma_semaphore, #tpu.memory_space<semaphore_mem>>) attributes {dimension_semantics = [#tpu.dimension_semantics<parallel>, #tpu.dimension_semantics<arbitrary>], iteration_bounds = array<i64: 2, 1>, scalar_prefetch = 0 : i64, scratch_operands = 3 : i64, tpu.core_type = #tpu.core_type<tc>, window_params = [{transform_indices = @transform_0, window_bounds = array<i64: 1, 8, 16, 16>}, {}, {pipeline_mode = #tpu.pipeline_mode<synchronous>, transform_indices = @transform_2, window_bounds = array<i64: 4, 72>}, {pipeline_mode = #tpu.pipeline_mode<synchronous>, transform_indices = @transform_3, window_bounds = array<i64: 8, 1>}, {pipeline_mode = #tpu.pipeline_mode<synchronous>, transform_indices = @transform_4, window_bounds = array<i64: 8, 1>}, {transform_indices = @transform_5, window_bounds = array<i64: 1, 4, 256>}, {transform_indices = @transform_6, window_bounds = array<i64: 1, 4, 2>}]} {
    %cst = arith.constant 0.000000e+00 : bf16
    %0 = vector.broadcast %cst : bf16 to vector<8x18x1xbf16>
    %c0 = arith.constant 0 : index
    %c0_0 = arith.constant 0 : index
    %c0_1 = arith.constant 0 : index
    %1 = vector.load %arg9[%c0, %c0_0, %c0_1] : memref<8x18x18xbf16, #tpu.memory_space<vmem>>, vector<8x18x1xbf16>
    tpu.vector_store %arg9[%c0, %c0_0, %c0_1], %0 {strides = array<i32>} : memref<8x18x18xbf16, #tpu.memory_space<vmem>>, vector<8x18x1xbf16>,
    %c0_2 = arith.constant 0 : index
    %c0_3 = arith.constant 0 : index
    %c17 = arith.constant 17 : index
    %2 = vector.load %arg9[%c0_2, %c0_3, %c17] : memref<8x18x18xbf16, #tpu.memory_space<vmem>>, vector<8x18x1xbf16>
    tpu.vector_store %arg9[%c0_2, %c0_3, %c17], %0 {strides = array<i32>} : memref<8x18x18xbf16, #tpu.memory_space<vmem>>, vector<8x18x1xbf16>,
    %c0_4 = arith.constant 0 : index
    %c0_5 = arith.constant 0 : index
    %c0_6 = arith.constant 0 : index
    %c0_7 = arith.constant 0 : index
    %3 = vector.load %arg2[%c0_4, %c0_5, %c0_6, %c0_7] : memref<1x8x16x16xf32, #tpu.memory_space<vmem>>, vector<1x8x16x16xf32>
    %4 = vector.shape_cast %3 : vector<1x8x16x16xf32> to vector<8x16x16xf32>
    %5 = arith.truncf %4 : vector<8x16x16xf32> to vector<8x16x16xbf16>
    %c0_8 = arith.constant 0 : index
    %c1 = arith.constant 1 : index
    %c1_9 = arith.constant 1 : index
    %6 = vector.load %arg9[%c0_8, %c1, %c1_9] : memref<8x18x18xbf16, #tpu.memory_space<vmem>>, vector<8x16x16xbf16>
    tpu.vector_store %arg9[%c0_8, %c1, %c1_9], %5 {strides = array<i32>} : memref<8x18x18xbf16, #tpu.memory_space<vmem>>, vector<8x16x16xbf16>,
    %cst_10 = arith.constant 0.000000e+00 : bf16
    %7 = vector.broadcast %cst_10 : bf16 to vector<8x1x18xbf16>
    %c0_11 = arith.constant 0 : index
    %c0_12 = arith.constant 0 : index
    %c0_13 = arith.constant 0 : index
    %8 = vector.load %arg9[%c0_11, %c0_12, %c0_13] : memref<8x18x18xbf16, #tpu.memory_space<vmem>>, vector<8x1x18xbf16>
    tpu.vector_store %arg9[%c0_11, %c0_12, %c0_13], %7 {strides = array<i32>} : memref<8x18x18xbf16, #tpu.memory_space<vmem>>, vector<8x1x18xbf16>,
    %c0_14 = arith.constant 0 : index
    %c17_15 = arith.constant 17 : index
    %c0_16 = arith.constant 0 : index
    %9 = vector.load %arg9[%c0_14, %c17_15, %c0_16] : memref<8x18x18xbf16, #tpu.memory_space<vmem>>, vector<8x1x18xbf16>
    tpu.vector_store %arg9[%c0_14, %c17_15, %c0_16], %7 {strides = array<i32>} : memref<8x18x18xbf16, #tpu.memory_space<vmem>>, vector<8x1x18xbf16>,
    %c0_17 = arith.constant 0 : index
    %c0_18 = arith.constant 0 : index
    %c0_19 = arith.constant 0 : index
    %10 = vector.load %arg9[%c0_17, %c0_18, %c0_19] : memref<8x18x18xbf16, #tpu.memory_space<vmem>>, vector<8x16x16xbf16>
    %c0_20 = arith.constant 0 : index
    %c0_21 = arith.constant 0 : index
    %c1_22 = arith.constant 1 : index
    %11 = vector.load %arg9[%c0_20, %c0_21, %c1_22] : memref<8x18x18xbf16, #tpu.memory_space<vmem>>, vector<8x16x16xbf16>
    %c0_23 = arith.constant 0 : index
    %c0_24 = arith.constant 0 : index
    %c2 = arith.constant 2 : index
    %12 = vector.load %arg9[%c0_23, %c0_24, %c2] : memref<8x18x18xbf16, #tpu.memory_space<vmem>>, vector<8x16x16xbf16>
    %c0_25 = arith.constant 0 : index
    %c1_26 = arith.constant 1 : index
    %c0_27 = arith.constant 0 : index
    %13 = vector.load %arg9[%c0_25, %c1_26, %c0_27] : memref<8x18x18xbf16, #tpu.memory_space<vmem>>, vector<8x16x16xbf16>
    %c0_28 = arith.constant 0 : index
    %c1_29 = arith.constant 1 : index
    %c1_30 = arith.constant 1 : index
    %14 = vector.load %arg9[%c0_28, %c1_29, %c1_30] : memref<8x18x18xbf16, #tpu.memory_space<vmem>>, vector<8x16x16xbf16>
    %c0_31 = arith.constant 0 : index
    %c1_32 = arith.constant 1 : index
    %c2_33 = arith.constant 2 : index
    %15 = vector.load %arg9[%c0_31, %c1_32, %c2_33] : memref<8x18x18xbf16, #tpu.memory_space<vmem>>, vector<8x16x16xbf16>
    %c0_34 = arith.constant 0 : index
    %c2_35 = arith.constant 2 : index
    %c0_36 = arith.constant 0 : index
    %16 = vector.load %arg9[%c0_34, %c2_35, %c0_36] : memref<8x18x18xbf16, #tpu.memory_space<vmem>>, vector<8x16x16xbf16>
    %c0_37 = arith.constant 0 : index
    %c2_38 = arith.constant 2 : index
    %c1_39 = arith.constant 1 : index
    %17 = vector.load %arg9[%c0_37, %c2_38, %c1_39] : memref<8x18x18xbf16, #tpu.memory_space<vmem>>, vector<8x16x16xbf16>
    %c0_40 = arith.constant 0 : index
    %c2_41 = arith.constant 2 : index
    %c2_42 = arith.constant 2 : index
    %18 = vector.load %arg9[%c0_40, %c2_41, %c2_42] : memref<8x18x18xbf16, #tpu.memory_space<vmem>>, vector<8x16x16xbf16>
    %19 = tpu.concatenate %10, %11, %12, %13, %14, %15, %16, %17, %18 in 0 : vector<8x16x16xbf16>, vector<8x16x16xbf16>, vector<8x16x16xbf16>, vector<8x16x16xbf16>, vector<8x16x16xbf16>, vector<8x16x16xbf16>, vector<8x16x16xbf16>, vector<8x16x16xbf16>, vector<8x16x16xbf16> -> vector<72x16x16xbf16>
    %20 = vector.shape_cast %19 : vector<72x16x16xbf16> to vector<72x256xbf16>
    %c0_43 = arith.constant 0 : index
    %c0_44 = arith.constant 0 : index
    %21 = vector.load %arg4[%c0_43, %c0_44] : memref<4x72xbf16, #tpu.memory_space<vmem>>, vector<4x72xbf16>
    %cst_45 = arith.constant dense<0.000000e+00> : vector<4x256xf32>
    %22 = tpu.matmul %21, %20, %cst_45 {dimension_numbers = #tpu.dot_dimension_numbers<[1], [0], [0], [1], [0, 0, 1, 1], [], []>} : vector<4x72xbf16>, vector<72x256xbf16>, vector<4x256xf32> -> vector<4x256xf32>
    %23 = vector.shape_cast %22 : vector<4x256xf32> to vector<1x4x256xf32>
    %c0_46 = arith.constant 0 : index
    %c0_47 = arith.constant 0 : index
    %c0_48 = arith.constant 0 : index
    %24 = vector.load %arg7[%c0_46, %c0_47, %c0_48] : memref<1x4x256xf32, #tpu.memory_space<vmem>>, vector<1x4x256xf32>
    tpu.vector_store %arg7[%c0_46, %c0_47, %c0_48], %23 {strides = array<i32>} : memref<1x4x256xf32, #tpu.memory_space<vmem>>, vector<1x4x256xf32>,
    %cst_49 = arith.constant dense<0.000000e+00> : vector<4xf32>
    %25 = vector.multi_reduction <add>, %22, %cst_49 [1] : vector<4x256xf32> to vector<4xf32>
    %26 = vector.shape_cast %25 : vector<4xf32> to vector<4x1xf32>
    %27 = arith.mulf %22, %22 : vector<4x256xf32>
    %cst_50 = arith.constant dense<0.000000e+00> : vector<4xf32>
    %28 = vector.multi_reduction <add>, %27, %cst_50 [1] : vector<4x256xf32> to vector<4xf32>
    %29 = vector.shape_cast %28 : vector<4xf32> to vector<4x1xf32>
    %30 = tpu.concatenate %26, %29 in 1 : vector<4x1xf32>, vector<4x1xf32> -> vector<4x2xf32>
    %31 = vector.shape_cast %30 : vector<4x2xf32> to vector<1x4x2xf32>
    %c0_51 = arith.constant 0 : index
    %c0_52 = arith.constant 0 : index
    %c0_53 = arith.constant 0 : index
    %32 = vector.load %arg8[%c0_51, %c0_52, %c0_53] : memref<1x4x2xf32, #tpu.memory_space<vmem>>, vector<1x4x2xf32>
    tpu.vector_store %arg8[%c0_51, %c0_52, %c0_53], %31 {strides = array<i32>} : memref<1x4x2xf32, #tpu.memory_space<vmem>>, vector<1x4x2xf32>,
    return
  }
  func.func @transform_0(%arg0: i32, %arg1: i32) -> (i32, i32, i32, i32) {
    %c0_i32 = arith.constant 0 : i32
    %c0_i32_0 = arith.constant 0 : i32
    %c0_i32_1 = arith.constant 0 : i32
    return %arg0, %c0_i32, %arg1, %c0_i32_0 : i32, i32, i32, i32
  }
  func.func @transform_2(%arg0: i32, %arg1: i32) -> (i32, i32) {
    %c0_i32 = arith.constant 0 : i32
    %c0_i32_0 = arith.constant 0 : i32
    %c0_i32_1 = arith.constant 0 : i32
    return %c0_i32, %c0_i32_0 : i32, i32
  }
  func.func @transform_3(%arg0: i32, %arg1: i32) -> (i32, i32) {
    %c0_i32 = arith.constant 0 : i32
    %c0_i32_0 = arith.constant 0 : i32
    %c0_i32_1 = arith.constant 0 : i32
    return %c0_i32, %c0_i32_0 : i32, i32
  }
  func.func @transform_4(%arg0: i32, %arg1: i32) -> (i32, i32) {
    %c0_i32 = arith.constant 0 : i32
    %c0_i32_0 = arith.constant 0 : i32
    %c0_i32_1 = arith.constant 0 : i32
    return %c0_i32, %c0_i32_0 : i32, i32
  }
  func.func @transform_5(%arg0: i32, %arg1: i32) -> (i32, i32, i32) {
    %c0_i32 = arith.constant 0 : i32
    %c0_i32_0 = arith.constant 0 : i32
    return %arg0, %c0_i32, %arg1 : i32, i32, i32
  }
  func.func @transform_6(%arg0: i32, %arg1: i32) -> (i32, i32, i32) {
    %c0_i32 = arith.constant 0 : i32
    %c0_i32_0 = arith.constant 0 : i32
    %c0_i32_1 = arith.constant 0 : i32
    return %arg0, %c0_i32, %c0_i32_0 : i32, i32, i32
  }
}

module attributes {stable_mosaic.version = 11 : i64} {
  func.func @_bn_relu_kernel(%arg0: i32, %arg1: memref<16x256xf32, #tpu.memory_space<vmem>>, %arg2: memref<16x1xf32, #tpu.memory_space<vmem>>, %arg3: memref<16x1xf32, #tpu.memory_space<vmem>>, %arg4: memref<16x256xf32, #tpu.memory_space<vmem>>) attributes {dimension_semantics = [#tpu.dimension_semantics<parallel>], iteration_bounds = array<i64: 1>, scalar_prefetch = 0 : i64, scratch_operands = 0 : i64, tpu.core_type = #tpu.core_type<tc>, window_params = [{transform_indices = @transform_0, window_bounds = array<i64: 16, 256>}, {transform_indices = @transform_1, window_bounds = array<i64: 16, 1>}, {transform_indices = @transform_2, window_bounds = array<i64: 16, 1>}, {transform_indices = @transform_3, window_bounds = array<i64: 16, 256>}]} {
    %c0 = arith.constant 0 : index
    %c0_0 = arith.constant 0 : index
    %0 = vector.load %arg1[%c0, %c0_0] : memref<16x256xf32, #tpu.memory_space<vmem>>, vector<16x256xf32>
    %c0_1 = arith.constant 0 : index
    %c0_2 = arith.constant 0 : index
    %1 = vector.load %arg2[%c0_1, %c0_2] : memref<16x1xf32, #tpu.memory_space<vmem>>, vector<16x1xf32>
    %2 = vector.broadcast %1 : vector<16x1xf32> to vector<16x256xf32>
    %3 = arith.mulf %0, %2 : vector<16x256xf32>
    %c0_3 = arith.constant 0 : index
    %c0_4 = arith.constant 0 : index
    %4 = vector.load %arg3[%c0_3, %c0_4] : memref<16x1xf32, #tpu.memory_space<vmem>>, vector<16x1xf32>
    %5 = vector.broadcast %4 : vector<16x1xf32> to vector<16x256xf32>
    %6 = arith.addf %3, %5 : vector<16x256xf32>
    %cst = arith.constant 0.000000e+00 : f32
    %7 = vector.broadcast %cst : f32 to vector<16x256xf32>
    %8 = arith.maximumf %6, %7 : vector<16x256xf32>
    %c0_5 = arith.constant 0 : index
    %c0_6 = arith.constant 0 : index
    %9 = vector.load %arg4[%c0_5, %c0_6] : memref<16x256xf32, #tpu.memory_space<vmem>>, vector<16x256xf32>
    tpu.vector_store %arg4[%c0_5, %c0_6], %8 {strides = array<i32>} : memref<16x256xf32, #tpu.memory_space<vmem>>, vector<16x256xf32>,
    return
  }
  func.func @transform_0(%arg0: i32) -> (i32, i32) {
    %c0_i32 = arith.constant 0 : i32
    %c0_i32_0 = arith.constant 0 : i32
    return %arg0, %c0_i32 : i32, i32
  }
  func.func @transform_1(%arg0: i32) -> (i32, i32) {
    %c0_i32 = arith.constant 0 : i32
    %c0_i32_0 = arith.constant 0 : i32
    return %arg0, %c0_i32 : i32, i32
  }
  func.func @transform_2(%arg0: i32) -> (i32, i32) {
    %c0_i32 = arith.constant 0 : i32
    %c0_i32_0 = arith.constant 0 : i32
    return %arg0, %c0_i32 : i32, i32
  }
  func.func @transform_3(%arg0: i32) -> (i32, i32) {
    %c0_i32 = arith.constant 0 : i32
    %c0_i32_0 = arith.constant 0 : i32
    return %arg0, %c0_i32 : i32, i32
  }
}

module attributes {stable_mosaic.version = 11 : i64} {
  func.func @_conv3x3_stats_kernel(%arg0: i32, %arg1: i32, %arg2: memref<1x4x16x16xf32, #tpu.memory_space<vmem>>, %arg3: memref<2x4x16x16xf32, #tpu.memory_space<any>>, %arg4: memref<8x36xbf16, #tpu.memory_space<vmem>>, %arg5: memref<4x1xf32, #tpu.memory_space<vmem>>, %arg6: memref<4x1xf32, #tpu.memory_space<vmem>>, %arg7: memref<1x8x256xf32, #tpu.memory_space<vmem>>, %arg8: memref<1x8x2xf32, #tpu.memory_space<vmem>>, %arg9: memref<4x18x18xbf16, #tpu.memory_space<vmem>>, %arg10: memref<2x4x1x16xf32, #tpu.memory_space<vmem>>, %arg11: memref<2x!tpu.dma_semaphore, #tpu.memory_space<semaphore_mem>>) attributes {dimension_semantics = [#tpu.dimension_semantics<parallel>, #tpu.dimension_semantics<arbitrary>], iteration_bounds = array<i64: 2, 1>, scalar_prefetch = 0 : i64, scratch_operands = 3 : i64, tpu.core_type = #tpu.core_type<tc>, window_params = [{transform_indices = @transform_0, window_bounds = array<i64: 1, 4, 16, 16>}, {}, {pipeline_mode = #tpu.pipeline_mode<synchronous>, transform_indices = @transform_2, window_bounds = array<i64: 8, 36>}, {pipeline_mode = #tpu.pipeline_mode<synchronous>, transform_indices = @transform_3, window_bounds = array<i64: 4, 1>}, {pipeline_mode = #tpu.pipeline_mode<synchronous>, transform_indices = @transform_4, window_bounds = array<i64: 4, 1>}, {transform_indices = @transform_5, window_bounds = array<i64: 1, 8, 256>}, {transform_indices = @transform_6, window_bounds = array<i64: 1, 8, 2>}]} {
    %cst = arith.constant 0.000000e+00 : bf16
    %0 = vector.broadcast %cst : bf16 to vector<4x18x1xbf16>
    %c0 = arith.constant 0 : index
    %c0_0 = arith.constant 0 : index
    %c0_1 = arith.constant 0 : index
    %1 = vector.load %arg9[%c0, %c0_0, %c0_1] : memref<4x18x18xbf16, #tpu.memory_space<vmem>>, vector<4x18x1xbf16>
    tpu.vector_store %arg9[%c0, %c0_0, %c0_1], %0 {strides = array<i32>} : memref<4x18x18xbf16, #tpu.memory_space<vmem>>, vector<4x18x1xbf16>,
    %c0_2 = arith.constant 0 : index
    %c0_3 = arith.constant 0 : index
    %c17 = arith.constant 17 : index
    %2 = vector.load %arg9[%c0_2, %c0_3, %c17] : memref<4x18x18xbf16, #tpu.memory_space<vmem>>, vector<4x18x1xbf16>
    tpu.vector_store %arg9[%c0_2, %c0_3, %c17], %0 {strides = array<i32>} : memref<4x18x18xbf16, #tpu.memory_space<vmem>>, vector<4x18x1xbf16>,
    %c0_4 = arith.constant 0 : index
    %c0_5 = arith.constant 0 : index
    %c0_6 = arith.constant 0 : index
    %c0_7 = arith.constant 0 : index
    %3 = vector.load %arg2[%c0_4, %c0_5, %c0_6, %c0_7] : memref<1x4x16x16xf32, #tpu.memory_space<vmem>>, vector<1x4x16x16xf32>
    %4 = vector.shape_cast %3 : vector<1x4x16x16xf32> to vector<4x16x16xf32>
    %c0_8 = arith.constant 0 : index
    %c0_9 = arith.constant 0 : index
    %5 = vector.load %arg5[%c0_8, %c0_9] : memref<4x1xf32, #tpu.memory_space<vmem>>, vector<4x1xf32>
    %6 = vector.shape_cast %5 : vector<4x1xf32> to vector<4x1x1xf32>
    %c0_10 = arith.constant 0 : index
    %c0_11 = arith.constant 0 : index
    %7 = vector.load %arg6[%c0_10, %c0_11] : memref<4x1xf32, #tpu.memory_space<vmem>>, vector<4x1xf32>
    %8 = vector.shape_cast %7 : vector<4x1xf32> to vector<4x1x1xf32>
    %9 = vector.broadcast %6 : vector<4x1x1xf32> to vector<4x16x16xf32>
    %10 = arith.mulf %4, %9 : vector<4x16x16xf32>
    %11 = vector.broadcast %8 : vector<4x1x1xf32> to vector<4x16x16xf32>
    %12 = arith.addf %10, %11 : vector<4x16x16xf32>
    %cst_12 = arith.constant 0.000000e+00 : f32
    %13 = vector.broadcast %cst_12 : f32 to vector<4x16x16xf32>
    %14 = arith.maximumf %12, %13 : vector<4x16x16xf32>
    %15 = arith.truncf %14 : vector<4x16x16xf32> to vector<4x16x16xbf16>
    %c0_13 = arith.constant 0 : index
    %c1 = arith.constant 1 : index
    %c1_14 = arith.constant 1 : index
    %16 = vector.load %arg9[%c0_13, %c1, %c1_14] : memref<4x18x18xbf16, #tpu.memory_space<vmem>>, vector<4x16x16xbf16>
    tpu.vector_store %arg9[%c0_13, %c1, %c1_14], %15 {strides = array<i32>} : memref<4x18x18xbf16, #tpu.memory_space<vmem>>, vector<4x16x16xbf16>,
    %cst_15 = arith.constant 0.000000e+00 : bf16
    %17 = vector.broadcast %cst_15 : bf16 to vector<4x1x18xbf16>
    %c0_16 = arith.constant 0 : index
    %c0_17 = arith.constant 0 : index
    %c0_18 = arith.constant 0 : index
    %18 = vector.load %arg9[%c0_16, %c0_17, %c0_18] : memref<4x18x18xbf16, #tpu.memory_space<vmem>>, vector<4x1x18xbf16>
    tpu.vector_store %arg9[%c0_16, %c0_17, %c0_18], %17 {strides = array<i32>} : memref<4x18x18xbf16, #tpu.memory_space<vmem>>, vector<4x1x18xbf16>,
    %c0_19 = arith.constant 0 : index
    %c17_20 = arith.constant 17 : index
    %c0_21 = arith.constant 0 : index
    %19 = vector.load %arg9[%c0_19, %c17_20, %c0_21] : memref<4x18x18xbf16, #tpu.memory_space<vmem>>, vector<4x1x18xbf16>
    tpu.vector_store %arg9[%c0_19, %c17_20, %c0_21], %17 {strides = array<i32>} : memref<4x18x18xbf16, #tpu.memory_space<vmem>>, vector<4x1x18xbf16>,
    %c0_22 = arith.constant 0 : index
    %c0_23 = arith.constant 0 : index
    %c0_24 = arith.constant 0 : index
    %20 = vector.load %arg9[%c0_22, %c0_23, %c0_24] : memref<4x18x18xbf16, #tpu.memory_space<vmem>>, vector<4x16x16xbf16>
    %c0_25 = arith.constant 0 : index
    %c0_26 = arith.constant 0 : index
    %c1_27 = arith.constant 1 : index
    %21 = vector.load %arg9[%c0_25, %c0_26, %c1_27] : memref<4x18x18xbf16, #tpu.memory_space<vmem>>, vector<4x16x16xbf16>
    %c0_28 = arith.constant 0 : index
    %c0_29 = arith.constant 0 : index
    %c2 = arith.constant 2 : index
    %22 = vector.load %arg9[%c0_28, %c0_29, %c2] : memref<4x18x18xbf16, #tpu.memory_space<vmem>>, vector<4x16x16xbf16>
    %c0_30 = arith.constant 0 : index
    %c1_31 = arith.constant 1 : index
    %c0_32 = arith.constant 0 : index
    %23 = vector.load %arg9[%c0_30, %c1_31, %c0_32] : memref<4x18x18xbf16, #tpu.memory_space<vmem>>, vector<4x16x16xbf16>
    %c0_33 = arith.constant 0 : index
    %c1_34 = arith.constant 1 : index
    %c1_35 = arith.constant 1 : index
    %24 = vector.load %arg9[%c0_33, %c1_34, %c1_35] : memref<4x18x18xbf16, #tpu.memory_space<vmem>>, vector<4x16x16xbf16>
    %c0_36 = arith.constant 0 : index
    %c1_37 = arith.constant 1 : index
    %c2_38 = arith.constant 2 : index
    %25 = vector.load %arg9[%c0_36, %c1_37, %c2_38] : memref<4x18x18xbf16, #tpu.memory_space<vmem>>, vector<4x16x16xbf16>
    %c0_39 = arith.constant 0 : index
    %c2_40 = arith.constant 2 : index
    %c0_41 = arith.constant 0 : index
    %26 = vector.load %arg9[%c0_39, %c2_40, %c0_41] : memref<4x18x18xbf16, #tpu.memory_space<vmem>>, vector<4x16x16xbf16>
    %c0_42 = arith.constant 0 : index
    %c2_43 = arith.constant 2 : index
    %c1_44 = arith.constant 1 : index
    %27 = vector.load %arg9[%c0_42, %c2_43, %c1_44] : memref<4x18x18xbf16, #tpu.memory_space<vmem>>, vector<4x16x16xbf16>
    %c0_45 = arith.constant 0 : index
    %c2_46 = arith.constant 2 : index
    %c2_47 = arith.constant 2 : index
    %28 = vector.load %arg9[%c0_45, %c2_46, %c2_47] : memref<4x18x18xbf16, #tpu.memory_space<vmem>>, vector<4x16x16xbf16>
    %29 = tpu.concatenate %20, %21, %22, %23, %24, %25, %26, %27, %28 in 0 : vector<4x16x16xbf16>, vector<4x16x16xbf16>, vector<4x16x16xbf16>, vector<4x16x16xbf16>, vector<4x16x16xbf16>, vector<4x16x16xbf16>, vector<4x16x16xbf16>, vector<4x16x16xbf16>, vector<4x16x16xbf16> -> vector<36x16x16xbf16>
    %30 = vector.shape_cast %29 : vector<36x16x16xbf16> to vector<36x256xbf16>
    %c0_48 = arith.constant 0 : index
    %c0_49 = arith.constant 0 : index
    %31 = vector.load %arg4[%c0_48, %c0_49] : memref<8x36xbf16, #tpu.memory_space<vmem>>, vector<8x36xbf16>
    %cst_50 = arith.constant dense<0.000000e+00> : vector<8x256xf32>
    %32 = tpu.matmul %31, %30, %cst_50 {dimension_numbers = #tpu.dot_dimension_numbers<[1], [0], [0], [1], [0, 0, 1, 1], [], []>} : vector<8x36xbf16>, vector<36x256xbf16>, vector<8x256xf32> -> vector<8x256xf32>
    %33 = vector.shape_cast %32 : vector<8x256xf32> to vector<1x8x256xf32>
    %c0_51 = arith.constant 0 : index
    %c0_52 = arith.constant 0 : index
    %c0_53 = arith.constant 0 : index
    %34 = vector.load %arg7[%c0_51, %c0_52, %c0_53] : memref<1x8x256xf32, #tpu.memory_space<vmem>>, vector<1x8x256xf32>
    tpu.vector_store %arg7[%c0_51, %c0_52, %c0_53], %33 {strides = array<i32>} : memref<1x8x256xf32, #tpu.memory_space<vmem>>, vector<1x8x256xf32>,
    %cst_54 = arith.constant dense<0.000000e+00> : vector<8xf32>
    %35 = vector.multi_reduction <add>, %32, %cst_54 [1] : vector<8x256xf32> to vector<8xf32>
    %36 = vector.shape_cast %35 : vector<8xf32> to vector<8x1xf32>
    %37 = arith.mulf %32, %32 : vector<8x256xf32>
    %cst_55 = arith.constant dense<0.000000e+00> : vector<8xf32>
    %38 = vector.multi_reduction <add>, %37, %cst_55 [1] : vector<8x256xf32> to vector<8xf32>
    %39 = vector.shape_cast %38 : vector<8xf32> to vector<8x1xf32>
    %40 = tpu.concatenate %36, %39 in 1 : vector<8x1xf32>, vector<8x1xf32> -> vector<8x2xf32>
    %41 = vector.shape_cast %40 : vector<8x2xf32> to vector<1x8x2xf32>
    %c0_56 = arith.constant 0 : index
    %c0_57 = arith.constant 0 : index
    %c0_58 = arith.constant 0 : index
    %42 = vector.load %arg8[%c0_56, %c0_57, %c0_58] : memref<1x8x2xf32, #tpu.memory_space<vmem>>, vector<1x8x2xf32>
    tpu.vector_store %arg8[%c0_56, %c0_57, %c0_58], %41 {strides = array<i32>} : memref<1x8x2xf32, #tpu.memory_space<vmem>>, vector<1x8x2xf32>,
    return
  }
  func.func @transform_0(%arg0: i32, %arg1: i32) -> (i32, i32, i32, i32) {
    %c0_i32 = arith.constant 0 : i32
    %c0_i32_0 = arith.constant 0 : i32
    %c0_i32_1 = arith.constant 0 : i32
    return %arg0, %c0_i32, %arg1, %c0_i32_0 : i32, i32, i32, i32
  }
  func.func @transform_2(%arg0: i32, %arg1: i32) -> (i32, i32) {
    %c0_i32 = arith.constant 0 : i32
    %c0_i32_0 = arith.constant 0 : i32
    %c0_i32_1 = arith.constant 0 : i32
    return %c0_i32, %c0_i32_0 : i32, i32
  }
  func.func @transform_3(%arg0: i32, %arg1: i32) -> (i32, i32) {
    %c0_i32 = arith.constant 0 : i32
    %c0_i32_0 = arith.constant 0 : i32
    %c0_i32_1 = arith.constant 0 : i32
    return %c0_i32, %c0_i32_0 : i32, i32
  }
  func.func @transform_4(%arg0: i32, %arg1: i32) -> (i32, i32) {
    %c0_i32 = arith.constant 0 : i32
    %c0_i32_0 = arith.constant 0 : i32
    %c0_i32_1 = arith.constant 0 : i32
    return %c0_i32, %c0_i32_0 : i32, i32
  }
  func.func @transform_5(%arg0: i32, %arg1: i32) -> (i32, i32, i32) {
    %c0_i32 = arith.constant 0 : i32
    %c0_i32_0 = arith.constant 0 : i32
    return %arg0, %c0_i32, %arg1 : i32, i32, i32
  }
  func.func @transform_6(%arg0: i32, %arg1: i32) -> (i32, i32, i32) {
    %c0_i32 = arith.constant 0 : i32
    %c0_i32_0 = arith.constant 0 : i32
    %c0_i32_1 = arith.constant 0 : i32
    return %arg0, %c0_i32, %c0_i32_0 : i32, i32, i32
  }
}

</mosaic_0001>

<llo_original>
// kernel: tile.10
$region0: #{tile.10}
  #allocation0 [shape = 's32[1]{0}', space=sflag, size = 0x4, scoped, tag = 'scoped memory for tile.10']
  %s0 = inlined_call_operand.vmem [shape: f32[8], index: 0, kind: input, shape index: {}]
  %s1 = inlined_call_operand.vmem [shape: f32[2,1,1,8], index: 1, kind: output, shape index: {}]
  // Predicated region
  $region2: #{tile.10} parent=0 // pred_check
    _
  $region3: #{tile.10} parent=0 // pred_check_branch
    %3 = sbr.rel (0) target = $region5
  $region4: #{tile.10} parent=0 // pred_region
    _
  $region5: #{tile.10} parent=0 // pred_fallthru
    _
  %v4 = vld [vmem:[%s0] ss:$0 sm:$0xff]
  %5 = vst [vmem:[%s1] sm:$0x3] %v4

// kernel: tile.0
$region0: #{tile.0}
  %s0 = inlined_call_operand.vmem [shape: f32[2,1,1,8], index: 0, kind: input, shape index: {}]
  %s1 = inlined_call_operand.vmem [shape: f32[16,1], index: 1, kind: output, shape index: {}]
  $region1: #{tile.0} parent=0
    #allocation0 [shape = 'u8[4096]{0}', space=vmem, size = 0x1000, scoped, tag = 'scoped mem for input reshape']
    %s3 = ssub.s32 4, 1
    %v4 = vld [vmem:[%s0] sm:%s3]
    %5 = vst [vmem:[#allocation0] sm:%s3] %v4
    %v6 = vld [vmem:[#allocation0] sm:$0x3]
    %vm7 = vcmask 7168
    %8 = vst.msk [vmem:[%s1] ss:$8 sm:$0x3] %vm7, %v6
    %v9 = vld [vmem:[#allocation0] sm:$0x3]
    %10 = vrot.lane.b32.xlu0 %v9, 127
    %v11 = vpop.permute.xlu0 %10
    %vm12 = vcmask 7168
    %s13 = scalar_lea.vmem %s1, 1
    %14 = vst.msk [vmem:[%s13] ss:$8 sm:$0x3] %vm12, %v11
    %v15 = vld [vmem:[#allocation0] sm:$0x3]
    %16 = vrot.lane.b32.xlu0 %v15, 126
    %v17 = vpop.permute.xlu0 %16
    %vm18 = vcmask 7168
    %s19 = scalar_lea.vmem %s1, 2
    %20 = vst.msk [vmem:[%s19] ss:$8 sm:$0x3] %vm18, %v17
    %v21 = vld [vmem:[#allocation0] sm:$0x3]
    %22 = vrot.lane.b32.xlu0 %v21, 125
    %v23 = vpop.permute.xlu0 %22
    %vm24 = vcmask 7168
    %s25 = scalar_lea.vmem %s1, 3
    %26 = vst.msk [vmem:[%s25] ss:$8 sm:$0x3] %vm24, %v23
    %v27 = vld [vmem:[#allocation0] sm:$0x3]
    %28 = vrot.lane.b32.xlu0 %v27, 124
    %v29 = vpop.permute.xlu0 %28
    %vm30 = vcmask 7168
    %s31 = scalar_lea.vmem %s1, 4
    %32 = vst.msk [vmem:[%s31] ss:$8 sm:$0x3] %vm30, %v29
    %v33 = vld [vmem:[#allocation0] sm:$0x3]
    %34 = vrot.lane.b32.xlu0 %v33, 123
    %v35 = vpop.permute.xlu0 %34
    %vm36 = vcmask 7168
    %s37 = scalar_lea.vmem %s1, 5
    %38 = vst.msk [vmem:[%s37] ss:$8 sm:$0x3] %vm36, %v35
    %v39 = vld [vmem:[#allocation0] sm:$0x3]
    %40 = vrot.lane.b32.xlu0 %v39, 122
    %v41 = vpop.permute.xlu0 %40
    %vm42 = vcmask 7168
    %s43 = scalar_lea.vmem %s1, 6
    %44 = vst.msk [vmem:[%s43] ss:$8 sm:$0x3] %vm42, %v41
    %v45 = vld [vmem:[#allocation0] sm:$0x3]
    %46 = vrot.lane.b32.xlu0 %v45, 121
    %v47 = vpop.permute.xlu0 %46
    %vm48 = vcmask 7168
    %s49 = scalar_lea.vmem %s1, 7
    %50 = vst.msk [vmem:[%s49] ss:$8 sm:$0x3] %vm48, %v47

// kernel: up_forward.5
$region0: #{up_forward.5}
  #allocation0 [shape = 'u32[]', space=smem, size = 0x4, offset = 0x4, fixed_abs, tag = 'smem constant byte address 0x4 - core index']
  #allocation1 [shape = 'u32[72,128]{1,0:T(1,128)}', space=vmem, size = 0x9000, scoped, tag = 'internal scratch']
  %s0 = inlined_call_operand.vmem [shape: f32[16,256], index: 0, kind: input, shape index: {}]
  %s1 = inlined_call_operand.vmem [shape: f32[16,1], index: 1, kind: input, shape index: {}]
  %s2 = inlined_call_operand.vmem [shape: f32[16,1], index: 2, kind: input, shape index: {}]
  %s3 = inlined_call_operand.vmem [shape: f32[16,256], index: 3, kind: output, shape index: {}]
  %s4 = sld [smem:[#allocation0]]
  $region22: #{up_forward.5} parent=0
    _
  %s6 = ssub.s32 1, %s4
  %s7 = scalar_select 0, %s6, %s4
  // Predicated region
  $region2: #{up_forward.5} parent=0 // pred_check
    _
  $region3: #{up_forward.5} parent=0 // pred_check_branch
    %9 = sbr.rel (0) target = $region5
  $region4: #{up_forward.5} parent=0 // pred_region
    _
  $region5: #{up_forward.5} parent=0 // pred_fallthru
    _
  // Predicated region
  $region6: #{up_forward.5} parent=0 // pred_check
    _
  $region7: #{up_forward.5} parent=0 // pred_check_branch
    %11 = sbr.rel (0) target = $region9
  $region8: #{up_forward.5} parent=0 // pred_region
    _
  $region9: #{up_forward.5} parent=0 // pred_fallthru
    _
  // Predicated region
  $region10: #{up_forward.5} parent=0 // pred_check
    _
  $region11: #{up_forward.5} parent=0 // pred_check_branch
    %13 = sbr.rel (0) target = $region13
  $region12: #{up_forward.5} parent=0 // pred_region
    _
  $region13: #{up_forward.5} parent=0 // pred_fallthru
    _
  %v14 = vld [vmem:[%s0] sm:$0xff]
  %v15 = vld [vmem:[%s0 + $0x8] sm:$0xff]
  %v16 = vld [vmem:[%s0 + $0x10] sm:$0xff]
  %v17 = vld [vmem:[%s0 + $0x18] sm:$0xff]
  %v18 = vld [vmem:[%s1] sm:$0xff]
  %v19 = vld [vmem:[%s1 + $0x8] sm:$0xff]
  %21 = vset.pattern.permute.xlu0 0
  %22 = vperm.xlu0 %21, %v18
  %v23 = vpop.permute.xlu0 %22
  %26 = vset.pattern.permute.xlu0 0
  %27 = vperm.xlu0 %26, %v19
  %v28 = vpop.permute.xlu0 %27
  %v30 = vmul.f32 %v14, %v23
  %v31 = vmul.f32 %v15, %v23
  %v32 = vmul.f32 %v16, %v28
  %v33 = vmul.f32 %v17, %v28
  %v34 = vld [vmem:[%s2] sm:$0xff]
  %v35 = vld [vmem:[%s2 + $0x8] sm:$0xff]
  %37 = vset.pattern.permute.xlu0 0
  %38 = vperm.xlu0 %37, %v34
  %v39 = vpop.permute.xlu0 %38
  %42 = vset.pattern.permute.xlu0 0
  %43 = vperm.xlu0 %42, %v35
  %v44 = vpop.permute.xlu0 %43
  %v46 = vadd.f32 %v30, %v39
  %v47 = vadd.f32 %v31, %v39
  %v48 = vadd.f32 %v32, %v44
  %v49 = vadd.f32 %v33, %v44
  %v50 = vmax.f32 %v46, 0.0
  %v51 = vmax.f32 %v47, 0.0
  %v52 = vmax.f32 %v48, 0.0
  %v53 = vmax.f32 %v49, 0.0
  %54 = vst [vmem:[%s3] sm:$0xff] %v50
  %55 = vst [vmem:[%s3 + $0x8] sm:$0xff] %v51
  %56 = vst [vmem:[%s3 + $0x10] sm:$0xff] %v52
  %57 = vst [vmem:[%s3 + $0x18] sm:$0xff] %v53
  // Predicated region
  $region14: #{up_forward.5} parent=0 // pred_check
    _
  $region15: #{up_forward.5} parent=0 // pred_check_branch
    %59 = sbr.rel (0) target = $region17
  $region16: #{up_forward.5} parent=0 // pred_region
    _
  $region17: #{up_forward.5} parent=0 // pred_fallthru
    _
  // Predicated region
  $region18: #{up_forward.5} parent=0 // pred_check
    _
  $region19: #{up_forward.5} parent=0 // pred_check_branch
    %61 = sbr.rel (0) target = $region21
  $region20: #{up_forward.5} parent=0 // pred_region
    _
  $region21: #{up_forward.5} parent=0 // pred_fallthru
    _

// kernel: up_forward.4
$region0: #{up_forward.4}
  #allocation0 [shape = 'u32[]', space=smem, size = 0x4, offset = 0x4, fixed_abs, tag = 'smem constant byte address 0x4 - core index']
  #allocation1 [shape = 'u32[72,128]{1,0:T(1,128)}', space=vmem, size = 0x9000, scoped, tag = 'internal scratch']
  #allocation2 [shape = 'bf16[4,18,18]{2,1,0:T(8,128)(2,1)}', space=vmem, size = 0x6000, scoped, tag = 'scratch operand']
  #allocation3 [shape = 'f32[2,4,1,16]{3,2,1,0:T(1,128)}', space=vmem, size = 0x1000, scoped, tag = 'scratch operand']
  #allocation4 [shape = 's32[2]{0}', space=sflag, size = 0x8, scoped, tag = 'scratch operand']
  %s0 = inlined_call_operand.vmem [shape: f32[2,4,16,16], index: 0, kind: input, shape index: {}, may-alias: {0,1}]
  %s1 = inlined_call_operand.vmem [shape: f32[2,4,16,16], index: 1, kind: input, shape index: {}, may-alias: {0,1}]
  %s2 = inlined_call_operand.vmem [shape: bf16[8,36], index: 2, kind: input, shape index: {}]
  %s3 = inlined_call_operand.vmem [shape: f32[4,1], index: 3, kind: input, shape index: {}]
  %s4 = inlined_call_operand.vmem [shape: f32[4,1], index: 4, kind: input, shape index: {}]
  %s5 = inlined_call_operand.vmem [shape: f32[2,8,256], index: 5, kind: output, shape index: {0}]
  %s6 = inlined_call_operand.vmem [shape: f32[2,8,2], index: 6, kind: output, shape index: {1}]
  %7 = xla_tuple %s5, %s6
  %s8 = sld [smem:[#allocation0]]
  $region57: #{up_forward.4} parent=0
    _
  %s10 = ssub.s32 1, %s8
  %s11 = scalar_select 0, %s10, %s8
  loop: start=0, step=1, limit=4
  $region2: #{up_forward.4} parent=0 // loop_pre_header
    _
  $region3: #{up_forward.4} parent=0 // loop_header
    %s13 = sphi 0, %s17
    %p14 = scmp.ge.s32.totalorder %s13, 4
    %s20 = sphi 0, %s32
    %s21 = sphi 0, %s28
    %s22 = sphi 0, %s20
    %s23 = sphi 0, %s21
    %s24 = sphi 0, %s22
    %s25 = sphi 0, %s23
    %s37 = sphi 0, %s39
    %s40 = sphi 0, %s37
    %s41 = sphi 0, %s40
    %s57 = sphi 0, %s41
    %s61 = sphi 0, %s61
    %s63 = sphi 0, %s61
    %s64 = sphi 0, %s63
    %s78 = sphi 0, %s64
    %s82 = sphi 0, %s82
    %s84 = sphi 0, %s82
    %s85 = sphi 0, %s84
    %s99 = sphi 0, %s85
    %s103 = sphi 0, %s103
    %s105 = sphi 0, %s103
    %s106 = sphi 0, %s105
    %s120 = sphi 0, %s106
    %s128 = sphi 0, %s130
    %s131 = sphi 0, %s128
    %s132 = sphi 0, %s131
    %s148 = sphi 0, %s132
    %s154 = sphi 0, %s156
    %s157 = sphi 0, %s154
    %s158 = sphi 0, %s157
    %s174 = sphi 0, %s158
  $region4: #{up_forward.4} parent=0 // loop_header_branch
    %16 = sbr.rel (%p14) target = $region8
  $region5: #{up_forward.4} parent=0 // loop_body
    %s18 = ssub.s32 %s13, 1
    %s19 = ssub.s32 %s13, 2
    %s26 = sadd.s32 1, %s21
    %p27 = scmp.ge.s32.totalorder %s26, 1
    %s28 = scalar_select %p27, 0, %s26
    %s29 = sadd.s32 1, %s20
    %s30 = scalar_select %p27, %s29, %s20
    %p31 = scmp.ge.s32.totalorder %s30, 2
    %s32 = scalar_select %p31, 0, %s30
    %s33 = ssub.s32 %s20, %s32
    %s34 = ssub.s32 %s21, %s28
    %s35 = sor.u32 %s33, %s34
    %p36 = scmp.eq.s32.totalorder %s35, 0
    %s38 = sadd.s32 %s37, 1
    %s39 = scalar_select %p36, %s37, %s38
    %p42 = pneg %p36
    %p43 = scmp.eq.s32.totalorder %s13, 1
    %p44 = por %p42, %p43
    %p45 = scmp.ne.s32.totalorder %s37, %s40
    %p46 = scmp.eq.s32.totalorder %s13, 0
    %p47 = por %p45, %p46
    %p48 = scmp.ne.s32.totalorder %s37, %s40
    %p49 = scmp.eq.s32.totalorder %s18, 1
    %p50 = por %p48, %p49
    %p51 = scmp.ne.s32.totalorder %s40, %s41
    %p52 = scmp.eq.s32.totalorder %s18, 0
    %p53 = por %p51, %p52
    %p54 = scmp.ne.s32.totalorder %s40, %s41
    %p55 = scmp.eq.s32.totalorder %s19, 1
    %p56 = por %p54, %p55
    %p58 = scmp.ne.s32.totalorder %s41, %s57
    %p59 = scmp.eq.s32.totalorder %s19, 0
    %p60 = por %p58, %p59
    %s62 = sadd.s32 %s61, 1
    %p65 = scmp.eq.s32.totalorder %s13, 1
    %p66 = scmp.ne.s32.totalorder %s61, %s63
    %p67 = scmp.eq.s32.totalorder %s13, 0
    %p68 = por %p66, %p67
    %p69 = scmp.ne.s32.totalorder %s61, %s63
    %p70 = scmp.eq.s32.totalorder %s18, 1
    %p71 = por %p69, %p70
    %p72 = scmp.ne.s32.totalorder %s63, %s64
    %p73 = scmp.eq.s32.totalorder %s18, 0
    %p74 = por %p72, %p73
    %p75 = scmp.ne.s32.totalorder %s63, %s64
    %p76 = scmp.eq.s32.totalorder %s19, 1
    %p77 = por %p75, %p76
    %p79 = scmp.ne.s32.totalorder %s64, %s78
    %p80 = scmp.eq.s32.totalorder %s19, 0
    %p81 = por %p79, %p80
    %s83 = sadd.s32 %s82, 1
    %p86 = scmp.eq.s32.totalorder %s13, 1
    %p87 = scmp.ne.s32.totalorder %s82, %s84
    %p88 = scmp.eq.s32.totalorder %s13, 0
    %p89 = por %p87, %p88
    %p90 = scmp.ne.s32.totalorder %s82, %s84
    %p91 = scmp.eq.s32.totalorder %s18, 1
    %p92 = por %p90, %p91
    %p93 = scmp.ne.s32.totalorder %s84, %s85
    %p94 = scmp.eq.s32.totalorder %s18, 0
    %p95 = por %p93, %p94
    %p96 = scmp.ne.s32.totalorder %s84, %s85
    %p97 = scmp.eq.s32.totalorder %s19, 1
    %p98 = por %p96, %p97
    %p100 = scmp.ne.s32.totalorder %s85, %s99
    %p101 = scmp.eq.s32.totalorder %s19, 0
    %p102 = por %p100, %p101
    %s104 = sadd.s32 %s103, 1
    %p107 = scmp.eq.s32.totalorder %s13, 1
    %p108 = scmp.ne.s32.totalorder %s103, %s105
    %p109 = scmp.eq.s32.totalorder %s13, 0
    %p110 = por %p108, %p109
    %p111 = scmp.ne.s32.totalorder %s103, %s105
    %p112 = scmp.eq.s32.totalorder %s18, 1
    %p113 = por %p111, %p112
    %p114 = scmp.ne.s32.totalorder %s105, %s106
    %p115 = scmp.eq.s32.totalorder %s18, 0
    %p116 = por %p114, %p115
    %p117 = scmp.ne.s32.totalorder %s105, %s106
    %p118 = scmp.eq.s32.totalorder %s19, 1
    %p119 = por %p117, %p118
    %p121 = scmp.ne.s32.totalorder %s106, %s120
    %p122 = scmp.eq.s32.totalorder %s19, 0
    %p123 = por %p121, %p122
    %s124 = ssub.s32 %s20, %s32
    %s125 = ssub.s32 %s21, %s28
    %s126 = sor.u32 %s124, %s125
    %p127 = scmp.eq.s32.totalorder %s126, 0
    %s129 = sadd.s32 %s128, 1
    %s130 = scalar_select %p127, %s128, %s129
    %p133 = pneg %p127
    %p134 = scmp.eq.s32.totalorder %s13, 1
    %p135 = por %p133, %p134
    %p136 = scmp.ne.s32.totalorder %s128, %s131
    %p137 = scmp.eq.s32.totalorder %s13, 0
    %p138 = por %p136, %p137
    %p139 = scmp.ne.s32.totalorder %s128, %s131
    %p140 = scmp.eq.s32.totalorder %s18, 1
    %p141 = por %p139, %p140
    %p142 = scmp.ne.s32.totalorder %s131, %s132
    %p143 = scmp.eq.s32.totalorder %s18, 0
    %p144 = por %p142, %p143
    %p145 = scmp.ne.s32.totalorder %s131, %s132
    %p146 = scmp.eq.s32.totalorder %s19, 1
    %p147 = por %p145, %p146
    %p149 = scmp.ne.s32.totalorder %s132, %s148
    %p150 = scmp.eq.s32.totalorder %s19, 0
    %p151 = por %p149, %p150
    %s152 = ssub.s32 %s20, %s32
    %p153 = scmp.eq.s32.totalorder %s152, 0
    %s155 = sadd.s32 %s154, 1
    %s156 = scalar_select %p153, %s154, %s155
    %p159 = pneg %p153
    %p160 = scmp.eq.s32.totalorder %s13, 1
    %p161 = por %p159, %p160
    %p162 = scmp.ne.s32.totalorder %s154, %s157
    %p163 = scmp.eq.s32.totalorder %s13, 0
    %p164 = por %p162, %p163
    %p165 = scmp.ne.s32.totalorder %s154, %s157
    %p166 = scmp.eq.s32.totalorder %s18, 1
    %p167 = por %p165, %p166
    %p168 = scmp.ne.s32.totalorder %s157, %s158
    %p169 = scmp.eq.s32.totalorder %s18, 0
    %p170 = por %p168, %p169
    %p171 = scmp.ne.s32.totalorder %s157, %s158
    %p172 = scmp.eq.s32.totalorder %s19, 1
    %p173 = por %p171, %p172
    %p175 = scmp.ne.s32.totalorder %s158, %s174
    %p176 = scmp.eq.s32.totalorder %s19, 0
    %p177 = por %p175, %p176
    %p178 = scmp.le.s32.totalorder 1, %s13
    %p179 = scmp.lt.s32.totalorder %s13, 3
    %p180 = pnand %p178, %p179
    %p181 = pneg %p180
    // Predicated region
    $region9: #{up_forward.4} parent=5 // pred_check
      _
    $region10: #{up_forward.4} parent=5 // pred_check_branch
      %183 = sbr.rel (%p180) target = $region12
    $region11: #{up_forward.4} parent=5 // pred_region
      %s184 = ssub.s32 %s13, 1
      // Predicated region
      $region13: #{up_forward.4} parent=11 // pred_check
        %p185 = pneg %p74
      $region14: #{up_forward.4} parent=11 // pred_check_branch
        %187 = sbr.rel (%p185) target = $region16
      $region15: #{up_forward.4} parent=11 // pred_region
        _
      $region16: #{up_forward.4} parent=11 // pred_fallthru
        _
      // Predicated region
      $region17: #{up_forward.4} parent=11 // pred_check
        %p188 = pneg %p95
      $region18: #{up_forward.4} parent=11 // pred_check_branch
        %190 = sbr.rel (%p188) target = $region20
      $region19: #{up_forward.4} parent=11 // pred_region
        _
      $region20: #{up_forward.4} parent=11 // pred_fallthru
        _
      // Predicated region
      $region21: #{up_forward.4} parent=11 // pred_check
        %p191 = pneg %p116
      $region22: #{up_forward.4} parent=11 // pred_check_branch
        %193 = sbr.rel (%p191) target = $region24
      $region23: #{up_forward.4} parent=11 // pred_region
        _
      $region24: #{up_forward.4} parent=11 // pred_fallthru
        _
    $region12: #{up_forward.4} parent=5 // pred_fallthru
      _
    %p194 = scmp.lt.s32.totalorder %s13, 2
    // Predicated region
    $region25: #{up_forward.4} parent=5 // pred_check
      %p195 = pneg %p194
    $region26: #{up_forward.4} parent=5 // pred_check_branch
      %197 = sbr.rel (%p195) target = $region28
    $region27: #{up_forward.4} parent=5 // pred_region
      // Predicated region
      $region29: #{up_forward.4} parent=27 // pred_check
        %p198 = pneg %p47
      $region30: #{up_forward.4} parent=27 // pred_check_branch
        %200 = sbr.rel (%p198) target = $region32
      $region31: #{up_forward.4} parent=27 // pred_region
        %s201 = smul.u32 2, %s21
        %p202 = scmp.lt.s32.totalorder %s20, 1
        %s203 = scalar_select %p202, %s20, 1
        %p204 = scmp.lt.s32.totalorder %s201, 1
        %s205 = scalar_select %p204, %s201, 1
        %s206 = smul.addr %s203, 8
        %s207 = sadd.s32 %s205, %s206
        %s208 = smul.addr %s207, 8
        %s209 = scalar_lea.vmem %s0, %s208
        %s210 = smul.u32 2, %s21
      $region32: #{up_forward.4} parent=27 // pred_fallthru
        _
    $region28: #{up_forward.4} parent=5 // pred_fallthru
      _
    %p211 = scmp.le.s32.totalorder 1, %s13
    %p212 = scmp.lt.s32.totalorder %s13, 3
    %p213 = pnand %p211, %p212
    %p214 = pneg %p213
    // Predicated region
    $region33: #{up_forward.4} parent=5 // pred_check
      _
    $region34: #{up_forward.4} parent=5 // pred_check_branch
      %216 = sbr.rel (%p213) target = $region36
    $region35: #{up_forward.4} parent=5 // pred_region
      %s217 = ssub.s32 %s13, 1
      %s218 = smul.u32 2, %s23
      %p219 = scmp.lt.s32.totalorder %s22, 1
      %s220 = scalar_select %p219, %s22, 1
      %p221 = scmp.lt.s32.totalorder %s218, 1
      %s222 = scalar_select %p221, %s218, 1
      %s223 = smul.addr %s220, 8
      %s224 = sadd.s32 %s222, %s223
      %s225 = smul.addr %s224, 8
      %s226 = scalar_lea.vmem %s0, %s225
      %p227 = pneg %p53
      %p228 = pneg %p50
      %p229 = pneg %p74
      %p230 = pneg %p71
      %p231 = pneg %p95
      %p232 = pneg %p92
      %p233 = pneg %p116
      %p234 = pneg %p113
      %p235 = pneg %p144
      %p236 = pneg %p141
      %s237 = smul.u32 2, %s23
      %p238 = scmp.lt.s32.totalorder %s22, 1
      %s239 = scalar_select %p238, %s22, 1
      %p240 = scmp.lt.s32.totalorder %s237, 1
      %s241 = scalar_select %p240, %s237, 1
      %s242 = smul.addr %s239, 2
      %s243 = sadd.s32 %s241, %s242
      %s244 = smul.addr %s243, 8
      %s245 = scalar_lea.vmem %s5, %s244
      %p246 = pneg %p170
      %p247 = pneg %p167
      %p248 = scmp.lt.s32.totalorder %s22, 1
      %s249 = scalar_select %p248, %s22, 1
      %s250 = smul.addr %s249, 8
      %s251 = scalar_lea.vmem %s6, %s250
      %s252 = smul.u32 2, %s23
      %p253 = scmp.lt.s32.totalorder %s22, 1
      %s254 = scalar_select %p253, %s22, 1
      %p255 = scmp.lt.s32.totalorder %s252, 1
      %s256 = scalar_select %p255, %s252, 1
      %s257 = smul.addr %s254, 8
      %s258 = sadd.s32 %s256, %s257
      %s259 = smul.addr %s258, 8
      %s260 = scalar_lea.vmem %s0, %s259
      %s261 = smul.u32 2, %s23
      %s262 = smul.u32 2, %s23
      %p263 = scmp.lt.s32.totalorder %s22, 1
      %s264 = scalar_select %p263, %s22, 1
      %p265 = scmp.lt.s32.totalorder %s262, 1
      %s266 = scalar_select %p265, %s262, 1
      %s267 = smul.addr %s264, 2
      %s268 = sadd.s32 %s266, %s267
      %s269 = smul.addr %s268, 8
      %s270 = scalar_lea.vmem %s5, %s269
      %s271 = smul.u32 2, %s23
      %p272 = scmp.lt.s32.totalorder %s22, 1
      %s273 = scalar_select %p272, %s22, 1
      %s274 = smul.addr %s273, 8
      %s275 = scalar_lea.vmem %s6, %s274
      %vm277 = vcmask 3072
      %278 = vst.msk [vmem:[#allocation2] sm:$0xf] %vm277, 0
      %279 = vst.msk [vmem:[#allocation2 + $0x4] sm:$0xf] %vm277, 0
      %vm280 = vcmask 0
      %281 = vst.msk [vmem:[#allocation2 + $0x8] sm:$0x1] %vm280, 0
      %282 = vst.msk [vmem:[#allocation2 + $0xc] sm:$0xf] %vm277, 0
      %283 = vst.msk [vmem:[#allocation2 + $0x10] sm:$0xf] %vm277, 0
      %284 = vst.msk [vmem:[#allocation2 + $0x14] sm:$0x1] %vm280, 0
      %285 = vst.msk [vmem:[#allocation2 + $0x18] sm:$0xf] %vm277, 0
      %286 = vst.msk [vmem:[#allocation2 + $0x1c] sm:$0xf] %vm277, 0
      %287 = vst.msk [vmem:[#allocation2 + $0x20] sm:$0x1] %vm280, 0
      %288 = vst.msk [vmem:[#allocation2 + $0x24] sm:$0xf] %vm277, 0
      %289 = vst.msk [vmem:[#allocation2 + $0x28] sm:$0xf] %vm277, 0
      %290 = vst.msk [vmem:[#allocation2 + $0x2c] sm:$0x1] %vm280, 0
      %vm291 = vcmask 142472
      %292 = vst.msk [vmem:[#allocation2] sm:$0xf] %vm291, 0
      %293 = vst.msk [vmem:[#allocation2 + $0x4] sm:$0xf] %vm291, 0
      %vm294 = vcmask 139400
      %295 = vst.msk [vmem:[#allocation2 + $0x8] sm:$0x1] %vm294, 0
      %296 = vst.msk [vmem:[#allocation2 + $0xc] sm:$0xf] %vm291, 0
      %297 = vst.msk [vmem:[#allocation2 + $0x10] sm:$0xf] %vm291, 0
      %298 = vst.msk [vmem:[#allocation2 + $0x14] sm:$0x1] %vm294, 0
      %299 = vst.msk [vmem:[#allocation2 + $0x18] sm:$0xf] %vm291, 0
      %300 = vst.msk [vmem:[#allocation2 + $0x1c] sm:$0xf] %vm291, 0
      %301 = vst.msk [vmem:[#allocation2 + $0x20] sm:$0x1] %vm294, 0
      %302 = vst.msk [vmem:[#allocation2 + $0x24] sm:$0xf] %vm291, 0
      %303 = vst.msk [vmem:[#allocation2 + $0x28] sm:$0xf] %vm291, 0
      %304 = vst.msk [vmem:[#allocation2 + $0x2c] sm:$0x1] %vm294, 0
      %v305 = vld [vmem:[%s260] sm:$0xff]
      %v306 = vld [vmem:[%s260 + $0x8] sm:$0xff]
      %v307 = vld [vmem:[%s260 + $0x10] sm:$0xff]
      %v308 = vld [vmem:[%s260 + $0x18] sm:$0xff]
      %v309 = vld [vmem:[%s260 + $0x20] sm:$0xff]
      %v310 = vld [vmem:[%s260 + $0x28] sm:$0xff]
      %v311 = vld [vmem:[%s260 + $0x30] sm:$0xff]
      %v312 = vld [vmem:[%s260 + $0x38] sm:$0xff]
      %v313 = vld [vmem:[%s3] sm:$0xf]
      %v315 = vrot.slane %v313, 1
      %v316 = vrot.slane %v313, 2
      %v317 = vrot.slane %v313, 3
      %v318 = vld [vmem:[%s4] sm:$0xf]
      %v320 = vrot.slane %v318, 1
      %v321 = vrot.slane %v318, 2
      %v322 = vrot.slane %v318, 3
      %v323 = vperm.slane %v313, 0
      %v324 = vperm.slane %v315, 0
      %v325 = vperm.slane %v316, 0
      %v326 = vperm.slane %v317, 0
      %327 = vset.pattern.permute.xlu0 0
      %328 = vperm.xlu0 %327, %v323
      %v329 = vpop.permute.xlu0 %328
      %331 = vset.pattern.permute.xlu0 0
      %332 = vperm.xlu0 %331, %v324
      %v333 = vpop.permute.xlu0 %332
      %335 = vset.pattern.permute.xlu0 0
      %336 = vperm.xlu0 %335, %v325
      %v337 = vpop.permute.xlu0 %336
      %339 = vset.pattern.permute.xlu0 0
      %340 = vperm.xlu0 %339, %v326
      %v341 = vpop.permute.xlu0 %340
      %v343 = vmul.f32 %v305, %v329
      %v344 = vmul.f32 %v306, %v329
      %v345 = vmul.f32 %v307, %v333
      %v346 = vmul.f32 %v308, %v333
      %v347 = vmul.f32 %v309, %v337
      %v348 = vmul.f32 %v310, %v337
      %v349 = vmul.f32 %v311, %v341
      %v350 = vmul.f32 %v312, %v341
      %v351 = vperm.slane %v318, 0
      %v352 = vperm.slane %v320, 0
      %v353 = vperm.slane %v321, 0
      %v354 = vperm.slane %v322, 0
      %355 = vset.pattern.permute.xlu0 0
      %356 = vperm.xlu0 %355, %v351
      %v357 = vpop.permute.xlu0 %356
      %359 = vset.pattern.permute.xlu0 0
      %360 = vperm.xlu0 %359, %v352
      %v361 = vpop.permute.xlu0 %360
      %363 = vset.pattern.permute.xlu0 0
      %364 = vperm.xlu0 %363, %v353
      %v365 = vpop.permute.xlu0 %364
      %367 = vset.pattern.permute.xlu0 0
      %368 = vperm.xlu0 %367, %v354
      %v369 = vpop.permute.xlu0 %368
      %v371 = vadd.f32 %v343, %v357
      %v372 = vadd.f32 %v344, %v357
      %v373 = vadd.f32 %v345, %v361
      %v374 = vadd.f32 %v346, %v361
      %v375 = vadd.f32 %v347, %v365
      %v376 = vadd.f32 %v348, %v365
      %v377 = vadd.f32 %v349, %v369
      %v378 = vadd.f32 %v350, %v369
      %v379 = vmax.f32 %v371, 0.0
      %v380 = vmax.f32 %v372, 0.0
      %v381 = vmax.f32 %v373, 0.0
      %v382 = vmax.f32 %v374, 0.0
      %v383 = vmax.f32 %v375, 0.0
      %v384 = vmax.f32 %v376, 0.0
      %v385 = vmax.f32 %v377, 0.0
      %v386 = vmax.f32 %v378, 0.0
      %v387 = vpack.c.bf16 %v379, %v379
      %v388 = vpack.c.bf16 %v380, %v380
      %v389 = vpack.c.bf16 %v381, %v381
      %v390 = vpack.c.bf16 %v382, %v382
      %v391 = vpack.c.bf16 %v383, %v383
      %v392 = vpack.c.bf16 %v384, %v384
      %v393 = vpack.c.bf16 %v385, %v385
      %v394 = vpack.c.bf16 %v386, %v386
      %vm395 = vsmask.f32 256
      %vm396 = vsmask.f32 4368
      %vm397 = vmor %vm395, %vm396
      %v399 = vshrl.u32 %v387, 16
      %v401 = vrot.slane %v399, 7
      %v402 = vshll.u32 %v387, 16
      %v404 = vor.u32 %v401, %v402
      %v405 = vrot.slane %v401, 4
      %v407 = vshrl.u32 %v388, 16
      %v409 = vrot.slane %v407, 7
      %v410 = vshll.u32 %v388, 16
      %v412 = vor.u32 %v409, %v410
      %v413 = vsel %vm397, %v405, %v412
      %v414 = vrot.slane %v409, 4
      %v416 = vshrl.u32 %v389, 16
      %v418 = vrot.slane %v416, 7
      %v419 = vshll.u32 %v389, 16
      %v421 = vor.u32 %v418, %v419
      %v422 = vrot.slane %v418, 4
      %v424 = vshrl.u32 %v390, 16
      %v426 = vrot.slane %v424, 7
      %v427 = vshll.u32 %v390, 16
      %v429 = vor.u32 %v426, %v427
      %v430 = vsel %vm397, %v422, %v429
      %v431 = vrot.slane %v426, 4
      %v433 = vshrl.u32 %v391, 16
      %v435 = vrot.slane %v433, 7
      %v436 = vshll.u32 %v391, 16
      %v438 = vor.u32 %v435, %v436
      %v439 = vrot.slane %v435, 4
      %v441 = vshrl.u32 %v392, 16
      %v443 = vrot.slane %v441, 7
      %v444 = vshll.u32 %v392, 16
      %v446 = vor.u32 %v443, %v444
      %v447 = vsel %vm397, %v439, %v446
      %v448 = vrot.slane %v443, 4
      %v450 = vshrl.u32 %v393, 16
      %v452 = vrot.slane %v450, 7
      %v453 = vshll.u32 %v393, 16
      %v455 = vor.u32 %v452, %v453
      %v456 = vrot.slane %v452, 4
      %v458 = vshrl.u32 %v394, 16
      %v460 = vrot.slane %v458, 7
      %v461 = vshll.u32 %v394, 16
      %v463 = vor.u32 %v460, %v461
      %v464 = vsel %vm397, %v456, %v463
      %v465 = vrot.slane %v460, 4
      %466 = vrot.lane.b32.xlu0 %v404, 1
      %v467 = vpop.permute.xlu0 %466
      %468 = vrot.lane.b32.xlu0 %v413, 1
      %v469 = vpop.permute.xlu0 %468
      %470 = vrot.lane.b32.xlu0 %v414, 1
      %v471 = vpop.permute.xlu0 %470
      %472 = vrot.lane.b32.xlu0 %v421, 1
      %v473 = vpop.permute.xlu0 %472
      %474 = vrot.lane.b32.xlu0 %v430, 1
      %v475 = vpop.permute.xlu0 %474
      %476 = vrot.lane.b32.xlu0 %v431, 1
      %v477 = vpop.permute.xlu0 %476
      %478 = vrot.lane.b32.xlu0 %v438, 1
      %v479 = vpop.permute.xlu0 %478
      %480 = vrot.lane.b32.xlu0 %v447, 1
      %v481 = vpop.permute.xlu0 %480
      %482 = vrot.lane.b32.xlu0 %v448, 1
      %v483 = vpop.permute.xlu0 %482
      %484 = vrot.lane.b32.xlu0 %v455, 1
      %v485 = vpop.permute.xlu0 %484
      %486 = vrot.lane.b32.xlu0 %v464, 1
      %v487 = vpop.permute.xlu0 %486
      %488 = vrot.lane.b32.xlu0 %v465, 1
      %v489 = vpop.permute.xlu0 %488
      %vm502 = vcmask 134152
      %vm503 = vsmask.f32 7938
      %vm504 = vmand %vm502, %vm503
      %v505 = vld [vmem:[#allocation2] sm:$0xf]
      %v506 = vsel %vm504, %v467, %v505
      %507 = vst [vmem:[#allocation2] sm:$0xf] %v506
      %vm508 = vcmask 134152
      %509 = vst.msk [vmem:[#allocation2 + $0x4] sm:$0xf] %vm508, %v469
      %vm510 = vcmask 131080
      %vm511 = vmand %vm510, %vm395
      %v512 = vld [vmem:[#allocation2 + $0x8] sm:$0x1]
      %v513 = vsel %vm511, %v471, %v512
      %514 = vst [vmem:[#allocation2 + $0x8] sm:$0x1] %v513
      %v515 = vld [vmem:[#allocation2 + $0xc] sm:$0xf]
      %v516 = vsel %vm504, %v473, %v515
      %517 = vst [vmem:[#allocation2 + $0xc] sm:$0xf] %v516
      %518 = vst.msk [vmem:[#allocation2 + $0x10] sm:$0xf] %vm508, %v475
      %v519 = vld [vmem:[#allocation2 + $0x14] sm:$0x1]
      %v520 = vsel %vm511, %v477, %v519
      %521 = vst [vmem:[#allocation2 + $0x14] sm:$0x1] %v520
      %v522 = vld [vmem:[#allocation2 + $0x18] sm:$0xf]
      %v523 = vsel %vm504, %v479, %v522
      %524 = vst [vmem:[#allocation2 + $0x18] sm:$0xf] %v523
      %525 = vst.msk [vmem:[#allocation2 + $0x1c] sm:$0xf] %vm508, %v481
      %v526 = vld [vmem:[#allocation2 + $0x20] sm:$0x1]
      %v527 = vsel %vm511, %v483, %v526
      %528 = vst [vmem:[#allocation2 + $0x20] sm:$0x1] %v527
      %v529 = vld [vmem:[#allocation2 + $0x24] sm:$0xf]
      %v530 = vsel %vm504, %v485, %v529
      %531 = vst [vmem:[#allocation2 + $0x24] sm:$0xf] %v530
      %532 = vst.msk [vmem:[#allocation2 + $0x28] sm:$0xf] %vm508, %v487
      %v533 = vld [vmem:[#allocation2 + $0x2c] sm:$0x1]
      %v534 = vsel %vm511, %v489, %v533
      %535 = vst [vmem:[#allocation2 + $0x2c] sm:$0x1] %v534
      %vm536 = vcmask 139264
      %vm537 = vmand %vm536, %vm395
      %v538 = vld [vmem:[#allocation2] sm:$0x1]
      %v539 = vsel %vm537, 0, %v538
      %540 = vst [vmem:[#allocation2] sm:$0x1] %v539
      %v541 = vld [vmem:[#allocation2 + $0xc] sm:$0x1]
      %v542 = vsel %vm537, 0, %v541
      %543 = vst [vmem:[#allocation2 + $0xc] sm:$0x1] %v542
      %v544 = vld [vmem:[#allocation2 + $0x18] sm:$0x1]
      %v545 = vsel %vm537, 0, %v544
      %546 = vst [vmem:[#allocation2 + $0x18] sm:$0x1] %v545
      %v547 = vld [vmem:[#allocation2 + $0x24] sm:$0x1]
      %v548 = vsel %vm537, 0, %v547
      %549 = vst [vmem:[#allocation2 + $0x24] sm:$0x1] %v548
      %vm550 = vmand %vm536, %vm503
      %v551 = vld [vmem:[#allocation2 + $0x8] sm:$0x1]
      %v552 = vsel %vm550, 0, %v551
      %553 = vst [vmem:[#allocation2 + $0x8] sm:$0x1] %v552
      %v554 = vld [vmem:[#allocation2 + $0x14] sm:$0x1]
      %v555 = vsel %vm550, 0, %v554
      %556 = vst [vmem:[#allocation2 + $0x14] sm:$0x1] %v555
      %v557 = vld [vmem:[#allocation2 + $0x20] sm:$0x1]
      %v558 = vsel %vm550, 0, %v557
      %559 = vst [vmem:[#allocation2 + $0x20] sm:$0x1] %v558
      %v560 = vld [vmem:[#allocation2 + $0x2c] sm:$0x1]
      %v561 = vsel %vm550, 0, %v560
      %562 = vst [vmem:[#allocation2 + $0x2c] sm:$0x1] %v561
      %v563 = vld [vmem:[#allocation2] sm:$0xf]
      %v564 = vld [vmem:[#allocation2 + $0x4] sm:$0xf]
      %v565 = vld [vmem:[#allocation2 + $0xc] sm:$0xf]
      %v566 = vld [vmem:[#allocation2 + $0x10] sm:$0xf]
      %v567 = vld [vmem:[#allocation2 + $0x18] sm:$0xf]
      %v568 = vld [vmem:[#allocation2 + $0x1c] sm:$0xf]
      %v569 = vld [vmem:[#allocation2 + $0x24] sm:$0xf]
      %v570 = vld [vmem:[#allocation2 + $0x28] sm:$0xf]
      %v571 = vld [vmem:[#allocation2 + $0x8] sm:$0x1]
      %v572 = vld [vmem:[#allocation2 + $0x14] sm:$0x1]
      %v573 = vld [vmem:[#allocation2 + $0x20] sm:$0x1]
      %v574 = vld [vmem:[#allocation2 + $0x2c] sm:$0x1]
      %v575 = vld [vmem:[#allocation2] sm:$0xe]
      %v576 = vld [vmem:[#allocation2 + $0xc] sm:$0xe]
      %v577 = vld [vmem:[#allocation2 + $0x18] sm:$0xe]
      %v578 = vld [vmem:[#allocation2 + $0x24] sm:$0xe]
      %587 = vrot.lane.b32.xlu0 %v563, 127
      %v588 = vpop.permute.xlu0 %587
      %589 = vrot.lane.b32.xlu0 %v564, 127
      %v590 = vpop.permute.xlu0 %589
      %591 = vrot.lane.b32.xlu0 %v565, 127
      %v592 = vpop.permute.xlu0 %591
      %593 = vrot.lane.b32.xlu0 %v566, 127
      %v594 = vpop.permute.xlu0 %593
      %595 = vrot.lane.b32.xlu0 %v567, 127
      %v596 = vpop.permute.xlu0 %595
      %597 = vrot.lane.b32.xlu0 %v568, 127
      %v598 = vpop.permute.xlu0 %597
      %599 = vrot.lane.b32.xlu0 %v569, 127
      %v600 = vpop.permute.xlu0 %599
      %601 = vrot.lane.b32.xlu0 %v570, 127
      %v602 = vpop.permute.xlu0 %601
      %603 = vrot.lane.b32.xlu0 %v563, 126
      %v604 = vpop.permute.xlu0 %603
      %605 = vrot.lane.b32.xlu0 %v564, 126
      %v606 = vpop.permute.xlu0 %605
      %607 = vrot.lane.b32.xlu0 %v565, 126
      %v608 = vpop.permute.xlu0 %607
      %609 = vrot.lane.b32.xlu0 %v566, 126
      %v610 = vpop.permute.xlu0 %609
      %611 = vrot.lane.b32.xlu0 %v567, 126
      %v612 = vpop.permute.xlu0 %611
      %613 = vrot.lane.b32.xlu0 %v568, 126
      %v614 = vpop.permute.xlu0 %613
      %615 = vrot.lane.b32.xlu0 %v569, 126
      %v616 = vpop.permute.xlu0 %615
      %617 = vrot.lane.b32.xlu0 %v570, 126
      %v618 = vpop.permute.xlu0 %617
      %vm619 = vsmask.f32 3328
      %vm620 = vsmask.f32 7440
      %vm621 = vmor %vm619, %vm620
      %v623 = vshrl.u32 %v563, 16
      %v625 = vrot.slane %v623, 4
      %v626 = vshll.u32 %v563, 16
      %v628 = vrot.slane %v626, 5
      %v629 = vor.u32 %v625, %v628
      %v630 = vrot.slane %v629, 4
      %v632 = vshll.u32 %v564, 16
      %v634 = vrot.slane %v632, 5
      %v635 = vsel %vm621, %v630, %v634
      %v636 = vshrl.u32 %v564, 16
      %v638 = vrot.slane %v636, 4
      %v639 = vor.u32 %v638, %v634
      %v640 = vrot.slane %v639, 4
      %v642 = vshll.u32 %v571, 16
      %v644 = vrot.slane %v642, 5
      %v645 = vsel %vm621, %v640, %v644
      %v647 = vshrl.u32 %v565, 16
      %v649 = vrot.slane %v647, 4
      %v650 = vshll.u32 %v565, 16
      %v652 = vrot.slane %v650, 5
      %v653 = vor.u32 %v649, %v652
      %v654 = vrot.slane %v653, 4
      %v656 = vshll.u32 %v566, 16
      %v658 = vrot.slane %v656, 5
      %v659 = vsel %vm621, %v654, %v658
      %v660 = vshrl.u32 %v566, 16
      %v662 = vrot.slane %v660, 4
      %v663 = vor.u32 %v662, %v658
      %v664 = vrot.slane %v663, 4
      %v666 = vshll.u32 %v572, 16
      %v668 = vrot.slane %v666, 5
      %v669 = vsel %vm621, %v664, %v668
      %v671 = vshrl.u32 %v567, 16
      %v673 = vrot.slane %v671, 4
      %v674 = vshll.u32 %v567, 16
      %v676 = vrot.slane %v674, 5
      %v677 = vor.u32 %v673, %v676
      %v678 = vrot.slane %v677, 4
      %v680 = vshll.u32 %v568, 16
      %v682 = vrot.slane %v680, 5
      %v683 = vsel %vm621, %v678, %v682
      %v684 = vshrl.u32 %v568, 16
      %v686 = vrot.slane %v684, 4
      %v687 = vor.u32 %v686, %v682
      %v688 = vrot.slane %v687, 4
      %v690 = vshll.u32 %v573, 16
      %v692 = vrot.slane %v690, 5
      %v693 = vsel %vm621, %v688, %v692
      %v695 = vshrl.u32 %v569, 16
      %v697 = vrot.slane %v695, 4
      %v698 = vshll.u32 %v569, 16
      %v700 = vrot.slane %v698, 5
      %v701 = vor.u32 %v697, %v700
      %v702 = vrot.slane %v701, 4
      %v704 = vshll.u32 %v570, 16
      %v706 = vrot.slane %v704, 5
      %v707 = vsel %vm621, %v702, %v706
      %v708 = vshrl.u32 %v570, 16
      %v710 = vrot.slane %v708, 4
      %v711 = vor.u32 %v710, %v706
      %v712 = vrot.slane %v711, 4
      %v714 = vshll.u32 %v574, 16
      %v716 = vrot.slane %v714, 5
      %v717 = vsel %vm621, %v712, %v716
      %718 = vrot.lane.b32.xlu0 %v635, 127
      %v719 = vpop.permute.xlu0 %718
      %720 = vrot.lane.b32.xlu0 %v645, 127
      %v721 = vpop.permute.xlu0 %720
      %722 = vrot.lane.b32.xlu0 %v659, 127
      %v723 = vpop.permute.xlu0 %722
      %724 = vrot.lane.b32.xlu0 %v669, 127
      %v725 = vpop.permute.xlu0 %724
      %726 = vrot.lane.b32.xlu0 %v683, 127
      %v727 = vpop.permute.xlu0 %726
      %728 = vrot.lane.b32.xlu0 %v693, 127
      %v729 = vpop.permute.xlu0 %728
      %730 = vrot.lane.b32.xlu0 %v707, 127
      %v731 = vpop.permute.xlu0 %730
      %732 = vrot.lane.b32.xlu0 %v717, 127
      %v733 = vpop.permute.xlu0 %732
      %734 = vrot.lane.b32.xlu0 %v635, 126
      %v735 = vpop.permute.xlu0 %734
      %736 = vrot.lane.b32.xlu0 %v645, 126
      %v737 = vpop.permute.xlu0 %736
      %738 = vrot.lane.b32.xlu0 %v659, 126
      %v739 = vpop.permute.xlu0 %738
      %740 = vrot.lane.b32.xlu0 %v669, 126
      %v741 = vpop.permute.xlu0 %740
      %742 = vrot.lane.b32.xlu0 %v683, 126
      %v743 = vpop.permute.xlu0 %742
      %744 = vrot.lane.b32.xlu0 %v693, 126
      %v745 = vpop.permute.xlu0 %744
      %746 = vrot.lane.b32.xlu0 %v707, 126
      %v747 = vpop.permute.xlu0 %746
      %748 = vrot.lane.b32.xlu0 %v717, 126
      %v749 = vpop.permute.xlu0 %748
      %vm758 = vcmask 1042432
      %vm759 = vcmask 1046532
      %vm760 = vmor %vm758, %vm759
      %v761 = vrot.slane %v575, 5
      %v762 = vrot.slane %v761, 4
      %v763 = vrot.slane %v564, 5
      %v764 = vsel %vm760, %v762, %v763
      %v765 = vrot.slane %v763, 4
      %v766 = vrot.slane %v571, 5
      %v767 = vsel %vm760, %v765, %v766
      %v768 = vrot.slane %v576, 5
      %v769 = vrot.slane %v768, 4
      %v770 = vrot.slane %v566, 5
      %v771 = vsel %vm760, %v769, %v770
      %v772 = vrot.slane %v770, 4
      %v773 = vrot.slane %v572, 5
      %v774 = vsel %vm760, %v772, %v773
      %v775 = vrot.slane %v577, 5
      %v776 = vrot.slane %v775, 4
      %v777 = vrot.slane %v568, 5
      %v778 = vsel %vm760, %v776, %v777
      %v779 = vrot.slane %v777, 4
      %v780 = vrot.slane %v573, 5
      %v781 = vsel %vm760, %v779, %v780
      %v782 = vrot.slane %v578, 5
      %v783 = vrot.slane %v782, 4
      %v784 = vrot.slane %v570, 5
      %v785 = vsel %vm760, %v783, %v784
      %v786 = vrot.slane %v784, 4
      %v787 = vrot.slane %v574, 5
      %v788 = vsel %vm760, %v786, %v787
      %789 = vrot.lane.b32.xlu0 %v764, 127
      %v790 = vpop.permute.xlu0 %789
      %791 = vrot.lane.b32.xlu0 %v767, 127
      %v792 = vpop.permute.xlu0 %791
      %793 = vrot.lane.b32.xlu0 %v771, 127
      %v794 = vpop.permute.xlu0 %793
      %795 = vrot.lane.b32.xlu0 %v774, 127
      %v796 = vpop.permute.xlu0 %795
      %797 = vrot.lane.b32.xlu0 %v778, 127
      %v798 = vpop.permute.xlu0 %797
      %799 = vrot.lane.b32.xlu0 %v781, 127
      %v800 = vpop.permute.xlu0 %799
      %801 = vrot.lane.b32.xlu0 %v785, 127
      %v802 = vpop.permute.xlu0 %801
      %803 = vrot.lane.b32.xlu0 %v788, 127
      %v804 = vpop.permute.xlu0 %803
      %805 = vrot.lane.b32.xlu0 %v764, 126
      %v806 = vpop.permute.xlu0 %805
      %807 = vrot.lane.b32.xlu0 %v767, 126
      %v808 = vpop.permute.xlu0 %807
      %809 = vrot.lane.b32.xlu0 %v771, 126
      %v810 = vpop.permute.xlu0 %809
      %811 = vrot.lane.b32.xlu0 %v774, 126
      %v812 = vpop.permute.xlu0 %811
      %813 = vrot.lane.b32.xlu0 %v778, 126
      %v814 = vpop.permute.xlu0 %813
      %815 = vrot.lane.b32.xlu0 %v781, 126
      %v816 = vpop.permute.xlu0 %815
      %817 = vrot.lane.b32.xlu0 %v785, 126
      %v818 = vpop.permute.xlu0 %817
      %819 = vrot.lane.b32.xlu0 %v788, 126
      %v820 = vpop.permute.xlu0 %819
      %v821 = vpack.i.b16 %v565, %v563
      %v823 = vpack.i.b16 %v647, %v623
      %v825 = vpack.i.b16 %v569, %v567
      %v827 = vpack.i.b16 %v695, %v671
      %v831 = vpack.i.b16 %v592, %v588
      %v833 = vshrl.u32 %v588, 16
      %v834 = vshrl.u32 %v592, 16
      %v835 = vpack.i.b16 %v834, %v833
      %v839 = vpack.i.b16 %v600, %v596
      %v841 = vshrl.u32 %v596, 16
      %v842 = vshrl.u32 %v600, 16
      %v843 = vpack.i.b16 %v842, %v841
      %v847 = vpack.i.b16 %v608, %v604
      %v849 = vshrl.u32 %v604, 16
      %v850 = vshrl.u32 %v608, 16
      %v851 = vpack.i.b16 %v850, %v849
      %v855 = vpack.i.b16 %v616, %v612
      %v857 = vshrl.u32 %v612, 16
      %v858 = vshrl.u32 %v616, 16
      %v859 = vpack.i.b16 %v858, %v857
      %v863 = vpack.i.b16 %v659, %v635
      %v865 = vshrl.u32 %v635, 16
      %v866 = vshrl.u32 %v659, 16
      %v867 = vpack.i.b16 %v866, %v865
      %v871 = vpack.i.b16 %v707, %v683
      %v873 = vshrl.u32 %v683, 16
      %v874 = vshrl.u32 %v707, 16
      %v875 = vpack.i.b16 %v874, %v873
      %v879 = vpack.i.b16 %v723, %v719
      %v881 = vshrl.u32 %v719, 16
      %v882 = vshrl.u32 %v723, 16
      %v883 = vpack.i.b16 %v882, %v881
      %v887 = vpack.i.b16 %v731, %v727
      %v889 = vshrl.u32 %v727, 16
      %v890 = vshrl.u32 %v731, 16
      %v891 = vpack.i.b16 %v890, %v889
      %v895 = vpack.i.b16 %v739, %v735
      %v897 = vshrl.u32 %v735, 16
      %v898 = vshrl.u32 %v739, 16
      %v899 = vpack.i.b16 %v898, %v897
      %v903 = vpack.i.b16 %v747, %v743
      %v905 = vshrl.u32 %v743, 16
      %v906 = vshrl.u32 %v747, 16
      %v907 = vpack.i.b16 %v906, %v905
      %v911 = vpack.i.b16 %v771, %v764
      %v913 = vshrl.u32 %v764, 16
      %v914 = vshrl.u32 %v771, 16
      %v915 = vpack.i.b16 %v914, %v913
      %v919 = vpack.i.b16 %v785, %v778
      %v921 = vshrl.u32 %v778, 16
      %v922 = vshrl.u32 %v785, 16
      %v923 = vpack.i.b16 %v922, %v921
      %v927 = vpack.i.b16 %v794, %v790
      %v929 = vshrl.u32 %v790, 16
      %v930 = vshrl.u32 %v794, 16
      %v931 = vpack.i.b16 %v930, %v929
      %v935 = vpack.i.b16 %v802, %v798
      %v937 = vshrl.u32 %v798, 16
      %v938 = vshrl.u32 %v802, 16
      %v939 = vpack.i.b16 %v938, %v937
      %v943 = vpack.i.b16 %v810, %v806
      %v944 = vshrl.u32 %v806, 16
      %v945 = vshrl.u32 %v810, 16
      %v946 = vpack.i.b16 %v945, %v944
      %v949 = vpack.i.b16 %v818, %v814
      %v950 = vshrl.u32 %v814, 16
      %v951 = vshrl.u32 %v818, 16
      %v952 = vpack.i.b16 %v951, %v950
      %v953 = vpack.i.b16 %v566, %v564
      %v955 = vpack.i.b16 %v660, %v636
      %v957 = vpack.i.b16 %v570, %v568
      %v959 = vpack.i.b16 %v708, %v684
      %v963 = vpack.i.b16 %v594, %v590
      %v965 = vshrl.u32 %v590, 16
      %v966 = vshrl.u32 %v594, 16
      %v967 = vpack.i.b16 %v966, %v965
      %v971 = vpack.i.b16 %v602, %v598
      %v973 = vshrl.u32 %v598, 16
      %v974 = vshrl.u32 %v602, 16
      %v975 = vpack.i.b16 %v974, %v973
      %v979 = vpack.i.b16 %v610, %v606
      %v981 = vshrl.u32 %v606, 16
      %v982 = vshrl.u32 %v610, 16
      %v983 = vpack.i.b16 %v982, %v981
      %v987 = vpack.i.b16 %v618, %v614
      %v989 = vshrl.u32 %v614, 16
      %v990 = vshrl.u32 %v618, 16
      %v991 = vpack.i.b16 %v990, %v989
      %v995 = vpack.i.b16 %v669, %v645
      %v997 = vshrl.u32 %v645, 16
      %v998 = vshrl.u32 %v669, 16
      %v999 = vpack.i.b16 %v998, %v997
      %v1003 = vpack.i.b16 %v717, %v693
      %v1005 = vshrl.u32 %v693, 16
      %v1006 = vshrl.u32 %v717, 16
      %v1007 = vpack.i.b16 %v1006, %v1005
      %v1011 = vpack.i.b16 %v725, %v721
      %v1013 = vshrl.u32 %v721, 16
      %v1014 = vshrl.u32 %v725, 16
      %v1015 = vpack.i.b16 %v1014, %v1013
      %v1019 = vpack.i.b16 %v733, %v729
      %v1021 = vshrl.u32 %v729, 16
      %v1022 = vshrl.u32 %v733, 16
      %v1023 = vpack.i.b16 %v1022, %v1021
      %v1027 = vpack.i.b16 %v741, %v737
      %v1029 = vshrl.u32 %v737, 16
      %v1030 = vshrl.u32 %v741, 16
      %v1031 = vpack.i.b16 %v1030, %v1029
      %v1035 = vpack.i.b16 %v749, %v745
      %v1037 = vshrl.u32 %v745, 16
      %v1038 = vshrl.u32 %v749, 16
      %v1039 = vpack.i.b16 %v1038, %v1037
      %v1043 = vpack.i.b16 %v774, %v767
      %v1045 = vshrl.u32 %v767, 16
      %v1046 = vshrl.u32 %v774, 16
      %v1047 = vpack.i.b16 %v1046, %v1045
      %v1051 = vpack.i.b16 %v788, %v781
      %v1053 = vshrl.u32 %v781, 16
      %v1054 = vshrl.u32 %v788, 16
      %v1055 = vpack.i.b16 %v1054, %v1053
      %v1059 = vpack.i.b16 %v796, %v792
      %v1061 = vshrl.u32 %v792, 16
      %v1062 = vshrl.u32 %v796, 16
      %v1063 = vpack.i.b16 %v1062, %v1061
      %v1067 = vpack.i.b16 %v804, %v800
      %v1069 = vshrl.u32 %v800, 16
      %v1070 = vshrl.u32 %v804, 16
      %v1071 = vpack.i.b16 %v1070, %v1069
      %v1075 = vpack.i.b16 %v812, %v808
      %v1076 = vshrl.u32 %v808, 16
      %v1077 = vshrl.u32 %v812, 16
      %v1078 = vpack.i.b16 %v1077, %v1076
      %v1081 = vpack.i.b16 %v820, %v816
      %v1082 = vshrl.u32 %v816, 16
      %v1083 = vshrl.u32 %v820, 16
      %v1084 = vpack.i.b16 %v1083, %v1082
      %v1085 = vrot.slane %v831, 4
      %vm1086 = vcmask 1047556
      %v1087 = vsel %vm1086, %v1085, %v821
      %v1089 = vunpack.c.l.s4 1983009808
      %v1090 = vunpack.c.0.s8 %v1089
      %v1091 = vperm.slane %v1087, %v1090
      %v1092 = vrot.slane %v839, 4
      %v1093 = vsel %vm1086, %v1092, %v825
      %v1095 = vunpack.c.l.s4 1983009808
      %v1096 = vunpack.c.0.s8 %v1095
      %v1097 = vperm.slane %v1093, %v1096
      %v1098 = vrot.slane %v1097, 4
      %v1099 = vsel %vm1086, %v1098, %v1091
      %v1100 = vrot.slane %v1091, 4
      %v1101 = vsel %vm1086, %v1097, %v1100
      %v1103 = vunpack.c.l.s4 1934713408
      %v1104 = vunpack.c.0.s8 %v1103
      %v1105 = vperm.slane %v1099, %v1104
      %v1107 = vunpack.c.l.s4 1934713408
      %v1108 = vunpack.c.0.s8 %v1107
      %v1109 = vperm.slane %v1101, %v1108
      %v1110 = vrot.slane %v1105, 4
      %v1111 = vsel %vm1086, 0, %v1110
      %v1112 = vrot.slane %v1109, 4
      %v1113 = vsel %vm1086, 0, %v1112
      %v1114 = vrot.slane %v835, 4
      %v1115 = vsel %vm1086, %v1114, %v823
      %v1117 = vunpack.c.l.s4 1983009808
      %v1118 = vunpack.c.0.s8 %v1117
      %v1119 = vperm.slane %v1115, %v1118
      %v1120 = vrot.slane %v843, 4
      %v1121 = vsel %vm1086, %v1120, %v827
      %v1123 = vunpack.c.l.s4 1983009808
      %v1124 = vunpack.c.0.s8 %v1123
      %v1125 = vperm.slane %v1121, %v1124
      %v1126 = vrot.slane %v1125, 4
      %v1127 = vsel %vm1086, %v1126, %v1119
      %v1128 = vrot.slane %v1119, 4
      %v1129 = vsel %vm1086, %v1125, %v1128
      %v1131 = vunpack.c.l.s4 1934713408
      %v1132 = vunpack.c.0.s8 %v1131
      %v1133 = vperm.slane %v1127, %v1132
      %v1135 = vunpack.c.l.s4 1934713408
      %v1136 = vunpack.c.0.s8 %v1135
      %v1137 = vperm.slane %v1129, %v1136
      %v1138 = vrot.slane %v1133, 4
      %v1139 = vsel %vm1086, 0, %v1138
      %v1140 = vrot.slane %v1137, 4
      %v1141 = vsel %vm1086, 0, %v1140
      %v1142 = vrot.slane %v863, 4
      %v1143 = vsel %vm1086, %v1142, %v847
      %v1145 = vunpack.c.l.s4 1983009808
      %v1146 = vunpack.c.0.s8 %v1145
      %v1147 = vperm.slane %v1143, %v1146
      %v1148 = vrot.slane %v871, 4
      %v1149 = vsel %vm1086, %v1148, %v855
      %v1151 = vunpack.c.l.s4 1983009808
      %v1152 = vunpack.c.0.s8 %v1151
      %v1153 = vperm.slane %v1149, %v1152
      %v1154 = vrot.slane %v1153, 4
      %v1155 = vsel %vm1086, %v1154, %v1147
      %v1156 = vrot.slane %v1147, 4
      %v1157 = vsel %vm1086, %v1153, %v1156
      %v1159 = vunpack.c.l.s4 1934713408
      %v1160 = vunpack.c.0.s8 %v1159
      %v1161 = vperm.slane %v1155, %v1160
      %v1163 = vunpack.c.l.s4 1934713408
      %v1164 = vunpack.c.0.s8 %v1163
      %v1165 = vperm.slane %v1157, %v1164
      %v1166 = vrot.slane %v1161, 4
      %v1167 = vsel %vm1086, 0, %v1166
      %v1168 = vrot.slane %v1165, 4
      %v1169 = vsel %vm1086, 0, %v1168
      %v1170 = vrot.slane %v867, 4
      %v1171 = vsel %vm1086, %v1170, %v851
      %v1173 = vunpack.c.l.s4 1983009808
      %v1174 = vunpack.c.0.s8 %v1173
      %v1175 = vperm.slane %v1171, %v1174
      %v1176 = vrot.slane %v875, 4
      %v1177 = vsel %vm1086, %v1176, %v859
      %v1179 = vunpack.c.l.s4 1983009808
      %v1180 = vunpack.c.0.s8 %v1179
      %v1181 = vperm.slane %v1177, %v1180
      %v1182 = vrot.slane %v1181, 4
      %v1183 = vsel %vm1086, %v1182, %v1175
      %v1184 = vrot.slane %v1175, 4
      %v1185 = vsel %vm1086, %v1181, %v1184
      %v1187 = vunpack.c.l.s4 1934713408
      %v1188 = vunpack.c.0.s8 %v1187
      %v1189 = vperm.slane %v1183, %v1188
      %v1191 = vunpack.c.l.s4 1934713408
      %v1192 = vunpack.c.0.s8 %v1191
      %v1193 = vperm.slane %v1185, %v1192
      %v1194 = vrot.slane %v1189, 4
      %v1195 = vsel %vm1086, 0, %v1194
      %v1196 = vrot.slane %v1193, 4
      %v1197 = vsel %vm1086, 0, %v1196
      %v1198 = vrot.slane %v895, 4
      %v1199 = vsel %vm1086, %v1198, %v879
      %v1201 = vunpack.c.l.s4 1983009808
      %v1202 = vunpack.c.0.s8 %v1201
      %v1203 = vperm.slane %v1199, %v1202
      %v1204 = vrot.slane %v903, 4
      %v1205 = vsel %vm1086, %v1204, %v887
      %v1207 = vunpack.c.l.s4 1983009808
      %v1208 = vunpack.c.0.s8 %v1207
      %v1209 = vperm.slane %v1205, %v1208
      %v1210 = vrot.slane %v1209, 4
      %v1211 = vsel %vm1086, %v1210, %v1203
      %v1212 = vrot.slane %v1203, 4
      %v1213 = vsel %vm1086, %v1209, %v1212
      %v1215 = vunpack.c.l.s4 1934713408
      %v1216 = vunpack.c.0.s8 %v1215
      %v1217 = vperm.slane %v1211, %v1216
      %v1219 = vunpack.c.l.s4 1934713408
      %v1220 = vunpack.c.0.s8 %v1219
      %v1221 = vperm.slane %v1213, %v1220
      %v1222 = vrot.slane %v1217, 4
      %v1223 = vsel %vm1086, 0, %v1222
      %v1224 = vrot.slane %v1221, 4
      %v1225 = vsel %vm1086, 0, %v1224
      %v1226 = vrot.slane %v899, 4
      %v1227 = vsel %vm1086, %v1226, %v883
      %v1229 = vunpack.c.l.s4 1983009808
      %v1230 = vunpack.c.0.s8 %v1229
      %v1231 = vperm.slane %v1227, %v1230
      %v1232 = vrot.slane %v907, 4
      %v1233 = vsel %vm1086, %v1232, %v891
      %v1235 = vunpack.c.l.s4 1983009808
      %v1236 = vunpack.c.0.s8 %v1235
      %v1237 = vperm.slane %v1233, %v1236
      %v1238 = vrot.slane %v1237, 4
      %v1239 = vsel %vm1086, %v1238, %v1231
      %v1240 = vrot.slane %v1231, 4
      %v1241 = vsel %vm1086, %v1237, %v1240
      %v1243 = vunpack.c.l.s4 1934713408
      %v1244 = vunpack.c.0.s8 %v1243
      %v1245 = vperm.slane %v1239, %v1244
      %v1247 = vunpack.c.l.s4 1934713408
      %v1248 = vunpack.c.0.s8 %v1247
      %v1249 = vperm.slane %v1241, %v1248
      %v1250 = vrot.slane %v1245, 4
      %v1251 = vsel %vm1086, 0, %v1250
      %v1252 = vrot.slane %v1249, 4
      %v1253 = vsel %vm1086, 0, %v1252
      %v1254 = vrot.slane %v927, 4
      %v1255 = vsel %vm1086, %v1254, %v911
      %v1257 = vunpack.c.l.s4 1983009808
      %v1258 = vunpack.c.0.s8 %v1257
      %v1259 = vperm.slane %v1255, %v1258
      %v1260 = vrot.slane %v935, 4
      %v1261 = vsel %vm1086, %v1260, %v919
      %v1263 = vunpack.c.l.s4 1983009808
      %v1264 = vunpack.c.0.s8 %v1263
      %v1265 = vperm.slane %v1261, %v1264
      %v1266 = vrot.slane %v1265, 4
      %v1267 = vsel %vm1086, %v1266, %v1259
      %v1268 = vrot.slane %v1259, 4
      %v1269 = vsel %vm1086, %v1265, %v1268
      %v1271 = vunpack.c.l.s4 1934713408
      %v1272 = vunpack.c.0.s8 %v1271
      %v1273 = vperm.slane %v1267, %v1272
      %v1275 = vunpack.c.l.s4 1934713408
      %v1276 = vunpack.c.0.s8 %v1275
      %v1277 = vperm.slane %v1269, %v1276
      %v1278 = vrot.slane %v1273, 4
      %v1279 = vsel %vm1086, 0, %v1278
      %v1280 = vrot.slane %v1277, 4
      %v1281 = vsel %vm1086, 0, %v1280
      %v1282 = vrot.slane %v931, 4
      %v1283 = vsel %vm1086, %v1282, %v915
      %v1285 = vunpack.c.l.s4 1983009808
      %v1286 = vunpack.c.0.s8 %v1285
      %v1287 = vperm.slane %v1283, %v1286
      %v1288 = vrot.slane %v939, 4
      %v1289 = vsel %vm1086, %v1288, %v923
      %v1291 = vunpack.c.l.s4 1983009808
      %v1292 = vunpack.c.0.s8 %v1291
      %v1293 = vperm.slane %v1289, %v1292
      %v1294 = vrot.slane %v1293, 4
      %v1295 = vsel %vm1086, %v1294, %v1287
      %v1296 = vrot.slane %v1287, 4
      %v1297 = vsel %vm1086, %v1293, %v1296
      %v1299 = vunpack.c.l.s4 1934713408
      %v1300 = vunpack.c.0.s8 %v1299
      %v1301 = vperm.slane %v1295, %v1300
      %v1303 = vunpack.c.l.s4 1934713408
      %v1304 = vunpack.c.0.s8 %v1303
      %v1305 = vperm.slane %v1297, %v1304
      %v1306 = vrot.slane %v1301, 4
      %v1307 = vsel %vm1086, 0, %v1306
      %v1308 = vrot.slane %v1305, 4
      %v1309 = vsel %vm1086, 0, %v1308
      %v1312 = vunpack.c.l.s4 1983009808
      %v1313 = vunpack.c.0.s8 %v1312
      %v1314 = vperm.slane %v943, %v1313
      %v1317 = vunpack.c.l.s4 1983009808
      %v1318 = vunpack.c.0.s8 %v1317
      %v1319 = vperm.slane %v949, %v1318
      %v1320 = vrot.slane %v1319, 4
      %v1321 = vsel %vm1086, %v1320, %v1314
      %v1322 = vrot.slane %v1314, 4
      %v1323 = vsel %vm1086, %v1319, %v1322
      %v1325 = vunpack.c.l.s4 1934713408
      %v1326 = vunpack.c.0.s8 %v1325
      %v1327 = vperm.slane %v1321, %v1326
      %v1329 = vunpack.c.l.s4 1934713408
      %v1330 = vunpack.c.0.s8 %v1329
      %v1331 = vperm.slane %v1323, %v1330
      %v1332 = vrot.slane %v1327, 4
      %v1333 = vsel %vm1086, 0, %v1332
      %v1334 = vrot.slane %v1331, 4
      %v1335 = vsel %vm1086, 0, %v1334
      %v1338 = vunpack.c.l.s4 1983009808
      %v1339 = vunpack.c.0.s8 %v1338
      %v1340 = vperm.slane %v946, %v1339
      %v1343 = vunpack.c.l.s4 1983009808
      %v1344 = vunpack.c.0.s8 %v1343
      %v1345 = vperm.slane %v952, %v1344
      %v1346 = vrot.slane %v1345, 4
      %v1347 = vsel %vm1086, %v1346, %v1340
      %v1348 = vrot.slane %v1340, 4
      %v1349 = vsel %vm1086, %v1345, %v1348
      %v1351 = vunpack.c.l.s4 1934713408
      %v1352 = vunpack.c.0.s8 %v1351
      %v1353 = vperm.slane %v1347, %v1352
      %v1355 = vunpack.c.l.s4 1934713408
      %v1356 = vunpack.c.0.s8 %v1355
      %v1357 = vperm.slane %v1349, %v1356
      %v1358 = vrot.slane %v1353, 4
      %v1359 = vsel %vm1086, 0, %v1358
      %v1360 = vrot.slane %v1357, 4
      %v1361 = vsel %vm1086, 0, %v1360
      %v1362 = vrot.slane %v963, 4
      %v1363 = vsel %vm1086, %v1362, %v953
      %v1365 = vunpack.c.l.s4 1983009808
      %v1366 = vunpack.c.0.s8 %v1365
      %v1367 = vperm.slane %v1363, %v1366
      %v1368 = vrot.slane %v971, 4
      %v1369 = vsel %vm1086, %v1368, %v957
      %v1371 = vunpack.c.l.s4 1983009808
      %v1372 = vunpack.c.0.s8 %v1371
      %v1373 = vperm.slane %v1369, %v1372
      %v1374 = vrot.slane %v1373, 4
      %v1375 = vsel %vm1086, %v1374, %v1367
      %v1376 = vrot.slane %v1367, 4
      %v1377 = vsel %vm1086, %v1373, %v1376
      %v1379 = vunpack.c.l.s4 1934713408
      %v1380 = vunpack.c.0.s8 %v1379
      %v1381 = vperm.slane %v1375, %v1380
      %v1383 = vunpack.c.l.s4 1934713408
      %v1384 = vunpack.c.0.s8 %v1383
      %v1385 = vperm.slane %v1377, %v1384
      %v1386 = vrot.slane %v1381, 4
      %v1387 = vsel %vm1086, 0, %v1386
      %v1388 = vrot.slane %v1385, 4
      %v1389 = vsel %vm1086, 0, %v1388
      %v1390 = vrot.slane %v967, 4
      %v1391 = vsel %vm1086, %v1390, %v955
      %v1393 = vunpack.c.l.s4 1983009808
      %v1394 = vunpack.c.0.s8 %v1393
      %v1395 = vperm.slane %v1391, %v1394
      %v1396 = vrot.slane %v975, 4
      %v1397 = vsel %vm1086, %v1396, %v959
      %v1399 = vunpack.c.l.s4 1983009808
      %v1400 = vunpack.c.0.s8 %v1399
      %v1401 = vperm.slane %v1397, %v1400
      %v1402 = vrot.slane %v1401, 4
      %v1403 = vsel %vm1086, %v1402, %v1395
      %v1404 = vrot.slane %v1395, 4
      %v1405 = vsel %vm1086, %v1401, %v1404
      %v1407 = vunpack.c.l.s4 1934713408
      %v1408 = vunpack.c.0.s8 %v1407
      %v1409 = vperm.slane %v1403, %v1408
      %v1411 = vunpack.c.l.s4 1934713408
      %v1412 = vunpack.c.0.s8 %v1411
      %v1413 = vperm.slane %v1405, %v1412
      %v1414 = vrot.slane %v1409, 4
      %v1415 = vsel %vm1086, 0, %v1414
      %v1416 = vrot.slane %v1413, 4
      %v1417 = vsel %vm1086, 0, %v1416
      %v1418 = vrot.slane %v995, 4
      %v1419 = vsel %vm1086, %v1418, %v979
      %v1421 = vunpack.c.l.s4 1983009808
      %v1422 = vunpack.c.0.s8 %v1421
      %v1423 = vperm.slane %v1419, %v1422
      %v1424 = vrot.slane %v1003, 4
      %v1425 = vsel %vm1086, %v1424, %v987
      %v1427 = vunpack.c.l.s4 1983009808
      %v1428 = vunpack.c.0.s8 %v1427
      %v1429 = vperm.slane %v1425, %v1428
      %v1430 = vrot.slane %v1429, 4
      %v1431 = vsel %vm1086, %v1430, %v1423
      %v1432 = vrot.slane %v1423, 4
      %v1433 = vsel %vm1086, %v1429, %v1432
      %v1435 = vunpack.c.l.s4 1934713408
      %v1436 = vunpack.c.0.s8 %v1435
      %v1437 = vperm.slane %v1431, %v1436
      %v1439 = vunpack.c.l.s4 1934713408
      %v1440 = vunpack.c.0.s8 %v1439
      %v1441 = vperm.slane %v1433, %v1440
      %v1442 = vrot.slane %v1437, 4
      %v1443 = vsel %vm1086, 0, %v1442
      %v1444 = vrot.slane %v1441, 4
      %v1445 = vsel %vm1086, 0, %v1444
      %v1446 = vrot.slane %v999, 4
      %v1447 = vsel %vm1086, %v1446, %v983
      %v1449 = vunpack.c.l.s4 1983009808
      %v1450 = vunpack.c.0.s8 %v1449
      %v1451 = vperm.slane %v1447, %v1450
      %v1452 = vrot.slane %v1007, 4
      %v1453 = vsel %vm1086, %v1452, %v991
      %v1455 = vunpack.c.l.s4 1983009808
      %v1456 = vunpack.c.0.s8 %v1455
      %v1457 = vperm.slane %v1453, %v1456
      %v1458 = vrot.slane %v1457, 4
      %v1459 = vsel %vm1086, %v1458, %v1451
      %v1460 = vrot.slane %v1451, 4
      %v1461 = vsel %vm1086, %v1457, %v1460
      %v1463 = vunpack.c.l.s4 1934713408
      %v1464 = vunpack.c.0.s8 %v1463
      %v1465 = vperm.slane %v1459, %v1464
      %v1467 = vunpack.c.l.s4 1934713408
      %v1468 = vunpack.c.0.s8 %v1467
      %v1469 = vperm.slane %v1461, %v1468
      %v1470 = vrot.slane %v1465, 4
      %v1471 = vsel %vm1086, 0, %v1470
      %v1472 = vrot.slane %v1469, 4
      %v1473 = vsel %vm1086, 0, %v1472
      %v1474 = vrot.slane %v1027, 4
      %v1475 = vsel %vm1086, %v1474, %v1011
      %v1477 = vunpack.c.l.s4 1983009808
      %v1478 = vunpack.c.0.s8 %v1477
      %v1479 = vperm.slane %v1475, %v1478
      %v1480 = vrot.slane %v1035, 4
      %v1481 = vsel %vm1086, %v1480, %v1019
      %v1483 = vunpack.c.l.s4 1983009808
      %v1484 = vunpack.c.0.s8 %v1483
      %v1485 = vperm.slane %v1481, %v1484
      %v1486 = vrot.slane %v1485, 4
      %v1487 = vsel %vm1086, %v1486, %v1479
      %v1488 = vrot.slane %v1479, 4
      %v1489 = vsel %vm1086, %v1485, %v1488
      %v1491 = vunpack.c.l.s4 1934713408
      %v1492 = vunpack.c.0.s8 %v1491
      %v1493 = vperm.slane %v1487, %v1492
      %v1495 = vunpack.c.l.s4 1934713408
      %v1496 = vunpack.c.0.s8 %v1495
      %v1497 = vperm.slane %v1489, %v1496
      %v1498 = vrot.slane %v1493, 4
      %v1499 = vsel %vm1086, 0, %v1498
      %v1500 = vrot.slane %v1497, 4
      %v1501 = vsel %vm1086, 0, %v1500
      %v1502 = vrot.slane %v1031, 4
      %v1503 = vsel %vm1086, %v1502, %v1015
      %v1505 = vunpack.c.l.s4 1983009808
      %v1506 = vunpack.c.0.s8 %v1505
      %v1507 = vperm.slane %v1503, %v1506
      %v1508 = vrot.slane %v1039, 4
      %v1509 = vsel %vm1086, %v1508, %v1023
      %v1511 = vunpack.c.l.s4 1983009808
      %v1512 = vunpack.c.0.s8 %v1511
      %v1513 = vperm.slane %v1509, %v1512
      %v1514 = vrot.slane %v1513, 4
      %v1515 = vsel %vm1086, %v1514, %v1507
      %v1516 = vrot.slane %v1507, 4
      %v1517 = vsel %vm1086, %v1513, %v1516
      %v1519 = vunpack.c.l.s4 1934713408
      %v1520 = vunpack.c.0.s8 %v1519
      %v1521 = vperm.slane %v1515, %v1520
      %v1523 = vunpack.c.l.s4 1934713408
      %v1524 = vunpack.c.0.s8 %v1523
      %v1525 = vperm.slane %v1517, %v1524
      %v1526 = vrot.slane %v1521, 4
      %v1527 = vsel %vm1086, 0, %v1526
      %v1528 = vrot.slane %v1525, 4
      %v1529 = vsel %vm1086, 0, %v1528
      %v1530 = vrot.slane %v1059, 4
      %v1531 = vsel %vm1086, %v1530, %v1043
      %v1533 = vunpack.c.l.s4 1983009808
      %v1534 = vunpack.c.0.s8 %v1533
      %v1535 = vperm.slane %v1531, %v1534
      %v1536 = vrot.slane %v1067, 4
      %v1537 = vsel %vm1086, %v1536, %v1051
      %v1539 = vunpack.c.l.s4 1983009808
      %v1540 = vunpack.c.0.s8 %v1539
      %v1541 = vperm.slane %v1537, %v1540
      %v1542 = vrot.slane %v1541, 4
      %v1543 = vsel %vm1086, %v1542, %v1535
      %v1544 = vrot.slane %v1535, 4
      %v1545 = vsel %vm1086, %v1541, %v1544
      %v1547 = vunpack.c.l.s4 1934713408
      %v1548 = vunpack.c.0.s8 %v1547
      %v1549 = vperm.slane %v1543, %v1548
      %v1551 = vunpack.c.l.s4 1934713408
      %v1552 = vunpack.c.0.s8 %v1551
      %v1553 = vperm.slane %v1545, %v1552
      %v1554 = vrot.slane %v1549, 4
      %v1555 = vsel %vm1086, 0, %v1554
      %v1556 = vrot.slane %v1553, 4
      %v1557 = vsel %vm1086, 0, %v1556
      %v1558 = vrot.slane %v1063, 4
      %v1559 = vsel %vm1086, %v1558, %v1047
      %v1561 = vunpack.c.l.s4 1983009808
      %v1562 = vunpack.c.0.s8 %v1561
      %v1563 = vperm.slane %v1559, %v1562
      %v1564 = vrot.slane %v1071, 4
      %v1565 = vsel %vm1086, %v1564, %v1055
      %v1567 = vunpack.c.l.s4 1983009808
      %v1568 = vunpack.c.0.s8 %v1567
      %v1569 = vperm.slane %v1565, %v1568
      %v1570 = vrot.slane %v1569, 4
      %v1571 = vsel %vm1086, %v1570, %v1563
      %v1572 = vrot.slane %v1563, 4
      %v1573 = vsel %vm1086, %v1569, %v1572
      %v1575 = vunpack.c.l.s4 1934713408
      %v1576 = vunpack.c.0.s8 %v1575
      %v1577 = vperm.slane %v1571, %v1576
      %v1579 = vunpack.c.l.s4 1934713408
      %v1580 = vunpack.c.0.s8 %v1579
      %v1581 = vperm.slane %v1573, %v1580
      %v1582 = vrot.slane %v1577, 4
      %v1583 = vsel %vm1086, 0, %v1582
      %v1584 = vrot.slane %v1581, 4
      %v1585 = vsel %vm1086, 0, %v1584
      %v1588 = vunpack.c.l.s4 1983009808
      %v1589 = vunpack.c.0.s8 %v1588
      %v1590 = vperm.slane %v1075, %v1589
      %v1593 = vunpack.c.l.s4 1983009808
      %v1594 = vunpack.c.0.s8 %v1593
      %v1595 = vperm.slane %v1081, %v1594
      %v1596 = vrot.slane %v1595, 4
      %v1597 = vsel %vm1086, %v1596, %v1590
      %v1598 = vrot.slane %v1590, 4
      %v1599 = vsel %vm1086, %v1595, %v1598
      %v1601 = vunpack.c.l.s4 1934713408
      %v1602 = vunpack.c.0.s8 %v1601
      %v1603 = vperm.slane %v1597, %v1602
      %v1605 = vunpack.c.l.s4 1934713408
      %v1606 = vunpack.c.0.s8 %v1605
      %v1607 = vperm.slane %v1599, %v1606
      %v1608 = vrot.slane %v1603, 4
      %v1609 = vsel %vm1086, 0, %v1608
      %v1610 = vrot.slane %v1607, 4
      %v1611 = vsel %vm1086, 0, %v1610
      %v1614 = vunpack.c.l.s4 1983009808
      %v1615 = vunpack.c.0.s8 %v1614
      %v1616 = vperm.slane %v1078, %v1615
      %v1619 = vunpack.c.l.s4 1983009808
      %v1620 = vunpack.c.0.s8 %v1619
      %v1621 = vperm.slane %v1084, %v1620
      %v1622 = vrot.slane %v1621, 4
      %v1623 = vsel %vm1086, %v1622, %v1616
      %v1624 = vrot.slane %v1616, 4
      %v1625 = vsel %vm1086, %v1621, %v1624
      %v1627 = vunpack.c.l.s4 1934713408
      %v1628 = vunpack.c.0.s8 %v1627
      %v1629 = vperm.slane %v1623, %v1628
      %v1631 = vunpack.c.l.s4 1934713408
      %v1632 = vunpack.c.0.s8 %v1631
      %v1633 = vperm.slane %v1625, %v1632
      %v1634 = vrot.slane %v1629, 4
      %v1635 = vsel %vm1086, 0, %v1634
      %v1636 = vrot.slane %v1633, 4
      %v1637 = vsel %vm1086, 0, %v1636
      %v1643 = vunpack.c.l.b16 %v1105
      %v1644 = vunpack.c.l.b16 %v1161
      %v1645 = vunpack.c.l.b16 %v1217
      %v1646 = vunpack.c.l.b16 %v1273
      %v1647 = vunpack.c.l.b16 %v1327
      %v1648 = vpack.c.b16 %v1644, %v1643
      %v1649 = vpack.c.b16 %v1646, %v1645
      %v1650 = vpack.c.b16 %v1647, %v1647
      %v1656 = vunpack.c.l.b16 %v1133
      %v1657 = vunpack.c.l.b16 %v1189
      %v1658 = vunpack.c.l.b16 %v1245
      %v1659 = vunpack.c.l.b16 %v1301
      %v1660 = vunpack.c.l.b16 %v1353
      %v1661 = vpack.c.b16 %v1657, %v1656
      %v1662 = vpack.c.b16 %v1659, %v1658
      %v1663 = vpack.c.b16 %v1660, %v1660
      %1664 = vrot.lane.b32.xlu0 %v1661, 16
      %v1665 = vpop.permute.xlu0 %1664
      %1666 = vrot.lane.b32.xlu0 %v1662, 16
      %v1667 = vpop.permute.xlu0 %1666
      %1668 = vrot.lane.b32.xlu0 %v1663, 16
      %v1669 = vpop.permute.xlu0 %1668
      %v1675 = vunpack.c.l.b16 %v1111
      %v1676 = vunpack.c.l.b16 %v1167
      %v1677 = vunpack.c.l.b16 %v1223
      %v1678 = vunpack.c.l.b16 %v1279
      %v1679 = vunpack.c.l.b16 %v1333
      %v1680 = vpack.c.b16 %v1676, %v1675
      %v1681 = vpack.c.b16 %v1678, %v1677
      %v1682 = vpack.c.b16 %v1679, %v1679
      %1683 = vrot.lane.b32.xlu0 %v1680, 32
      %v1684 = vpop.permute.xlu0 %1683
      %1685 = vrot.lane.b32.xlu0 %v1681, 32
      %v1686 = vpop.permute.xlu0 %1685
      %1687 = vrot.lane.b32.xlu0 %v1682, 32
      %v1688 = vpop.permute.xlu0 %1687
      %v1694 = vunpack.c.l.b16 %v1139
      %v1695 = vunpack.c.l.b16 %v1195
      %v1696 = vunpack.c.l.b16 %v1251
      %v1697 = vunpack.c.l.b16 %v1307
      %v1698 = vunpack.c.l.b16 %v1359
      %v1699 = vpack.c.b16 %v1695, %v1694
      %v1700 = vpack.c.b16 %v1697, %v1696
      %v1701 = vpack.c.b16 %v1698, %v1698
      %1702 = vrot.lane.b32.xlu0 %v1699, 48
      %v1703 = vpop.permute.xlu0 %1702
      %1704 = vrot.lane.b32.xlu0 %v1700, 48
      %v1705 = vpop.permute.xlu0 %1704
      %1706 = vrot.lane.b32.xlu0 %v1701, 48
      %v1707 = vpop.permute.xlu0 %1706
      %v1713 = vunpack.c.l.b16 %v1109
      %v1714 = vunpack.c.l.b16 %v1165
      %v1715 = vunpack.c.l.b16 %v1221
      %v1716 = vunpack.c.l.b16 %v1277
      %v1717 = vunpack.c.l.b16 %v1331
      %v1718 = vpack.c.b16 %v1714, %v1713
      %v1719 = vpack.c.b16 %v1716, %v1715
      %v1720 = vpack.c.b16 %v1717, %v1717
      %1721 = vrot.lane.b32.xlu0 %v1718, 64
      %v1722 = vpop.permute.xlu0 %1721
      %1723 = vrot.lane.b32.xlu0 %v1719, 64
      %v1724 = vpop.permute.xlu0 %1723
      %1725 = vrot.lane.b32.xlu0 %v1720, 64
      %v1726 = vpop.permute.xlu0 %1725
      %v1732 = vunpack.c.l.b16 %v1137
      %v1733 = vunpack.c.l.b16 %v1193
      %v1734 = vunpack.c.l.b16 %v1249
      %v1735 = vunpack.c.l.b16 %v1305
      %v1736 = vunpack.c.l.b16 %v1357
      %v1737 = vpack.c.b16 %v1733, %v1732
      %v1738 = vpack.c.b16 %v1735, %v1734
      %v1739 = vpack.c.b16 %v1736, %v1736
      %1740 = vrot.lane.b32.xlu0 %v1737, 80
      %v1741 = vpop.permute.xlu0 %1740
      %1742 = vrot.lane.b32.xlu0 %v1738, 80
      %v1743 = vpop.permute.xlu0 %1742
      %1744 = vrot.lane.b32.xlu0 %v1739, 80
      %v1745 = vpop.permute.xlu0 %1744
      %v1751 = vunpack.c.l.b16 %v1113
      %v1752 = vunpack.c.l.b16 %v1169
      %v1753 = vunpack.c.l.b16 %v1225
      %v1754 = vunpack.c.l.b16 %v1281
      %v1755 = vunpack.c.l.b16 %v1335
      %v1756 = vpack.c.b16 %v1752, %v1751
      %v1757 = vpack.c.b16 %v1754, %v1753
      %v1758 = vpack.c.b16 %v1755, %v1755
      %1759 = vrot.lane.b32.xlu0 %v1756, 96
      %v1760 = vpop.permute.xlu0 %1759
      %1761 = vrot.lane.b32.xlu0 %v1757, 96
      %v1762 = vpop.permute.xlu0 %1761
      %1763 = vrot.lane.b32.xlu0 %v1758, 96
      %v1764 = vpop.permute.xlu0 %1763
      %v1770 = vunpack.c.l.b16 %v1141
      %v1771 = vunpack.c.l.b16 %v1197
      %v1772 = vunpack.c.l.b16 %v1253
      %v1773 = vunpack.c.l.b16 %v1309
      %v1774 = vunpack.c.l.b16 %v1361
      %v1775 = vpack.c.b16 %v1771, %v1770
      %v1776 = vpack.c.b16 %v1773, %v1772
      %v1777 = vpack.c.b16 %v1774, %v1774
      %1778 = vrot.lane.b32.xlu0 %v1775, 112
      %v1779 = vpop.permute.xlu0 %1778
      %1780 = vrot.lane.b32.xlu0 %v1776, 112
      %v1781 = vpop.permute.xlu0 %1780
      %1782 = vrot.lane.b32.xlu0 %v1777, 112
      %v1783 = vpop.permute.xlu0 %1782
      %v1789 = vunpack.c.l.b16 %v1381
      %v1790 = vunpack.c.l.b16 %v1437
      %v1791 = vunpack.c.l.b16 %v1493
      %v1792 = vunpack.c.l.b16 %v1549
      %v1793 = vunpack.c.l.b16 %v1603
      %v1794 = vpack.c.b16 %v1790, %v1789
      %v1795 = vpack.c.b16 %v1792, %v1791
      %v1796 = vpack.c.b16 %v1793, %v1793
      %v1802 = vunpack.c.l.b16 %v1409
      %v1803 = vunpack.c.l.b16 %v1465
      %v1804 = vunpack.c.l.b16 %v1521
      %v1805 = vunpack.c.l.b16 %v1577
      %v1806 = vunpack.c.l.b16 %v1629
      %v1807 = vpack.c.b16 %v1803, %v1802
      %v1808 = vpack.c.b16 %v1805, %v1804
      %v1809 = vpack.c.b16 %v1806, %v1806
      %1810 = vrot.lane.b32.xlu0 %v1807, 16
      %v1811 = vpop.permute.xlu0 %1810
      %1812 = vrot.lane.b32.xlu0 %v1808, 16
      %v1813 = vpop.permute.xlu0 %1812
      %1814 = vrot.lane.b32.xlu0 %v1809, 16
      %v1815 = vpop.permute.xlu0 %1814
      %v1821 = vunpack.c.l.b16 %v1387
      %v1822 = vunpack.c.l.b16 %v1443
      %v1823 = vunpack.c.l.b16 %v1499
      %v1824 = vunpack.c.l.b16 %v1555
      %v1825 = vunpack.c.l.b16 %v1609
      %v1826 = vpack.c.b16 %v1822, %v1821
      %v1827 = vpack.c.b16 %v1824, %v1823
      %v1828 = vpack.c.b16 %v1825, %v1825
      %1829 = vrot.lane.b32.xlu0 %v1826, 32
      %v1830 = vpop.permute.xlu0 %1829
      %1831 = vrot.lane.b32.xlu0 %v1827, 32
      %v1832 = vpop.permute.xlu0 %1831
      %1833 = vrot.lane.b32.xlu0 %v1828, 32
      %v1834 = vpop.permute.xlu0 %1833
      %v1840 = vunpack.c.l.b16 %v1415
      %v1841 = vunpack.c.l.b16 %v1471
      %v1842 = vunpack.c.l.b16 %v1527
      %v1843 = vunpack.c.l.b16 %v1583
      %v1844 = vunpack.c.l.b16 %v1635
      %v1845 = vpack.c.b16 %v1841, %v1840
      %v1846 = vpack.c.b16 %v1843, %v1842
      %v1847 = vpack.c.b16 %v1844, %v1844
      %1848 = vrot.lane.b32.xlu0 %v1845, 48
      %v1849 = vpop.permute.xlu0 %1848
      %1850 = vrot.lane.b32.xlu0 %v1846, 48
      %v1851 = vpop.permute.xlu0 %1850
      %1852 = vrot.lane.b32.xlu0 %v1847, 48
      %v1853 = vpop.permute.xlu0 %1852
      %v1859 = vunpack.c.l.b16 %v1385
      %v1860 = vunpack.c.l.b16 %v1441
      %v1861 = vunpack.c.l.b16 %v1497
      %v1862 = vunpack.c.l.b16 %v1553
      %v1863 = vunpack.c.l.b16 %v1607
      %v1864 = vpack.c.b16 %v1860, %v1859
      %v1865 = vpack.c.b16 %v1862, %v1861
      %v1866 = vpack.c.b16 %v1863, %v1863
      %1867 = vrot.lane.b32.xlu0 %v1864, 64
      %v1868 = vpop.permute.xlu0 %1867
      %1869 = vrot.lane.b32.xlu0 %v1865, 64
      %v1870 = vpop.permute.xlu0 %1869
      %1871 = vrot.lane.b32.xlu0 %v1866, 64
      %v1872 = vpop.permute.xlu0 %1871
      %v1878 = vunpack.c.l.b16 %v1413
      %v1879 = vunpack.c.l.b16 %v1469
      %v1880 = vunpack.c.l.b16 %v1525
      %v1881 = vunpack.c.l.b16 %v1581
      %v1882 = vunpack.c.l.b16 %v1633
      %v1883 = vpack.c.b16 %v1879, %v1878
      %v1884 = vpack.c.b16 %v1881, %v1880
      %v1885 = vpack.c.b16 %v1882, %v1882
      %1886 = vrot.lane.b32.xlu0 %v1883, 80
      %v1887 = vpop.permute.xlu0 %1886
      %1888 = vrot.lane.b32.xlu0 %v1884, 80
      %v1889 = vpop.permute.xlu0 %1888
      %1890 = vrot.lane.b32.xlu0 %v1885, 80
      %v1891 = vpop.permute.xlu0 %1890
      %v1897 = vunpack.c.l.b16 %v1389
      %v1898 = vunpack.c.l.b16 %v1445
      %v1899 = vunpack.c.l.b16 %v1501
      %v1900 = vunpack.c.l.b16 %v1557
      %v1901 = vunpack.c.l.b16 %v1611
      %v1902 = vpack.c.b16 %v1898, %v1897
      %v1903 = vpack.c.b16 %v1900, %v1899
      %v1904 = vpack.c.b16 %v1901, %v1901
      %1905 = vrot.lane.b32.xlu0 %v1902, 96
      %v1906 = vpop.permute.xlu0 %1905
      %1907 = vrot.lane.b32.xlu0 %v1903, 96
      %v1908 = vpop.permute.xlu0 %1907
      %1909 = vrot.lane.b32.xlu0 %v1904, 96
      %v1910 = vpop.permute.xlu0 %1909
      %v1916 = vunpack.c.l.b16 %v1417
      %v1917 = vunpack.c.l.b16 %v1473
      %v1918 = vunpack.c.l.b16 %v1529
      %v1919 = vunpack.c.l.b16 %v1585
      %v1920 = vunpack.c.l.b16 %v1637
      %v1921 = vpack.c.b16 %v1917, %v1916
      %v1922 = vpack.c.b16 %v1919, %v1918
      %v1923 = vpack.c.b16 %v1920, %v1920
      %1924 = vrot.lane.b32.xlu0 %v1921, 112
      %v1925 = vpop.permute.xlu0 %1924
      %1926 = vrot.lane.b32.xlu0 %v1922, 112
      %v1927 = vpop.permute.xlu0 %1926
      %1928 = vrot.lane.b32.xlu0 %v1923, 112
      %v1929 = vpop.permute.xlu0 %1928
      %vm1930 = vcmask 130048
      %v1933 = vsel %vm1930, %v1648, %v1665
      %v1936 = vsel %vm1930, %v1649, %v1667
      %v1939 = vsel %vm1930, %v1650, %v1669
      %vm1940 = vcmask 261120
      %v1942 = vsel %vm1940, %v1933, %v1684
      %v1944 = vsel %vm1940, %v1936, %v1686
      %v1946 = vsel %vm1940, %v1939, %v1688
      %vm1947 = vcmask 392192
      %v1949 = vsel %vm1947, %v1942, %v1703
      %v1951 = vsel %vm1947, %v1944, %v1705
      %v1953 = vsel %vm1947, %v1946, %v1707
      %vm1954 = vcmask 523264
      %v1956 = vsel %vm1954, %v1949, %v1722
      %v1958 = vsel %vm1954, %v1951, %v1724
      %v1960 = vsel %vm1954, %v1953, %v1726
      %vm1961 = vcmask 654336
      %v1963 = vsel %vm1961, %v1956, %v1741
      %v1965 = vsel %vm1961, %v1958, %v1743
      %v1967 = vsel %vm1961, %v1960, %v1745
      %vm1968 = vcmask 785408
      %v1970 = vsel %vm1968, %v1963, %v1760
      %v1972 = vsel %vm1968, %v1965, %v1762
      %v1974 = vsel %vm1968, %v1967, %v1764
      %vm1975 = vcmask 916480
      %v1977 = vsel %vm1975, %v1970, %v1779
      %v1980 = vsel %vm1975, %v1972, %v1781
      %v1983 = vsel %vm1975, %v1974, %v1783
      %v1986 = vsel %vm1930, %v1794, %v1811
      %v1989 = vsel %vm1930, %v1795, %v1813
      %v1992 = vsel %vm1930, %v1796, %v1815
      %v1994 = vsel %vm1940, %v1986, %v1830
      %v1996 = vsel %vm1940, %v1989, %v1832
      %v1998 = vsel %vm1940, %v1992, %v1834
      %v2000 = vsel %vm1947, %v1994, %v1849
      %v2002 = vsel %vm1947, %v1996, %v1851
      %v2004 = vsel %vm1947, %v1998, %v1853
      %v2006 = vsel %vm1954, %v2000, %v1868
      %v2008 = vsel %vm1954, %v2002, %v1870
      %v2010 = vsel %vm1954, %v2004, %v1872
      %v2012 = vsel %vm1961, %v2006, %v1887
      %v2014 = vsel %vm1961, %v2008, %v1889
      %v2016 = vsel %vm1961, %v2010, %v1891
      %v2018 = vsel %vm1968, %v2012, %v1906
      %v2020 = vsel %vm1968, %v2014, %v1908
      %v2022 = vsel %vm1968, %v2016, %v1910
      %v2024 = vsel %vm1975, %v2018, %v1925
      %v2027 = vsel %vm1975, %v2020, %v1927
      %v2030 = vsel %vm1975, %v2022, %v1929
      %v2031 = vld [vmem:[%s2] sm:$0xf]
      %vm2032 = vcmask 293888
      %v2034 = vsel %vm2032, %v2031, 0
      %vm2036 = vcmask 1041408
      %v2037 = vsel %vm2036, %v1983, 0
      %v2039 = vsel %vm2036, %v2030, 0
      %2041 = vmatpush.bf16.msra.mxu0 0
      %2042 = vmatpush.bf16.msra.mxu0 0
      %2043 = vmatpush.bf16.msra.mxu0 0
      %2044 = vmatpush.bf16.msra.mxu0 0
      %2045 = vmatpush.bf16.msra.mxu0 0
      %2046 = vmatpush.bf16.msra.mxu0 %v2037
      %2047 = vmatpush.bf16.msra.mxu0 %v1980
      %2048 = vmatpush.bf16.msra.mxu0 %v1977
      %2049 = vmatmul.bf16.gmra.mxu0 %v2034
      %v2050 = vpop.f32.mrf.mxu0
      %v2051 = vadd.f32 0.0, %v2050
      %v2052 = vpop.f32.mrf.mxu0
      %2053 = vdwg.mxu0
      %2054 = vmatpush.bf16.msra.mxu0 0
      %2055 = vmatpush.bf16.msra.mxu0 0
      %2056 = vmatpush.bf16.msra.mxu0 0
      %2057 = vmatpush.bf16.msra.mxu0 0
      %2058 = vmatpush.bf16.msra.mxu0 0
      %2059 = vmatpush.bf16.msra.mxu0 %v2039
      %2060 = vmatpush.bf16.msra.mxu0 %v2027
      %2061 = vmatpush.bf16.msra.mxu0 %v2024
      %2062 = vmatmul.bf16.gmra.mxu0 %v2034
      %v2063 = vpop.f32.mrf.mxu0
      %v2064 = vadd.f32 0.0, %v2063
      %v2065 = vpop.f32.mrf.mxu0
      %2066 = vdwg.mxu0
      %2067 = vst [vmem:[%s270] sm:$0xff] %v2051
      %2068 = vst [vmem:[%s270 + $0x8] sm:$0xff] %v2064
      %v2069 = vadd.f32 %v2051, %v2064
      %2070 = vadd.xlane.f32.xlu0 %v2069
      %v2071 = vpop.xlane.xlu0 %2070
      %v2072 = vmul.f32 %v2051, %v2051
      %v2073 = vmul.f32 %v2064, %v2064
      %v2074 = vadd.f32 %v2072, %v2073
      %2075 = vadd.xlane.f32.xlu0 %v2074
      %v2076 = vpop.xlane.xlu0 %2075
      %vm2077 = vcmask 7168
      %v2078 = vsel %vm2077, %v2071, %v2076
      %vm2079 = vcmask 15360
      %2080 = vst.msk [vmem:[%s275] sm:$0xff] %vm2079, %v2078
      %s2081 = smul.u32 2, %s23
      %p2082 = scmp.lt.s32.totalorder %s22, 1
      %s2083 = scalar_select %p2082, %s22, 1
      %p2084 = scmp.lt.s32.totalorder %s2081, 1
      %s2085 = scalar_select %p2084, %s2081, 1
      %s2086 = smul.addr %s2083, 2
      %s2087 = sadd.s32 %s2085, %s2086
      %s2088 = smul.addr %s2087, 8
      %s2089 = scalar_lea.vmem %s5, %s2088
      %p2090 = scmp.lt.s32.totalorder %s22, 1
      %s2091 = scalar_select %p2090, %s22, 1
      %s2092 = smul.addr %s2091, 8
      %s2093 = scalar_lea.vmem %s6, %s2092
      // Predicated region
      $region37: #{up_forward.4} parent=35 // pred_check
        %p2094 = pneg %p141
      $region38: #{up_forward.4} parent=35 // pred_check_branch
        %2096 = sbr.rel (%p2094) target = $region40
      $region39: #{up_forward.4} parent=35 // pred_region
        %s2097 = smul.u32 2, %s23
      $region40: #{up_forward.4} parent=35 // pred_fallthru
        _
      // Predicated region
      $region41: #{up_forward.4} parent=35 // pred_check
        %p2098 = pneg %p167
      $region42: #{up_forward.4} parent=35 // pred_check_branch
        %2100 = sbr.rel (%p2098) target = $region44
      $region43: #{up_forward.4} parent=35 // pred_region
        _
      $region44: #{up_forward.4} parent=35 // pred_fallthru
        _
    $region36: #{up_forward.4} parent=5 // pred_fallthru
      _
    %p2101 = scmp.le.s32.totalorder 2, %s13
    // Predicated region
    $region45: #{up_forward.4} parent=5 // pred_check
      %p2102 = pneg %p2101
    $region46: #{up_forward.4} parent=5 // pred_check_branch
      %2104 = sbr.rel (%p2102) target = $region48
    $region47: #{up_forward.4} parent=5 // pred_region
      %s2105 = ssub.s32 %s13, 2
      // Predicated region
      $region49: #{up_forward.4} parent=47 // pred_check
        %p2106 = pneg %p147
      $region50: #{up_forward.4} parent=47 // pred_check_branch
        %2108 = sbr.rel (%p2106) target = $region52
      $region51: #{up_forward.4} parent=47 // pred_region
        %s2109 = smul.u32 2, %s25
        %p2110 = scmp.lt.s32.totalorder %s24, 1
        %s2111 = scalar_select %p2110, %s24, 1
        %p2112 = scmp.lt.s32.totalorder %s2109, 1
        %s2113 = scalar_select %p2112, %s2109, 1
        %s2114 = smul.addr %s2111, 2
        %s2115 = sadd.s32 %s2113, %s2114
        %s2116 = smul.addr %s2115, 8
        %s2117 = scalar_lea.vmem %s5, %s2116
      $region52: #{up_forward.4} parent=47 // pred_fallthru
        _
      // Predicated region
      $region53: #{up_forward.4} parent=47 // pred_check
        %p2118 = pneg %p173
      $region54: #{up_forward.4} parent=47 // pred_check_branch
        %2120 = sbr.rel (%p2118) target = $region56
      $region55: #{up_forward.4} parent=47 // pred_region
        %p2121 = scmp.lt.s32.totalorder %s24, 1
        %s2122 = scalar_select %p2121, %s24, 1
        %s2123 = smul.addr %s2122, 8
        %s2124 = scalar_lea.vmem %s6, %s2123
      $region56: #{up_forward.4} parent=47 // pred_fallthru
        _
    $region48: #{up_forward.4} parent=5 // pred_fallthru
      _
  $region6: #{up_forward.4} parent=0 // loop_footer
    %s17 = sadd.s32 1, %s13
  $region7: #{up_forward.4} parent=0 // loop_footer_branch
    %12 = sbr.rel target = $region3
  $region8: #{up_forward.4} parent=0 // loop_exit
    _
  %2125 = vsyncmov [#allocation4]
  %s2126 = vpop.sfrf %2125
  %p2127 = scmp.eq.s32.totalorder %s2126, 0
  %p2128 = pneg %p2127
  %2130 = shalt.err (%p2128)
  %s2131 = scalar_lea.sflag [#allocation4], 1
  %2132 = vsyncmov %s2131
  %s2133 = vpop.sfrf %2132
  %p2134 = scmp.eq.s32.totalorder %s2133, 0
  %p2135 = pneg %p2134
  %2137 = shalt.err (%p2135)

// kernel: up_forward.3
$region0: #{up_forward.3}
  #allocation0 [shape = 'u32[]', space=smem, size = 0x4, offset = 0x4, fixed_abs, tag = 'smem constant byte address 0x4 - core index']
  #allocation1 [shape = 'u32[72,128]{1,0:T(1,128)}', space=vmem, size = 0x9000, scoped, tag = 'internal scratch']
  #allocation2 [shape = 'bf16[8,18,18]{2,1,0:T(8,128)(2,1)}', space=vmem, size = 0xc000, scoped, tag = 'scratch operand']
  #allocation3 [shape = 'f32[2,8,1,16]{3,2,1,0:T(1,128)}', space=vmem, size = 0x2000, scoped, tag = 'scratch operand']
  #allocation4 [shape = 's32[2]{0}', space=sflag, size = 0x8, scoped, tag = 'scratch operand']
  %s0 = inlined_call_operand.vmem [shape: f32[2,8,16,16], index: 0, kind: input, shape index: {}, may-alias: {0,1}]
  %s1 = inlined_call_operand.vmem [shape: f32[2,8,16,16], index: 1, kind: input, shape index: {}, may-alias: {0,1}]
  %s2 = inlined_call_operand.vmem [shape: bf16[4,72], index: 2, kind: input, shape index: {}]
  %s3 = inlined_call_operand.vmem [shape: f32[8,1], index: 3, kind: input, shape index: {}]
  %s4 = inlined_call_operand.vmem [shape: f32[8,1], index: 4, kind: input, shape index: {}]
  %s5 = inlined_call_operand.vmem [shape: f32[2,4,256], index: 5, kind: output, shape index: {0}]
  %s6 = inlined_call_operand.vmem [shape: f32[2,4,2], index: 6, kind: output, shape index: {1}]
  %7 = xla_tuple %s5, %s6
  %s8 = sld [smem:[#allocation0]]
  $region57: #{up_forward.3} parent=0
    _
  %s10 = ssub.s32 1, %s8
  %s11 = scalar_select 0, %s10, %s8
  loop: start=0, step=1, limit=4
  $region2: #{up_forward.3} parent=0 // loop_pre_header
    _
  $region3: #{up_forward.3} parent=0 // loop_header
    %s13 = sphi 0, %s17
    %p14 = scmp.ge.s32.totalorder %s13, 4
    %s20 = sphi 0, %s32
    %s21 = sphi 0, %s28
    %s22 = sphi 0, %s20
    %s23 = sphi 0, %s21
    %s24 = sphi 0, %s22
    %s25 = sphi 0, %s23
    %s37 = sphi 0, %s39
    %s40 = sphi 0, %s37
    %s41 = sphi 0, %s40
    %s57 = sphi 0, %s41
    %s61 = sphi 0, %s61
    %s63 = sphi 0, %s61
    %s64 = sphi 0, %s63
    %s78 = sphi 0, %s64
    %s82 = sphi 0, %s82
    %s84 = sphi 0, %s82
    %s85 = sphi 0, %s84
    %s99 = sphi 0, %s85
    %s103 = sphi 0, %s103
    %s105 = sphi 0, %s103
    %s106 = sphi 0, %s105
    %s120 = sphi 0, %s106
    %s128 = sphi 0, %s130
    %s131 = sphi 0, %s128
    %s132 = sphi 0, %s131
    %s148 = sphi 0, %s132
    %s154 = sphi 0, %s156
    %s157 = sphi 0, %s154
    %s158 = sphi 0, %s157
    %s174 = sphi 0, %s158
  $region4: #{up_forward.3} parent=0 // loop_header_branch
    %16 = sbr.rel (%p14) target = $region8
  $region5: #{up_forward.3} parent=0 // loop_body
    %s18 = ssub.s32 %s13, 1
    %s19 = ssub.s32 %s13, 2
    %s26 = sadd.s32 1, %s21
    %p27 = scmp.ge.s32.totalorder %s26, 1
    %s28 = scalar_select %p27, 0, %s26
    %s29 = sadd.s32 1, %s20
    %s30 = scalar_select %p27, %s29, %s20
    %p31 = scmp.ge.s32.totalorder %s30, 2
    %s32 = scalar_select %p31, 0, %s30
    %s33 = ssub.s32 %s20, %s32
    %s34 = ssub.s32 %s21, %s28
    %s35 = sor.u32 %s33, %s34
    %p36 = scmp.eq.s32.totalorder %s35, 0
    %s38 = sadd.s32 %s37, 1
    %s39 = scalar_select %p36, %s37, %s38
    %p42 = pneg %p36
    %p43 = scmp.eq.s32.totalorder %s13, 1
    %p44 = por %p42, %p43
    %p45 = scmp.ne.s32.totalorder %s37, %s40
    %p46 = scmp.eq.s32.totalorder %s13, 0
    %p47 = por %p45, %p46
    %p48 = scmp.ne.s32.totalorder %s37, %s40
    %p49 = scmp.eq.s32.totalorder %s18, 1
    %p50 = por %p48, %p49
    %p51 = scmp.ne.s32.totalorder %s40, %s41
    %p52 = scmp.eq.s32.totalorder %s18, 0
    %p53 = por %p51, %p52
    %p54 = scmp.ne.s32.totalorder %s40, %s41
    %p55 = scmp.eq.s32.totalorder %s19, 1
    %p56 = por %p54, %p55
    %p58 = scmp.ne.s32.totalorder %s41, %s57
    %p59 = scmp.eq.s32.totalorder %s19, 0
    %p60 = por %p58, %p59
    %s62 = sadd.s32 %s61, 1
    %p65 = scmp.eq.s32.totalorder %s13, 1
    %p66 = scmp.ne.s32.totalorder %s61, %s63
    %p67 = scmp.eq.s32.totalorder %s13, 0
    %p68 = por %p66, %p67
    %p69 = scmp.ne.s32.totalorder %s61, %s63
    %p70 = scmp.eq.s32.totalorder %s18, 1
    %p71 = por %p69, %p70
    %p72 = scmp.ne.s32.totalorder %s63, %s64
    %p73 = scmp.eq.s32.totalorder %s18, 0
    %p74 = por %p72, %p73
    %p75 = scmp.ne.s32.totalorder %s63, %s64
    %p76 = scmp.eq.s32.totalorder %s19, 1
    %p77 = por %p75, %p76
    %p79 = scmp.ne.s32.totalorder %s64, %s78
    %p80 = scmp.eq.s32.totalorder %s19, 0
    %p81 = por %p79, %p80
    %s83 = sadd.s32 %s82, 1
    %p86 = scmp.eq.s32.totalorder %s13, 1
    %p87 = scmp.ne.s32.totalorder %s82, %s84
    %p88 = scmp.eq.s32.totalorder %s13, 0
    %p89 = por %p87, %p88
    %p90 = scmp.ne.s32.totalorder %s82, %s84
    %p91 = scmp.eq.s32.totalorder %s18, 1
    %p92 = por %p90, %p91
    %p93 = scmp.ne.s32.totalorder %s84, %s85
    %p94 = scmp.eq.s32.totalorder %s18, 0
    %p95 = por %p93, %p94
    %p96 = scmp.ne.s32.totalorder %s84, %s85
    %p97 = scmp.eq.s32.totalorder %s19, 1
    %p98 = por %p96, %p97
    %p100 = scmp.ne.s32.totalorder %s85, %s99
    %p101 = scmp.eq.s32.totalorder %s19, 0
    %p102 = por %p100, %p101
    %s104 = sadd.s32 %s103, 1
    %p107 = scmp.eq.s32.totalorder %s13, 1
    %p108 = scmp.ne.s32.totalorder %s103, %s105
    %p109 = scmp.eq.s32.totalorder %s13, 0
    %p110 = por %p108, %p109
    %p111 = scmp.ne.s32.totalorder %s103, %s105
    %p112 = scmp.eq.s32.totalorder %s18, 1
    %p113 = por %p111, %p112
    %p114 = scmp.ne.s32.totalorder %s105, %s106
    %p115 = scmp.eq.s32.totalorder %s18, 0
    %p116 = por %p114, %p115
    %p117 = scmp.ne.s32.totalorder %s105, %s106
    %p118 = scmp.eq.s32.totalorder %s19, 1
    %p119 = por %p117, %p118
    %p121 = scmp.ne.s32.totalorder %s106, %s120
    %p122 = scmp.eq.s32.totalorder %s19, 0
    %p123 = por %p121, %p122
    %s124 = ssub.s32 %s20, %s32
    %s125 = ssub.s32 %s21, %s28
    %s126 = sor.u32 %s124, %s125
    %p127 = scmp.eq.s32.totalorder %s126, 0
    %s129 = sadd.s32 %s128, 1
    %s130 = scalar_select %p127, %s128, %s129
    %p133 = pneg %p127
    %p134 = scmp.eq.s32.totalorder %s13, 1
    %p135 = por %p133, %p134
    %p136 = scmp.ne.s32.totalorder %s128, %s131
    %p137 = scmp.eq.s32.totalorder %s13, 0
    %p138 = por %p136, %p137
    %p139 = scmp.ne.s32.totalorder %s128, %s131
    %p140 = scmp.eq.s32.totalorder %s18, 1
    %p141 = por %p139, %p140
    %p142 = scmp.ne.s32.totalorder %s131, %s132
    %p143 = scmp.eq.s32.totalorder %s18, 0
    %p144 = por %p142, %p143
    %p145 = scmp.ne.s32.totalorder %s131, %s132
    %p146 = scmp.eq.s32.totalorder %s19, 1
    %p147 = por %p145, %p146
    %p149 = scmp.ne.s32.totalorder %s132, %s148
    %p150 = scmp.eq.s32.totalorder %s19, 0
    %p151 = por %p149, %p150
    %s152 = ssub.s32 %s20, %s32
    %p153 = scmp.eq.s32.totalorder %s152, 0
    %s155 = sadd.s32 %s154, 1
    %s156 = scalar_select %p153, %s154, %s155
    %p159 = pneg %p153
    %p160 = scmp.eq.s32.totalorder %s13, 1
    %p161 = por %p159, %p160
    %p162 = scmp.ne.s32.totalorder %s154, %s157
    %p163 = scmp.eq.s32.totalorder %s13, 0
    %p164 = por %p162, %p163
    %p165 = scmp.ne.s32.totalorder %s154, %s157
    %p166 = scmp.eq.s32.totalorder %s18, 1
    %p167 = por %p165, %p166
    %p168 = scmp.ne.s32.totalorder %s157, %s158
    %p169 = scmp.eq.s32.totalorder %s18, 0
    %p170 = por %p168, %p169
    %p171 = scmp.ne.s32.totalorder %s157, %s158
    %p172 = scmp.eq.s32.totalorder %s19, 1
    %p173 = por %p171, %p172
    %p175 = scmp.ne.s32.totalorder %s158, %s174
    %p176 = scmp.eq.s32.totalorder %s19, 0
    %p177 = por %p175, %p176
    %p178 = scmp.le.s32.totalorder 1, %s13
    %p179 = scmp.lt.s32.totalorder %s13, 3
    %p180 = pnand %p178, %p179
    %p181 = pneg %p180
    // Predicated region
    $region9: #{up_forward.3} parent=5 // pred_check
      _
    $region10: #{up_forward.3} parent=5 // pred_check_branch
      %183 = sbr.rel (%p180) target = $region12
    $region11: #{up_forward.3} parent=5 // pred_region
      %s184 = ssub.s32 %s13, 1
      // Predicated region
      $region13: #{up_forward.3} parent=11 // pred_check
        %p185 = pneg %p74
      $region14: #{up_forward.3} parent=11 // pred_check_branch
        %187 = sbr.rel (%p185) target = $region16
      $region15: #{up_forward.3} parent=11 // pred_region
        _
      $region16: #{up_forward.3} parent=11 // pred_fallthru
        _
      // Predicated region
      $region17: #{up_forward.3} parent=11 // pred_check
        %p188 = pneg %p95
      $region18: #{up_forward.3} parent=11 // pred_check_branch
        %190 = sbr.rel (%p188) target = $region20
      $region19: #{up_forward.3} parent=11 // pred_region
        _
      $region20: #{up_forward.3} parent=11 // pred_fallthru
        _
      // Predicated region
      $region21: #{up_forward.3} parent=11 // pred_check
        %p191 = pneg %p116
      $region22: #{up_forward.3} parent=11 // pred_check_branch
        %193 = sbr.rel (%p191) target = $region24
      $region23: #{up_forward.3} parent=11 // pred_region
        _
      $region24: #{up_forward.3} parent=11 // pred_fallthru
        _
    $region12: #{up_forward.3} parent=5 // pred_fallthru
      _
    %p194 = scmp.lt.s32.totalorder %s13, 2
    // Predicated region
    $region25: #{up_forward.3} parent=5 // pred_check
      %p195 = pneg %p194
    $region26: #{up_forward.3} parent=5 // pred_check_branch
      %197 = sbr.rel (%p195) target = $region28
    $region27: #{up_forward.3} parent=5 // pred_region
      // Predicated region
      $region29: #{up_forward.3} parent=27 // pred_check
        %p198 = pneg %p47
      $region30: #{up_forward.3} parent=27 // pred_check_branch
        %200 = sbr.rel (%p198) target = $region32
      $region31: #{up_forward.3} parent=27 // pred_region
        %s201 = smul.u32 2, %s21
        %p202 = scmp.lt.s32.totalorder %s20, 1
        %s203 = scalar_select %p202, %s20, 1
        %p204 = scmp.lt.s32.totalorder %s201, 1
        %s205 = scalar_select %p204, %s201, 1
        %s206 = smul.addr %s203, 16
        %s207 = sadd.s32 %s205, %s206
        %s208 = smul.addr %s207, 8
        %s209 = scalar_lea.vmem %s0, %s208
        %s210 = smul.u32 2, %s21
      $region32: #{up_forward.3} parent=27 // pred_fallthru
        _
    $region28: #{up_forward.3} parent=5 // pred_fallthru
      _
    %p211 = scmp.le.s32.totalorder 1, %s13
    %p212 = scmp.lt.s32.totalorder %s13, 3
    %p213 = pnand %p211, %p212
    %p214 = pneg %p213
    // Predicated region
    $region33: #{up_forward.3} parent=5 // pred_check
      _
    $region34: #{up_forward.3} parent=5 // pred_check_branch
      %216 = sbr.rel (%p213) target = $region36
    $region35: #{up_forward.3} parent=5 // pred_region
      %s217 = ssub.s32 %s13, 1
      %s218 = smul.u32 2, %s23
      %p219 = scmp.lt.s32.totalorder %s22, 1
      %s220 = scalar_select %p219, %s22, 1
      %p221 = scmp.lt.s32.totalorder %s218, 1
      %s222 = scalar_select %p221, %s218, 1
      %s223 = smul.addr %s220, 16
      %s224 = sadd.s32 %s222, %s223
      %s225 = smul.addr %s224, 8
      %s226 = scalar_lea.vmem %s0, %s225
      %p227 = pneg %p53
      %p228 = pneg %p50
      %p229 = pneg %p74
      %p230 = pneg %p71
      %p231 = pneg %p95
      %p232 = pneg %p92
      %p233 = pneg %p116
      %p234 = pneg %p113
      %p235 = pneg %p144
      %p236 = pneg %p141
      %s237 = smul.u32 2, %s23
      %p238 = scmp.lt.s32.totalorder %s22, 1
      %s239 = scalar_select %p238, %s22, 1
      %p240 = scmp.lt.s32.totalorder %s237, 1
      %s241 = scalar_select %p240, %s237, 1
      %s242 = smul.addr %s239, 2
      %s243 = sadd.s32 %s241, %s242
      %s244 = smul.addr %s243, 4
      %s245 = scalar_lea.vmem %s5, %s244
      %p246 = pneg %p170
      %p247 = pneg %p167
      %p248 = scmp.lt.s32.totalorder %s22, 1
      %s249 = scalar_select %p248, %s22, 1
      %s250 = smul.addr %s249, 4
      %s251 = scalar_lea.vmem %s6, %s250
      %s252 = smul.u32 2, %s23
      %p253 = scmp.lt.s32.totalorder %s22, 1
      %s254 = scalar_select %p253, %s22, 1
      %p255 = scmp.lt.s32.totalorder %s252, 1
      %s256 = scalar_select %p255, %s252, 1
      %s257 = smul.addr %s254, 16
      %s258 = sadd.s32 %s256, %s257
      %s259 = smul.addr %s258, 8
      %s260 = scalar_lea.vmem %s0, %s259
      %s261 = smul.u32 2, %s23
      %s262 = smul.u32 2, %s23
      %p263 = scmp.lt.s32.totalorder %s22, 1
      %s264 = scalar_select %p263, %s22, 1
      %p265 = scmp.lt.s32.totalorder %s262, 1
      %s266 = scalar_select %p265, %s262, 1
      %s267 = smul.addr %s264, 2
      %s268 = sadd.s32 %s266, %s267
      %s269 = smul.addr %s268, 4
      %s270 = scalar_lea.vmem %s5, %s269
      %s271 = smul.u32 2, %s23
      %p272 = scmp.lt.s32.totalorder %s22, 1
      %s273 = scalar_select %p272, %s22, 1
      %s274 = smul.addr %s273, 4
      %s275 = scalar_lea.vmem %s6, %s274
      %vm277 = vcmask 3072
      %278 = vst.msk [vmem:[#allocation2] sm:$0xf] %vm277, 0
      %279 = vst.msk [vmem:[#allocation2 + $0x4] sm:$0xf] %vm277, 0
      %vm280 = vcmask 0
      %281 = vst.msk [vmem:[#allocation2 + $0x8] sm:$0x1] %vm280, 0
      %282 = vst.msk [vmem:[#allocation2 + $0xc] sm:$0xf] %vm277, 0
      %283 = vst.msk [vmem:[#allocation2 + $0x10] sm:$0xf] %vm277, 0
      %284 = vst.msk [vmem:[#allocation2 + $0x14] sm:$0x1] %vm280, 0
      %285 = vst.msk [vmem:[#allocation2 + $0x18] sm:$0xf] %vm277, 0
      %286 = vst.msk [vmem:[#allocation2 + $0x1c] sm:$0xf] %vm277, 0
      %287 = vst.msk [vmem:[#allocation2 + $0x20] sm:$0x1] %vm280, 0
      %288 = vst.msk [vmem:[#allocation2 + $0x24] sm:$0xf] %vm277, 0
      %289 = vst.msk [vmem:[#allocation2 + $0x28] sm:$0xf] %vm277, 0
      %290 = vst.msk [vmem:[#allocation2 + $0x2c] sm:$0x1] %vm280, 0
      %291 = vst.msk [vmem:[#allocation2 + $0x30] sm:$0xf] %vm277, 0
      %292 = vst.msk [vmem:[#allocation2 + $0x34] sm:$0xf] %vm277, 0
      %293 = vst.msk [vmem:[#allocation2 + $0x38] sm:$0x1] %vm280, 0
      %294 = vst.msk [vmem:[#allocation2 + $0x3c] sm:$0xf] %vm277, 0
      %295 = vst.msk [vmem:[#allocation2 + $0x40] sm:$0xf] %vm277, 0
      %296 = vst.msk [vmem:[#allocation2 + $0x44] sm:$0x1] %vm280, 0
      %297 = vst.msk [vmem:[#allocation2 + $0x48] sm:$0xf] %vm277, 0
      %298 = vst.msk [vmem:[#allocation2 + $0x4c] sm:$0xf] %vm277, 0
      %299 = vst.msk [vmem:[#allocation2 + $0x50] sm:$0x1] %vm280, 0
      %300 = vst.msk [vmem:[#allocation2 + $0x54] sm:$0xf] %vm277, 0
      %301 = vst.msk [vmem:[#allocation2 + $0x58] sm:$0xf] %vm277, 0
      %302 = vst.msk [vmem:[#allocation2 + $0x5c] sm:$0x1] %vm280, 0
      %vm303 = vcmask 142472
      %304 = vst.msk [vmem:[#allocation2] sm:$0xf] %vm303, 0
      %305 = vst.msk [vmem:[#allocation2 + $0x4] sm:$0xf] %vm303, 0
      %vm306 = vcmask 139400
      %307 = vst.msk [vmem:[#allocation2 + $0x8] sm:$0x1] %vm306, 0
      %308 = vst.msk [vmem:[#allocation2 + $0xc] sm:$0xf] %vm303, 0
      %309 = vst.msk [vmem:[#allocation2 + $0x10] sm:$0xf] %vm303, 0
      %310 = vst.msk [vmem:[#allocation2 + $0x14] sm:$0x1] %vm306, 0
      %311 = vst.msk [vmem:[#allocation2 + $0x18] sm:$0xf] %vm303, 0
      %312 = vst.msk [vmem:[#allocation2 + $0x1c] sm:$0xf] %vm303, 0
      %313 = vst.msk [vmem:[#allocation2 + $0x20] sm:$0x1] %vm306, 0
      %314 = vst.msk [vmem:[#allocation2 + $0x24] sm:$0xf] %vm303, 0
      %315 = vst.msk [vmem:[#allocation2 + $0x28] sm:$0xf] %vm303, 0
      %316 = vst.msk [vmem:[#allocation2 + $0x2c] sm:$0x1] %vm306, 0
      %317 = vst.msk [vmem:[#allocation2 + $0x30] sm:$0xf] %vm303, 0
      %318 = vst.msk [vmem:[#allocation2 + $0x34] sm:$0xf] %vm303, 0
      %319 = vst.msk [vmem:[#allocation2 + $0x38] sm:$0x1] %vm306, 0
      %320 = vst.msk [vmem:[#allocation2 + $0x3c] sm:$0xf] %vm303, 0
      %321 = vst.msk [vmem:[#allocation2 + $0x40] sm:$0xf] %vm303, 0
      %322 = vst.msk [vmem:[#allocation2 + $0x44] sm:$0x1] %vm306, 0
      %323 = vst.msk [vmem:[#allocation2 + $0x48] sm:$0xf] %vm303, 0
      %324 = vst.msk [vmem:[#allocation2 + $0x4c] sm:$0xf] %vm303, 0
      %325 = vst.msk [vmem:[#allocation2 + $0x50] sm:$0x1] %vm306, 0
      %326 = vst.msk [vmem:[#allocation2 + $0x54] sm:$0xf] %vm303, 0
      %327 = vst.msk [vmem:[#allocation2 + $0x58] sm:$0xf] %vm303, 0
      %328 = vst.msk [vmem:[#allocation2 + $0x5c] sm:$0x1] %vm306, 0
      %v329 = vld [vmem:[%s260] sm:$0xff]
      %v330 = vld [vmem:[%s260 + $0x8] sm:$0xff]
      %v331 = vld [vmem:[%s260 + $0x10] sm:$0xff]
      %v332 = vld [vmem:[%s260 + $0x18] sm:$0xff]
      %v333 = vld [vmem:[%s260 + $0x20] sm:$0xff]
      %v334 = vld [vmem:[%s260 + $0x28] sm:$0xff]
      %v335 = vld [vmem:[%s260 + $0x30] sm:$0xff]
      %v336 = vld [vmem:[%s260 + $0x38] sm:$0xff]
      %v337 = vld [vmem:[%s260 + $0x40] sm:$0xff]
      %v338 = vld [vmem:[%s260 + $0x48] sm:$0xff]
      %v339 = vld [vmem:[%s260 + $0x50] sm:$0xff]
      %v340 = vld [vmem:[%s260 + $0x58] sm:$0xff]
      %v341 = vld [vmem:[%s260 + $0x60] sm:$0xff]
      %v342 = vld [vmem:[%s260 + $0x68] sm:$0xff]
      %v343 = vld [vmem:[%s260 + $0x70] sm:$0xff]
      %v344 = vld [vmem:[%s260 + $0x78] sm:$0xff]
      %v345 = vpack.c.bf16 %v329, %v329
      %v346 = vpack.c.bf16 %v330, %v330
      %v347 = vpack.c.bf16 %v331, %v331
      %v348 = vpack.c.bf16 %v332, %v332
      %v349 = vpack.c.bf16 %v333, %v333
      %v350 = vpack.c.bf16 %v334, %v334
      %v351 = vpack.c.bf16 %v335, %v335
      %v352 = vpack.c.bf16 %v336, %v336
      %v353 = vpack.c.bf16 %v337, %v337
      %v354 = vpack.c.bf16 %v338, %v338
      %v355 = vpack.c.bf16 %v339, %v339
      %v356 = vpack.c.bf16 %v340, %v340
      %v357 = vpack.c.bf16 %v341, %v341
      %v358 = vpack.c.bf16 %v342, %v342
      %v359 = vpack.c.bf16 %v343, %v343
      %v360 = vpack.c.bf16 %v344, %v344
      %vm361 = vsmask.f32 256
      %vm362 = vsmask.f32 4368
      %vm363 = vmor %vm361, %vm362
      %v365 = vshrl.u32 %v345, 16
      %v367 = vrot.slane %v365, 7
      %v368 = vshll.u32 %v345, 16
      %v370 = vor.u32 %v367, %v368
      %v371 = vrot.slane %v367, 4
      %v373 = vshrl.u32 %v346, 16
      %v375 = vrot.slane %v373, 7
      %v376 = vshll.u32 %v346, 16
      %v378 = vor.u32 %v375, %v376
      %v379 = vsel %vm363, %v371, %v378
      %v380 = vrot.slane %v375, 4
      %v382 = vshrl.u32 %v347, 16
      %v384 = vrot.slane %v382, 7
      %v385 = vshll.u32 %v347, 16
      %v387 = vor.u32 %v384, %v385
      %v388 = vrot.slane %v384, 4
      %v390 = vshrl.u32 %v348, 16
      %v392 = vrot.slane %v390, 7
      %v393 = vshll.u32 %v348, 16
      %v395 = vor.u32 %v392, %v393
      %v396 = vsel %vm363, %v388, %v395
      %v397 = vrot.slane %v392, 4
      %v399 = vshrl.u32 %v349, 16
      %v401 = vrot.slane %v399, 7
      %v402 = vshll.u32 %v349, 16
      %v404 = vor.u32 %v401, %v402
      %v405 = vrot.slane %v401, 4
      %v407 = vshrl.u32 %v350, 16
      %v409 = vrot.slane %v407, 7
      %v410 = vshll.u32 %v350, 16
      %v412 = vor.u32 %v409, %v410
      %v413 = vsel %vm363, %v405, %v412
      %v414 = vrot.slane %v409, 4
      %v416 = vshrl.u32 %v351, 16
      %v418 = vrot.slane %v416, 7
      %v419 = vshll.u32 %v351, 16
      %v421 = vor.u32 %v418, %v419
      %v422 = vrot.slane %v418, 4
      %v424 = vshrl.u32 %v352, 16
      %v426 = vrot.slane %v424, 7
      %v427 = vshll.u32 %v352, 16
      %v429 = vor.u32 %v426, %v427
      %v430 = vsel %vm363, %v422, %v429
      %v431 = vrot.slane %v426, 4
      %v433 = vshrl.u32 %v353, 16
      %v435 = vrot.slane %v433, 7
      %v436 = vshll.u32 %v353, 16
      %v438 = vor.u32 %v435, %v436
      %v439 = vrot.slane %v435, 4
      %v441 = vshrl.u32 %v354, 16
      %v443 = vrot.slane %v441, 7
      %v444 = vshll.u32 %v354, 16
      %v446 = vor.u32 %v443, %v444
      %v447 = vsel %vm363, %v439, %v446
      %v448 = vrot.slane %v443, 4
      %v450 = vshrl.u32 %v355, 16
      %v452 = vrot.slane %v450, 7
      %v453 = vshll.u32 %v355, 16
      %v455 = vor.u32 %v452, %v453
      %v456 = vrot.slane %v452, 4
      %v458 = vshrl.u32 %v356, 16
      %v460 = vrot.slane %v458, 7
      %v461 = vshll.u32 %v356, 16
      %v463 = vor.u32 %v460, %v461
      %v464 = vsel %vm363, %v456, %v463
      %v465 = vrot.slane %v460, 4
      %v467 = vshrl.u32 %v357, 16
      %v469 = vrot.slane %v467, 7
      %v470 = vshll.u32 %v357, 16
      %v472 = vor.u32 %v469, %v470
      %v473 = vrot.slane %v469, 4
      %v475 = vshrl.u32 %v358, 16
      %v477 = vrot.slane %v475, 7
      %v478 = vshll.u32 %v358, 16
      %v480 = vor.u32 %v477, %v478
      %v481 = vsel %vm363, %v473, %v480
      %v482 = vrot.slane %v477, 4
      %v484 = vshrl.u32 %v359, 16
      %v486 = vrot.slane %v484, 7
      %v487 = vshll.u32 %v359, 16
      %v489 = vor.u32 %v486, %v487
      %v490 = vrot.slane %v486, 4
      %v492 = vshrl.u32 %v360, 16
      %v494 = vrot.slane %v492, 7
      %v495 = vshll.u32 %v360, 16
      %v497 = vor.u32 %v494, %v495
      %v498 = vsel %vm363, %v490, %v497
      %v499 = vrot.slane %v494, 4
      %500 = vrot.lane.b32.xlu0 %v370, 1
      %v501 = vpop.permute.xlu0 %500
      %502 = vrot.lane.b32.xlu0 %v379, 1
      %v503 = vpop.permute.xlu0 %502
      %504 = vrot.lane.b32.xlu0 %v380, 1
      %v505 = vpop.permute.xlu0 %504
      %506 = vrot.lane.b32.xlu0 %v387, 1
      %v507 = vpop.permute.xlu0 %506
      %508 = vrot.lane.b32.xlu0 %v396, 1
      %v509 = vpop.permute.xlu0 %508
      %510 = vrot.lane.b32.xlu0 %v397, 1
      %v511 = vpop.permute.xlu0 %510
      %512 = vrot.lane.b32.xlu0 %v404, 1
      %v513 = vpop.permute.xlu0 %512
      %514 = vrot.lane.b32.xlu0 %v413, 1
      %v515 = vpop.permute.xlu0 %514
      %516 = vrot.lane.b32.xlu0 %v414, 1
      %v517 = vpop.permute.xlu0 %516
      %518 = vrot.lane.b32.xlu0 %v421, 1
      %v519 = vpop.permute.xlu0 %518
      %520 = vrot.lane.b32.xlu0 %v430, 1
      %v521 = vpop.permute.xlu0 %520
      %522 = vrot.lane.b32.xlu0 %v431, 1
      %v523 = vpop.permute.xlu0 %522
      %524 = vrot.lane.b32.xlu0 %v438, 1
      %v525 = vpop.permute.xlu0 %524
      %526 = vrot.lane.b32.xlu0 %v447, 1
      %v527 = vpop.permute.xlu0 %526
      %528 = vrot.lane.b32.xlu0 %v448, 1
      %v529 = vpop.permute.xlu0 %528
      %530 = vrot.lane.b32.xlu0 %v455, 1
      %v531 = vpop.permute.xlu0 %530
      %532 = vrot.lane.b32.xlu0 %v464, 1
      %v533 = vpop.permute.xlu0 %532
      %534 = vrot.lane.b32.xlu0 %v465, 1
      %v535 = vpop.permute.xlu0 %534
      %536 = vrot.lane.b32.xlu0 %v472, 1
      %v537 = vpop.permute.xlu0 %536
      %538 = vrot.lane.b32.xlu0 %v481, 1
      %v539 = vpop.permute.xlu0 %538
      %540 = vrot.lane.b32.xlu0 %v482, 1
      %v541 = vpop.permute.xlu0 %540
      %542 = vrot.lane.b32.xlu0 %v489, 1
      %v543 = vpop.permute.xlu0 %542
      %544 = vrot.lane.b32.xlu0 %v498, 1
      %v545 = vpop.permute.xlu0 %544
      %546 = vrot.lane.b32.xlu0 %v499, 1
      %v547 = vpop.permute.xlu0 %546
      %vm572 = vcmask 134152
      %vm573 = vsmask.f32 7938
      %vm574 = vmand %vm572, %vm573
      %v575 = vld [vmem:[#allocation2] sm:$0xf]
      %v576 = vsel %vm574, %v501, %v575
      %577 = vst [vmem:[#allocation2] sm:$0xf] %v576
      %vm578 = vcmask 134152
      %579 = vst.msk [vmem:[#allocation2 + $0x4] sm:$0xf] %vm578, %v503
      %vm580 = vcmask 131080
      %vm581 = vmand %vm580, %vm361
      %v582 = vld [vmem:[#allocation2 + $0x8] sm:$0x1]
      %v583 = vsel %vm581, %v505, %v582
      %584 = vst [vmem:[#allocation2 + $0x8] sm:$0x1] %v583
      %v585 = vld [vmem:[#allocation2 + $0xc] sm:$0xf]
      %v586 = vsel %vm574, %v507, %v585
      %587 = vst [vmem:[#allocation2 + $0xc] sm:$0xf] %v586
      %588 = vst.msk [vmem:[#allocation2 + $0x10] sm:$0xf] %vm578, %v509
      %v589 = vld [vmem:[#allocation2 + $0x14] sm:$0x1]
      %v590 = vsel %vm581, %v511, %v589
      %591 = vst [vmem:[#allocation2 + $0x14] sm:$0x1] %v590
      %v592 = vld [vmem:[#allocation2 + $0x18] sm:$0xf]
      %v593 = vsel %vm574, %v513, %v592
      %594 = vst [vmem:[#allocation2 + $0x18] sm:$0xf] %v593
      %595 = vst.msk [vmem:[#allocation2 + $0x1c] sm:$0xf] %vm578, %v515
      %v596 = vld [vmem:[#allocation2 + $0x20] sm:$0x1]
      %v597 = vsel %vm581, %v517, %v596
      %598 = vst [vmem:[#allocation2 + $0x20] sm:$0x1] %v597
      %v599 = vld [vmem:[#allocation2 + $0x24] sm:$0xf]
      %v600 = vsel %vm574, %v519, %v599
      %601 = vst [vmem:[#allocation2 + $0x24] sm:$0xf] %v600
      %602 = vst.msk [vmem:[#allocation2 + $0x28] sm:$0xf] %vm578, %v521
      %v603 = vld [vmem:[#allocation2 + $0x2c] sm:$0x1]
      %v604 = vsel %vm581, %v523, %v603
      %605 = vst [vmem:[#allocation2 + $0x2c] sm:$0x1] %v604
      %v606 = vld [vmem:[#allocation2 + $0x30] sm:$0xf]
      %v607 = vsel %vm574, %v525, %v606
      %608 = vst [vmem:[#allocation2 + $0x30] sm:$0xf] %v607
      %609 = vst.msk [vmem:[#allocation2 + $0x34] sm:$0xf] %vm578, %v527
      %v610 = vld [vmem:[#allocation2 + $0x38] sm:$0x1]
      %v611 = vsel %vm581, %v529, %v610
      %612 = vst [vmem:[#allocation2 + $0x38] sm:$0x1] %v611
      %v613 = vld [vmem:[#allocation2 + $0x3c] sm:$0xf]
      %v614 = vsel %vm574, %v531, %v613
      %615 = vst [vmem:[#allocation2 + $0x3c] sm:$0xf] %v614
      %616 = vst.msk [vmem:[#allocation2 + $0x40] sm:$0xf] %vm578, %v533
      %v617 = vld [vmem:[#allocation2 + $0x44] sm:$0x1]
      %v618 = vsel %vm581, %v535, %v617
      %619 = vst [vmem:[#allocation2 + $0x44] sm:$0x1] %v618
      %v620 = vld [vmem:[#allocation2 + $0x48] sm:$0xf]
      %v621 = vsel %vm574, %v537, %v620
      %622 = vst [vmem:[#allocation2 + $0x48] sm:$0xf] %v621
      %623 = vst.msk [vmem:[#allocation2 + $0x4c] sm:$0xf] %vm578, %v539
      %v624 = vld [vmem:[#allocation2 + $0x50] sm:$0x1]
      %v625 = vsel %vm581, %v541, %v624
      %626 = vst [vmem:[#allocation2 + $0x50] sm:$0x1] %v625
      %v627 = vld [vmem:[#allocation2 + $0x54] sm:$0xf]
      %v628 = vsel %vm574, %v543, %v627
      %629 = vst [vmem:[#allocation2 + $0x54] sm:$0xf] %v628
      %630 = vst.msk [vmem:[#allocation2 + $0x58] sm:$0xf] %vm578, %v545
      %v631 = vld [vmem:[#allocation2 + $0x5c] sm:$0x1]
      %v632 = vsel %vm581, %v547, %v631
      %633 = vst [vmem:[#allocation2 + $0x5c] sm:$0x1] %v632
      %vm634 = vcmask 139264
      %vm635 = vmand %vm634, %vm361
      %v636 = vld [vmem:[#allocation2] sm:$0x1]
      %v637 = vsel %vm635, 0, %v636
      %638 = vst [vmem:[#allocation2] sm:$0x1] %v637
      %v639 = vld [vmem:[#allocation2 + $0xc] sm:$0x1]
      %v640 = vsel %vm635, 0, %v639
      %641 = vst [vmem:[#allocation2 + $0xc] sm:$0x1] %v640
      %v642 = vld [vmem:[#allocation2 + $0x18] sm:$0x1]
      %v643 = vsel %vm635, 0, %v642
      %644 = vst [vmem:[#allocation2 + $0x18] sm:$0x1] %v643
      %v645 = vld [vmem:[#allocation2 + $0x24] sm:$0x1]
      %v646 = vsel %vm635, 0, %v645
      %647 = vst [vmem:[#allocation2 + $0x24] sm:$0x1] %v646
      %v648 = vld [vmem:[#allocation2 + $0x30] sm:$0x1]
      %v649 = vsel %vm635, 0, %v648
      %650 = vst [vmem:[#allocation2 + $0x30] sm:$0x1] %v649
      %v651 = vld [vmem:[#allocation2 + $0x3c] sm:$0x1]
      %v652 = vsel %vm635, 0, %v651
      %653 = vst [vmem:[#allocation2 + $0x3c] sm:$0x1] %v652
      %v654 = vld [vmem:[#allocation2 + $0x48] sm:$0x1]
      %v655 = vsel %vm635, 0, %v654
      %656 = vst [vmem:[#allocation2 + $0x48] sm:$0x1] %v655
      %v657 = vld [vmem:[#allocation2 + $0x54] sm:$0x1]
      %v658 = vsel %vm635, 0, %v657
      %659 = vst [vmem:[#allocation2 + $0x54] sm:$0x1] %v658
      %vm660 = vmand %vm634, %vm573
      %v661 = vld [vmem:[#allocation2 + $0x8] sm:$0x1]
      %v662 = vsel %vm660, 0, %v661
      %663 = vst [vmem:[#allocation2 + $0x8] sm:$0x1] %v662
      %v664 = vld [vmem:[#allocation2 + $0x14] sm:$0x1]
      %v665 = vsel %vm660, 0, %v664
      %666 = vst [vmem:[#allocation2 + $0x14] sm:$0x1] %v665
      %v667 = vld [vmem:[#allocation2 + $0x20] sm:$0x1]
      %v668 = vsel %vm660, 0, %v667
      %669 = vst [vmem:[#allocation2 + $0x20] sm:$0x1] %v668
      %v670 = vld [vmem:[#allocation2 + $0x2c] sm:$0x1]
      %v671 = vsel %vm660, 0, %v670
      %672 = vst [vmem:[#allocation2 + $0x2c] sm:$0x1] %v671
      %v673 = vld [vmem:[#allocation2 + $0x38] sm:$0x1]
      %v674 = vsel %vm660, 0, %v673
      %675 = vst [vmem:[#allocation2 + $0x38] sm:$0x1] %v674
      %v676 = vld [vmem:[#allocation2 + $0x44] sm:$0x1]
      %v677 = vsel %vm660, 0, %v676
      %678 = vst [vmem:[#allocation2 + $0x44] sm:$0x1] %v677
      %v679 = vld [vmem:[#allocation2 + $0x50] sm:$0x1]
      %v680 = vsel %vm660, 0, %v679
      %681 = vst [vmem:[#allocation2 + $0x50] sm:$0x1] %v680
      %v682 = vld [vmem:[#allocation2 + $0x5c] sm:$0x1]
      %v683 = vsel %vm660, 0, %v682
      %684 = vst [vmem:[#allocation2 + $0x5c] sm:$0x1] %v683
      %v685 = vld [vmem:[#allocation2] sm:$0xf]
      %v686 = vld [vmem:[#allocation2 + $0x4] sm:$0xf]
      %v687 = vld [vmem:[#allocation2 + $0xc] sm:$0xf]
      %v688 = vld [vmem:[#allocation2 + $0x10] sm:$0xf]
      %v689 = vld [vmem:[#allocation2 + $0x18] sm:$0xf]
      %v690 = vld [vmem:[#allocation2 + $0x1c] sm:$0xf]
      %v691 = vld [vmem:[#allocation2 + $0x24] sm:$0xf]
      %v692 = vld [vmem:[#allocation2 + $0x28] sm:$0xf]
      %v693 = vld [vmem:[#allocation2 + $0x30] sm:$0xf]
      %v694 = vld [vmem:[#allocation2 + $0x34] sm:$0xf]
      %v695 = vld [vmem:[#allocation2 + $0x3c] sm:$0xf]
      %v696 = vld [vmem:[#allocation2 + $0x40] sm:$0xf]
      %v697 = vld [vmem:[#allocation2 + $0x48] sm:$0xf]
      %v698 = vld [vmem:[#allocation2 + $0x4c] sm:$0xf]
      %v699 = vld [vmem:[#allocation2 + $0x54] sm:$0xf]
      %v700 = vld [vmem:[#allocation2 + $0x58] sm:$0xf]
      %v701 = vld [vmem:[#allocation2 + $0x8] sm:$0x1]
      %v702 = vld [vmem:[#allocation2 + $0x14] sm:$0x1]
      %v703 = vld [vmem:[#allocation2 + $0x20] sm:$0x1]
      %v704 = vld [vmem:[#allocation2 + $0x2c] sm:$0x1]
      %v705 = vld [vmem:[#allocation2 + $0x38] sm:$0x1]
      %v706 = vld [vmem:[#allocation2 + $0x44] sm:$0x1]
      %v707 = vld [vmem:[#allocation2 + $0x50] sm:$0x1]
      %v708 = vld [vmem:[#allocation2 + $0x5c] sm:$0x1]
      %v709 = vld [vmem:[#allocation2] sm:$0xe]
      %v710 = vld [vmem:[#allocation2 + $0xc] sm:$0xe]
      %v711 = vld [vmem:[#allocation2 + $0x18] sm:$0xe]
      %v712 = vld [vmem:[#allocation2 + $0x24] sm:$0xe]
      %v713 = vld [vmem:[#allocation2 + $0x30] sm:$0xe]
      %v714 = vld [vmem:[#allocation2 + $0x3c] sm:$0xe]
      %v715 = vld [vmem:[#allocation2 + $0x48] sm:$0xe]
      %v716 = vld [vmem:[#allocation2 + $0x54] sm:$0xe]
      %733 = vrot.lane.b32.xlu0 %v685, 127
      %v734 = vpop.permute.xlu0 %733
      %735 = vrot.lane.b32.xlu0 %v686, 127
      %v736 = vpop.permute.xlu0 %735
      %737 = vrot.lane.b32.xlu0 %v687, 127
      %v738 = vpop.permute.xlu0 %737
      %739 = vrot.lane.b32.xlu0 %v688, 127
      %v740 = vpop.permute.xlu0 %739
      %741 = vrot.lane.b32.xlu0 %v689, 127
      %v742 = vpop.permute.xlu0 %741
      %743 = vrot.lane.b32.xlu0 %v690, 127
      %v744 = vpop.permute.xlu0 %743
      %745 = vrot.lane.b32.xlu0 %v691, 127
      %v746 = vpop.permute.xlu0 %745
      %747 = vrot.lane.b32.xlu0 %v692, 127
      %v748 = vpop.permute.xlu0 %747
      %749 = vrot.lane.b32.xlu0 %v693, 127
      %v750 = vpop.permute.xlu0 %749
      %751 = vrot.lane.b32.xlu0 %v694, 127
      %v752 = vpop.permute.xlu0 %751
      %753 = vrot.lane.b32.xlu0 %v695, 127
      %v754 = vpop.permute.xlu0 %753
      %755 = vrot.lane.b32.xlu0 %v696, 127
      %v756 = vpop.permute.xlu0 %755
      %757 = vrot.lane.b32.xlu0 %v697, 127
      %v758 = vpop.permute.xlu0 %757
      %759 = vrot.lane.b32.xlu0 %v698, 127
      %v760 = vpop.permute.xlu0 %759
      %761 = vrot.lane.b32.xlu0 %v699, 127
      %v762 = vpop.permute.xlu0 %761
      %763 = vrot.lane.b32.xlu0 %v700, 127
      %v764 = vpop.permute.xlu0 %763
      %781 = vrot.lane.b32.xlu0 %v685, 126
      %v782 = vpop.permute.xlu0 %781
      %783 = vrot.lane.b32.xlu0 %v686, 126
      %v784 = vpop.permute.xlu0 %783
      %785 = vrot.lane.b32.xlu0 %v687, 126
      %v786 = vpop.permute.xlu0 %785
      %787 = vrot.lane.b32.xlu0 %v688, 126
      %v788 = vpop.permute.xlu0 %787
      %789 = vrot.lane.b32.xlu0 %v689, 126
      %v790 = vpop.permute.xlu0 %789
      %791 = vrot.lane.b32.xlu0 %v690, 126
      %v792 = vpop.permute.xlu0 %791
      %793 = vrot.lane.b32.xlu0 %v691, 126
      %v794 = vpop.permute.xlu0 %793
      %795 = vrot.lane.b32.xlu0 %v692, 126
      %v796 = vpop.permute.xlu0 %795
      %797 = vrot.lane.b32.xlu0 %v693, 126
      %v798 = vpop.permute.xlu0 %797
      %799 = vrot.lane.b32.xlu0 %v694, 126
      %v800 = vpop.permute.xlu0 %799
      %801 = vrot.lane.b32.xlu0 %v695, 126
      %v802 = vpop.permute.xlu0 %801
      %803 = vrot.lane.b32.xlu0 %v696, 126
      %v804 = vpop.permute.xlu0 %803
      %805 = vrot.lane.b32.xlu0 %v697, 126
      %v806 = vpop.permute.xlu0 %805
      %807 = vrot.lane.b32.xlu0 %v698, 126
      %v808 = vpop.permute.xlu0 %807
      %809 = vrot.lane.b32.xlu0 %v699, 126
      %v810 = vpop.permute.xlu0 %809
      %811 = vrot.lane.b32.xlu0 %v700, 126
      %v812 = vpop.permute.xlu0 %811
      %vm829 = vsmask.f32 3328
      %vm830 = vsmask.f32 7440
      %vm831 = vmor %vm829, %vm830
      %v833 = vshrl.u32 %v685, 16
      %v835 = vrot.slane %v833, 4
      %v836 = vshll.u32 %v685, 16
      %v838 = vrot.slane %v836, 5
      %v839 = vor.u32 %v835, %v838
      %v840 = vrot.slane %v839, 4
      %v842 = vshll.u32 %v686, 16
      %v844 = vrot.slane %v842, 5
      %v845 = vsel %vm831, %v840, %v844
      %v846 = vshrl.u32 %v686, 16
      %v848 = vrot.slane %v846, 4
      %v849 = vor.u32 %v848, %v844
      %v850 = vrot.slane %v849, 4
      %v852 = vshll.u32 %v701, 16
      %v854 = vrot.slane %v852, 5
      %v855 = vsel %vm831, %v850, %v854
      %v857 = vshrl.u32 %v687, 16
      %v859 = vrot.slane %v857, 4
      %v860 = vshll.u32 %v687, 16
      %v862 = vrot.slane %v860, 5
      %v863 = vor.u32 %v859, %v862
      %v864 = vrot.slane %v863, 4
      %v866 = vshll.u32 %v688, 16
      %v868 = vrot.slane %v866, 5
      %v869 = vsel %vm831, %v864, %v868
      %v870 = vshrl.u32 %v688, 16
      %v872 = vrot.slane %v870, 4
      %v873 = vor.u32 %v872, %v868
      %v874 = vrot.slane %v873, 4
      %v876 = vshll.u32 %v702, 16
      %v878 = vrot.slane %v876, 5
      %v879 = vsel %vm831, %v874, %v878
      %v881 = vshrl.u32 %v689, 16
      %v883 = vrot.slane %v881, 4
      %v884 = vshll.u32 %v689, 16
      %v886 = vrot.slane %v884, 5
      %v887 = vor.u32 %v883, %v886
      %v888 = vrot.slane %v887, 4
      %v890 = vshll.u32 %v690, 16
      %v892 = vrot.slane %v890, 5
      %v893 = vsel %vm831, %v888, %v892
      %v894 = vshrl.u32 %v690, 16
      %v896 = vrot.slane %v894, 4
      %v897 = vor.u32 %v896, %v892
      %v898 = vrot.slane %v897, 4
      %v900 = vshll.u32 %v703, 16
      %v902 = vrot.slane %v900, 5
      %v903 = vsel %vm831, %v898, %v902
      %v905 = vshrl.u32 %v691, 16
      %v907 = vrot.slane %v905, 4
      %v908 = vshll.u32 %v691, 16
      %v910 = vrot.slane %v908, 5
      %v911 = vor.u32 %v907, %v910
      %v912 = vrot.slane %v911, 4
      %v914 = vshll.u32 %v692, 16
      %v916 = vrot.slane %v914, 5
      %v917 = vsel %vm831, %v912, %v916
      %v918 = vshrl.u32 %v692, 16
      %v920 = vrot.slane %v918, 4
      %v921 = vor.u32 %v920, %v916
      %v922 = vrot.slane %v921, 4
      %v924 = vshll.u32 %v704, 16
      %v926 = vrot.slane %v924, 5
      %v927 = vsel %vm831, %v922, %v926
      %v929 = vshrl.u32 %v693, 16
      %v931 = vrot.slane %v929, 4
      %v932 = vshll.u32 %v693, 16
      %v934 = vrot.slane %v932, 5
      %v935 = vor.u32 %v931, %v934
      %v936 = vrot.slane %v935, 4
      %v938 = vshll.u32 %v694, 16
      %v940 = vrot.slane %v938, 5
      %v941 = vsel %vm831, %v936, %v940
      %v942 = vshrl.u32 %v694, 16
      %v944 = vrot.slane %v942, 4
      %v945 = vor.u32 %v944, %v940
      %v946 = vrot.slane %v945, 4
      %v948 = vshll.u32 %v705, 16
      %v950 = vrot.slane %v948, 5
      %v951 = vsel %vm831, %v946, %v950
      %v953 = vshrl.u32 %v695, 16
      %v955 = vrot.slane %v953, 4
      %v956 = vshll.u32 %v695, 16
      %v958 = vrot.slane %v956, 5
      %v959 = vor.u32 %v955, %v958
      %v960 = vrot.slane %v959, 4
      %v962 = vshll.u32 %v696, 16
      %v964 = vrot.slane %v962, 5
      %v965 = vsel %vm831, %v960, %v964
      %v966 = vshrl.u32 %v696, 16
      %v968 = vrot.slane %v966, 4
      %v969 = vor.u32 %v968, %v964
      %v970 = vrot.slane %v969, 4
      %v972 = vshll.u32 %v706, 16
      %v974 = vrot.slane %v972, 5
      %v975 = vsel %vm831, %v970, %v974
      %v977 = vshrl.u32 %v697, 16
      %v979 = vrot.slane %v977, 4
      %v980 = vshll.u32 %v697, 16
      %v982 = vrot.slane %v980, 5
      %v983 = vor.u32 %v979, %v982
      %v984 = vrot.slane %v983, 4
      %v986 = vshll.u32 %v698, 16
      %v988 = vrot.slane %v986, 5
      %v989 = vsel %vm831, %v984, %v988
      %v990 = vshrl.u32 %v698, 16
      %v992 = vrot.slane %v990, 4
      %v993 = vor.u32 %v992, %v988
      %v994 = vrot.slane %v993, 4
      %v996 = vshll.u32 %v707, 16
      %v998 = vrot.slane %v996, 5
      %v999 = vsel %vm831, %v994, %v998
      %v1001 = vshrl.u32 %v699, 16
      %v1003 = vrot.slane %v1001, 4
      %v1004 = vshll.u32 %v699, 16
      %v1006 = vrot.slane %v1004, 5
      %v1007 = vor.u32 %v1003, %v1006
      %v1008 = vrot.slane %v1007, 4
      %v1010 = vshll.u32 %v700, 16
      %v1012 = vrot.slane %v1010, 5
      %v1013 = vsel %vm831, %v1008, %v1012
      %v1014 = vshrl.u32 %v700, 16
      %v1016 = vrot.slane %v1014, 4
      %v1017 = vor.u32 %v1016, %v1012
      %v1018 = vrot.slane %v1017, 4
      %v1020 = vshll.u32 %v708, 16
      %v1022 = vrot.slane %v1020, 5
      %v1023 = vsel %vm831, %v1018, %v1022
      %1040 = vrot.lane.b32.xlu0 %v845, 127
      %v1041 = vpop.permute.xlu0 %1040
      %1042 = vrot.lane.b32.xlu0 %v855, 127
      %v1043 = vpop.permute.xlu0 %1042
      %1044 = vrot.lane.b32.xlu0 %v869, 127
      %v1045 = vpop.permute.xlu0 %1044
      %1046 = vrot.lane.b32.xlu0 %v879, 127
      %v1047 = vpop.permute.xlu0 %1046
      %1048 = vrot.lane.b32.xlu0 %v893, 127
      %v1049 = vpop.permute.xlu0 %1048
      %1050 = vrot.lane.b32.xlu0 %v903, 127
      %v1051 = vpop.permute.xlu0 %1050
      %1052 = vrot.lane.b32.xlu0 %v917, 127
      %v1053 = vpop.permute.xlu0 %1052
      %1054 = vrot.lane.b32.xlu0 %v927, 127
      %v1055 = vpop.permute.xlu0 %1054
      %1056 = vrot.lane.b32.xlu0 %v941, 127
      %v1057 = vpop.permute.xlu0 %1056
      %1058 = vrot.lane.b32.xlu0 %v951, 127
      %v1059 = vpop.permute.xlu0 %1058
      %1060 = vrot.lane.b32.xlu0 %v965, 127
      %v1061 = vpop.permute.xlu0 %1060
      %1062 = vrot.lane.b32.xlu0 %v975, 127
      %v1063 = vpop.permute.xlu0 %1062
      %1064 = vrot.lane.b32.xlu0 %v989, 127
      %v1065 = vpop.permute.xlu0 %1064
      %1066 = vrot.lane.b32.xlu0 %v999, 127
      %v1067 = vpop.permute.xlu0 %1066
      %1068 = vrot.lane.b32.xlu0 %v1013, 127
      %v1069 = vpop.permute.xlu0 %1068
      %1070 = vrot.lane.b32.xlu0 %v1023, 127
      %v1071 = vpop.permute.xlu0 %1070
      %1088 = vrot.lane.b32.xlu0 %v845, 126
      %v1089 = vpop.permute.xlu0 %1088
      %1090 = vrot.lane.b32.xlu0 %v855, 126
      %v1091 = vpop.permute.xlu0 %1090
      %1092 = vrot.lane.b32.xlu0 %v869, 126
      %v1093 = vpop.permute.xlu0 %1092
      %1094 = vrot.lane.b32.xlu0 %v879, 126
      %v1095 = vpop.permute.xlu0 %1094
      %1096 = vrot.lane.b32.xlu0 %v893, 126
      %v1097 = vpop.permute.xlu0 %1096
      %1098 = vrot.lane.b32.xlu0 %v903, 126
      %v1099 = vpop.permute.xlu0 %1098
      %1100 = vrot.lane.b32.xlu0 %v917, 126
      %v1101 = vpop.permute.xlu0 %1100
      %1102 = vrot.lane.b32.xlu0 %v927, 126
      %v1103 = vpop.permute.xlu0 %1102
      %1104 = vrot.lane.b32.xlu0 %v941, 126
      %v1105 = vpop.permute.xlu0 %1104
      %1106 = vrot.lane.b32.xlu0 %v951, 126
      %v1107 = vpop.permute.xlu0 %1106
      %1108 = vrot.lane.b32.xlu0 %v965, 126
      %v1109 = vpop.permute.xlu0 %1108
      %1110 = vrot.lane.b32.xlu0 %v975, 126
      %v1111 = vpop.permute.xlu0 %1110
      %1112 = vrot.lane.b32.xlu0 %v989, 126
      %v1113 = vpop.permute.xlu0 %1112
      %1114 = vrot.lane.b32.xlu0 %v999, 126
      %v1115 = vpop.permute.xlu0 %1114
      %1116 = vrot.lane.b32.xlu0 %v1013, 126
      %v1117 = vpop.permute.xlu0 %1116
      %1118 = vrot.lane.b32.xlu0 %v1023, 126
      %v1119 = vpop.permute.xlu0 %1118
      %vm1152 = vcmask 1042432
      %vm1153 = vcmask 1046532
      %vm1154 = vmor %vm1152, %vm1153
      %v1155 = vrot.slane %v709, 5
      %v1156 = vrot.slane %v1155, 4
      %v1157 = vrot.slane %v686, 5
      %v1158 = vsel %vm1154, %v1156, %v1157
      %v1159 = vrot.slane %v1157, 4
      %v1160 = vrot.slane %v701, 5
      %v1161 = vsel %vm1154, %v1159, %v1160
      %v1162 = vrot.slane %v710, 5
      %v1163 = vrot.slane %v1162, 4
      %v1164 = vrot.slane %v688, 5
      %v1165 = vsel %vm1154, %v1163, %v1164
      %v1166 = vrot.slane %v1164, 4
      %v1167 = vrot.slane %v702, 5
      %v1168 = vsel %vm1154, %v1166, %v1167
      %v1169 = vrot.slane %v711, 5
      %v1170 = vrot.slane %v1169, 4
      %v1171 = vrot.slane %v690, 5
      %v1172 = vsel %vm1154, %v1170, %v1171
      %v1173 = vrot.slane %v1171, 4
      %v1174 = vrot.slane %v703, 5
      %v1175 = vsel %vm1154, %v1173, %v1174
      %v1176 = vrot.slane %v712, 5
      %v1177 = vrot.slane %v1176, 4
      %v1178 = vrot.slane %v692, 5
      %v1179 = vsel %vm1154, %v1177, %v1178
      %v1180 = vrot.slane %v1178, 4
      %v1181 = vrot.slane %v704, 5
      %v1182 = vsel %vm1154, %v1180, %v1181
      %v1183 = vrot.slane %v713, 5
      %v1184 = vrot.slane %v1183, 4
      %v1185 = vrot.slane %v694, 5
      %v1186 = vsel %vm1154, %v1184, %v1185
      %v1187 = vrot.slane %v1185, 4
      %v1188 = vrot.slane %v705, 5
      %v1189 = vsel %vm1154, %v1187, %v1188
      %v1190 = vrot.slane %v714, 5
      %v1191 = vrot.slane %v1190, 4
      %v1192 = vrot.slane %v696, 5
      %v1193 = vsel %vm1154, %v1191, %v1192
      %v1194 = vrot.slane %v1192, 4
      %v1195 = vrot.slane %v706, 5
      %v1196 = vsel %vm1154, %v1194, %v1195
      %v1197 = vrot.slane %v715, 5
      %v1198 = vrot.slane %v1197, 4
      %v1199 = vrot.slane %v698, 5
      %v1200 = vsel %vm1154, %v1198, %v1199
      %v1201 = vrot.slane %v1199, 4
      %v1202 = vrot.slane %v707, 5
      %v1203 = vsel %vm1154, %v1201, %v1202
      %v1204 = vrot.slane %v716, 5
      %v1205 = vrot.slane %v1204, 4
      %v1206 = vrot.slane %v700, 5
      %v1207 = vsel %vm1154, %v1205, %v1206
      %v1208 = vrot.slane %v1206, 4
      %v1209 = vrot.slane %v708, 5
      %v1210 = vsel %vm1154, %v1208, %v1209
      %1227 = vrot.lane.b32.xlu0 %v1158, 127
      %v1228 = vpop.permute.xlu0 %1227
      %1229 = vrot.lane.b32.xlu0 %v1161, 127
      %v1230 = vpop.permute.xlu0 %1229
      %1231 = vrot.lane.b32.xlu0 %v1165, 127
      %v1232 = vpop.permute.xlu0 %1231
      %1233 = vrot.lane.b32.xlu0 %v1168, 127
      %v1234 = vpop.permute.xlu0 %1233
      %1235 = vrot.lane.b32.xlu0 %v1172, 127
      %v1236 = vpop.permute.xlu0 %1235
      %1237 = vrot.lane.b32.xlu0 %v1175, 127
      %v1238 = vpop.permute.xlu0 %1237
      %1239 = vrot.lane.b32.xlu0 %v1179, 127
      %v1240 = vpop.permute.xlu0 %1239
      %1241 = vrot.lane.b32.xlu0 %v1182, 127
      %v1242 = vpop.permute.xlu0 %1241
      %1243 = vrot.lane.b32.xlu0 %v1186, 127
      %v1244 = vpop.permute.xlu0 %1243
      %1245 = vrot.lane.b32.xlu0 %v1189, 127
      %v1246 = vpop.permute.xlu0 %1245
      %1247 = vrot.lane.b32.xlu0 %v1193, 127
      %v1248 = vpop.permute.xlu0 %1247
      %1249 = vrot.lane.b32.xlu0 %v1196, 127
      %v1250 = vpop.permute.xlu0 %1249
      %1251 = vrot.lane.b32.xlu0 %v1200, 127
      %v1252 = vpop.permute.xlu0 %1251
      %1253 = vrot.lane.b32.xlu0 %v1203, 127
      %v1254 = vpop.permute.xlu0 %1253
      %1255 = vrot.lane.b32.xlu0 %v1207, 127
      %v1256 = vpop.permute.xlu0 %1255
      %1257 = vrot.lane.b32.xlu0 %v1210, 127
      %v1258 = vpop.permute.xlu0 %1257
      %1275 = vrot.lane.b32.xlu0 %v1158, 126
      %v1276 = vpop.permute.xlu0 %1275
      %1277 = vrot.lane.b32.xlu0 %v1161, 126
      %v1278 = vpop.permute.xlu0 %1277
      %1279 = vrot.lane.b32.xlu0 %v1165, 126
      %v1280 = vpop.permute.xlu0 %1279
      %1281 = vrot.lane.b32.xlu0 %v1168, 126
      %v1282 = vpop.permute.xlu0 %1281
      %1283 = vrot.lane.b32.xlu0 %v1172, 126
      %v1284 = vpop.permute.xlu0 %1283
      %1285 = vrot.lane.b32.xlu0 %v1175, 126
      %v1286 = vpop.permute.xlu0 %1285
      %1287 = vrot.lane.b32.xlu0 %v1179, 126
      %v1288 = vpop.permute.xlu0 %1287
      %1289 = vrot.lane.b32.xlu0 %v1182, 126
      %v1290 = vpop.permute.xlu0 %1289
      %1291 = vrot.lane.b32.xlu0 %v1186, 126
      %v1292 = vpop.permute.xlu0 %1291
      %1293 = vrot.lane.b32.xlu0 %v1189, 126
      %v1294 = vpop.permute.xlu0 %1293
      %1295 = vrot.lane.b32.xlu0 %v1193, 126
      %v1296 = vpop.permute.xlu0 %1295
      %1297 = vrot.lane.b32.xlu0 %v1196, 126
      %v1298 = vpop.permute.xlu0 %1297
      %1299 = vrot.lane.b32.xlu0 %v1200, 126
      %v1300 = vpop.permute.xlu0 %1299
      %1301 = vrot.lane.b32.xlu0 %v1203, 126
      %v1302 = vpop.permute.xlu0 %1301
      %1303 = vrot.lane.b32.xlu0 %v1207, 126
      %v1304 = vpop.permute.xlu0 %1303
      %1305 = vrot.lane.b32.xlu0 %v1210, 126
      %v1306 = vpop.permute.xlu0 %1305
      %v1323 = vrot.slane %v693, 4
      %vm1324 = vcmask 1047556
      %v1325 = vsel %vm1324, %v1323, %v685
      %v1327 = vunpack.c.l.s4 1983009808
      %v1328 = vunpack.c.0.s8 %v1327
      %v1329 = vperm.slane %v1325, %v1328
      %v1330 = vrot.slane %v697, 4
      %v1331 = vsel %vm1324, %v1330, %v689
      %v1333 = vunpack.c.l.s4 1983009808
      %v1334 = vunpack.c.0.s8 %v1333
      %v1335 = vperm.slane %v1331, %v1334
      %v1336 = vrot.slane %v1335, 4
      %v1337 = vsel %vm1324, %v1336, %v1329
      %v1338 = vrot.slane %v1329, 4
      %v1339 = vsel %vm1324, %v1335, %v1338
      %v1341 = vunpack.c.l.s4 1934713408
      %v1342 = vunpack.c.0.s8 %v1341
      %v1343 = vperm.slane %v1337, %v1342
      %v1345 = vunpack.c.l.s4 1934713408
      %v1346 = vunpack.c.0.s8 %v1345
      %v1347 = vperm.slane %v1339, %v1346
      %v1348 = vrot.slane %v1343, 4
      %v1349 = vsel %vm1324, 0, %v1348
      %v1350 = vrot.slane %v1347, 4
      %v1351 = vsel %vm1324, 0, %v1350
      %v1352 = vrot.slane %v695, 4
      %v1353 = vsel %vm1324, %v1352, %v687
      %v1355 = vunpack.c.l.s4 1983009808
      %v1356 = vunpack.c.0.s8 %v1355
      %v1357 = vperm.slane %v1353, %v1356
      %v1358 = vrot.slane %v699, 4
      %v1359 = vsel %vm1324, %v1358, %v691
      %v1361 = vunpack.c.l.s4 1983009808
      %v1362 = vunpack.c.0.s8 %v1361
      %v1363 = vperm.slane %v1359, %v1362
      %v1364 = vrot.slane %v1363, 4
      %v1365 = vsel %vm1324, %v1364, %v1357
      %v1366 = vrot.slane %v1357, 4
      %v1367 = vsel %vm1324, %v1363, %v1366
      %v1369 = vunpack.c.l.s4 1934713408
      %v1370 = vunpack.c.0.s8 %v1369
      %v1371 = vperm.slane %v1365, %v1370
      %v1373 = vunpack.c.l.s4 1934713408
      %v1374 = vunpack.c.0.s8 %v1373
      %v1375 = vperm.slane %v1367, %v1374
      %v1376 = vrot.slane %v1371, 4
      %v1377 = vsel %vm1324, 0, %v1376
      %v1378 = vrot.slane %v1375, 4
      %v1379 = vsel %vm1324, 0, %v1378
      %v1380 = vrot.slane %v750, 4
      %v1381 = vsel %vm1324, %v1380, %v734
      %v1383 = vunpack.c.l.s4 1983009808
      %v1384 = vunpack.c.0.s8 %v1383
      %v1385 = vperm.slane %v1381, %v1384
      %v1386 = vrot.slane %v758, 4
      %v1387 = vsel %vm1324, %v1386, %v742
      %v1389 = vunpack.c.l.s4 1983009808
      %v1390 = vunpack.c.0.s8 %v1389
      %v1391 = vperm.slane %v1387, %v1390
      %v1392 = vrot.slane %v1391, 4
      %v1393 = vsel %vm1324, %v1392, %v1385
      %v1394 = vrot.slane %v1385, 4
      %v1395 = vsel %vm1324, %v1391, %v1394
      %v1397 = vunpack.c.l.s4 1934713408
      %v1398 = vunpack.c.0.s8 %v1397
      %v1399 = vperm.slane %v1393, %v1398
      %v1401 = vunpack.c.l.s4 1934713408
      %v1402 = vunpack.c.0.s8 %v1401
      %v1403 = vperm.slane %v1395, %v1402
      %v1404 = vrot.slane %v1399, 4
      %v1405 = vsel %vm1324, 0, %v1404
      %v1406 = vrot.slane %v1403, 4
      %v1407 = vsel %vm1324, 0, %v1406
      %v1408 = vrot.slane %v754, 4
      %v1409 = vsel %vm1324, %v1408, %v738
      %v1411 = vunpack.c.l.s4 1983009808
      %v1412 = vunpack.c.0.s8 %v1411
      %v1413 = vperm.slane %v1409, %v1412
      %v1414 = vrot.slane %v762, 4
      %v1415 = vsel %vm1324, %v1414, %v746
      %v1417 = vunpack.c.l.s4 1983009808
      %v1418 = vunpack.c.0.s8 %v1417
      %v1419 = vperm.slane %v1415, %v1418
      %v1420 = vrot.slane %v1419, 4
      %v1421 = vsel %vm1324, %v1420, %v1413
      %v1422 = vrot.slane %v1413, 4
      %v1423 = vsel %vm1324, %v1419, %v1422
      %v1425 = vunpack.c.l.s4 1934713408
      %v1426 = vunpack.c.0.s8 %v1425
      %v1427 = vperm.slane %v1421, %v1426
      %v1429 = vunpack.c.l.s4 1934713408
      %v1430 = vunpack.c.0.s8 %v1429
      %v1431 = vperm.slane %v1423, %v1430
      %v1432 = vrot.slane %v1427, 4
      %v1433 = vsel %vm1324, 0, %v1432
      %v1434 = vrot.slane %v1431, 4
      %v1435 = vsel %vm1324, 0, %v1434
      %v1436 = vrot.slane %v798, 4
      %v1437 = vsel %vm1324, %v1436, %v782
      %v1439 = vunpack.c.l.s4 1983009808
      %v1440 = vunpack.c.0.s8 %v1439
      %v1441 = vperm.slane %v1437, %v1440
      %v1442 = vrot.slane %v806, 4
      %v1443 = vsel %vm1324, %v1442, %v790
      %v1445 = vunpack.c.l.s4 1983009808
      %v1446 = vunpack.c.0.s8 %v1445
      %v1447 = vperm.slane %v1443, %v1446
      %v1448 = vrot.slane %v1447, 4
      %v1449 = vsel %vm1324, %v1448, %v1441
      %v1450 = vrot.slane %v1441, 4
      %v1451 = vsel %vm1324, %v1447, %v1450
      %v1453 = vunpack.c.l.s4 1934713408
      %v1454 = vunpack.c.0.s8 %v1453
      %v1455 = vperm.slane %v1449, %v1454
      %v1457 = vunpack.c.l.s4 1934713408
      %v1458 = vunpack.c.0.s8 %v1457
      %v1459 = vperm.slane %v1451, %v1458
      %v1460 = vrot.slane %v1455, 4
      %v1461 = vsel %vm1324, 0, %v1460
      %v1462 = vrot.slane %v1459, 4
      %v1463 = vsel %vm1324, 0, %v1462
      %v1464 = vrot.slane %v802, 4
      %v1465 = vsel %vm1324, %v1464, %v786
      %v1467 = vunpack.c.l.s4 1983009808
      %v1468 = vunpack.c.0.s8 %v1467
      %v1469 = vperm.slane %v1465, %v1468
      %v1470 = vrot.slane %v810, 4
      %v1471 = vsel %vm1324, %v1470, %v794
      %v1473 = vunpack.c.l.s4 1983009808
      %v1474 = vunpack.c.0.s8 %v1473
      %v1475 = vperm.slane %v1471, %v1474
      %v1476 = vrot.slane %v1475, 4
      %v1477 = vsel %vm1324, %v1476, %v1469
      %v1478 = vrot.slane %v1469, 4
      %v1479 = vsel %vm1324, %v1475, %v1478
      %v1481 = vunpack.c.l.s4 1934713408
      %v1482 = vunpack.c.0.s8 %v1481
      %v1483 = vperm.slane %v1477, %v1482
      %v1485 = vunpack.c.l.s4 1934713408
      %v1486 = vunpack.c.0.s8 %v1485
      %v1487 = vperm.slane %v1479, %v1486
      %v1488 = vrot.slane %v1483, 4
      %v1489 = vsel %vm1324, 0, %v1488
      %v1490 = vrot.slane %v1487, 4
      %v1491 = vsel %vm1324, 0, %v1490
      %v1492 = vrot.slane %v941, 4
      %v1493 = vsel %vm1324, %v1492, %v845
      %v1495 = vunpack.c.l.s4 1983009808
      %v1496 = vunpack.c.0.s8 %v1495
      %v1497 = vperm.slane %v1493, %v1496
      %v1498 = vrot.slane %v989, 4
      %v1499 = vsel %vm1324, %v1498, %v893
      %v1501 = vunpack.c.l.s4 1983009808
      %v1502 = vunpack.c.0.s8 %v1501
      %v1503 = vperm.slane %v1499, %v1502
      %v1504 = vrot.slane %v1503, 4
      %v1505 = vsel %vm1324, %v1504, %v1497
      %v1506 = vrot.slane %v1497, 4
      %v1507 = vsel %vm1324, %v1503, %v1506
      %v1509 = vunpack.c.l.s4 1934713408
      %v1510 = vunpack.c.0.s8 %v1509
      %v1511 = vperm.slane %v1505, %v1510
      %v1513 = vunpack.c.l.s4 1934713408
      %v1514 = vunpack.c.0.s8 %v1513
      %v1515 = vperm.slane %v1507, %v1514
      %v1516 = vrot.slane %v1511, 4
      %v1517 = vsel %vm1324, 0, %v1516
      %v1518 = vrot.slane %v1515, 4
      %v1519 = vsel %vm1324, 0, %v1518
      %v1520 = vrot.slane %v965, 4
      %v1521 = vsel %vm1324, %v1520, %v869
      %v1523 = vunpack.c.l.s4 1983009808
      %v1524 = vunpack.c.0.s8 %v1523
      %v1525 = vperm.slane %v1521, %v1524
      %v1526 = vrot.slane %v1013, 4
      %v1527 = vsel %vm1324, %v1526, %v917
      %v1529 = vunpack.c.l.s4 1983009808
      %v1530 = vunpack.c.0.s8 %v1529
      %v1531 = vperm.slane %v1527, %v1530
      %v1532 = vrot.slane %v1531, 4
      %v1533 = vsel %vm1324, %v1532, %v1525
      %v1534 = vrot.slane %v1525, 4
      %v1535 = vsel %vm1324, %v1531, %v1534
      %v1537 = vunpack.c.l.s4 1934713408
      %v1538 = vunpack.c.0.s8 %v1537
      %v1539 = vperm.slane %v1533, %v1538
      %v1541 = vunpack.c.l.s4 1934713408
      %v1542 = vunpack.c.0.s8 %v1541
      %v1543 = vperm.slane %v1535, %v1542
      %v1544 = vrot.slane %v1539, 4
      %v1545 = vsel %vm1324, 0, %v1544
      %v1546 = vrot.slane %v1543, 4
      %v1547 = vsel %vm1324, 0, %v1546
      %v1548 = vrot.slane %v1057, 4
      %v1549 = vsel %vm1324, %v1548, %v1041
      %v1551 = vunpack.c.l.s4 1983009808
      %v1552 = vunpack.c.0.s8 %v1551
      %v1553 = vperm.slane %v1549, %v1552
      %v1554 = vrot.slane %v1065, 4
      %v1555 = vsel %vm1324, %v1554, %v1049
      %v1557 = vunpack.c.l.s4 1983009808
      %v1558 = vunpack.c.0.s8 %v1557
      %v1559 = vperm.slane %v1555, %v1558
      %v1560 = vrot.slane %v1559, 4
      %v1561 = vsel %vm1324, %v1560, %v1553
      %v1562 = vrot.slane %v1553, 4
      %v1563 = vsel %vm1324, %v1559, %v1562
      %v1565 = vunpack.c.l.s4 1934713408
      %v1566 = vunpack.c.0.s8 %v1565
      %v1567 = vperm.slane %v1561, %v1566
      %v1569 = vunpack.c.l.s4 1934713408
      %v1570 = vunpack.c.0.s8 %v1569
      %v1571 = vperm.slane %v1563, %v1570
      %v1572 = vrot.slane %v1567, 4
      %v1573 = vsel %vm1324, 0, %v1572
      %v1574 = vrot.slane %v1571, 4
      %v1575 = vsel %vm1324, 0, %v1574
      %v1576 = vrot.slane %v1061, 4
      %v1577 = vsel %vm1324, %v1576, %v1045
      %v1579 = vunpack.c.l.s4 1983009808
      %v1580 = vunpack.c.0.s8 %v1579
      %v1581 = vperm.slane %v1577, %v1580
      %v1582 = vrot.slane %v1069, 4
      %v1583 = vsel %vm1324, %v1582, %v1053
      %v1585 = vunpack.c.l.s4 1983009808
      %v1586 = vunpack.c.0.s8 %v1585
      %v1587 = vperm.slane %v1583, %v1586
      %v1588 = vrot.slane %v1587, 4
      %v1589 = vsel %vm1324, %v1588, %v1581
      %v1590 = vrot.slane %v1581, 4
      %v1591 = vsel %vm1324, %v1587, %v1590
      %v1593 = vunpack.c.l.s4 1934713408
      %v1594 = vunpack.c.0.s8 %v1593
      %v1595 = vperm.slane %v1589, %v1594
      %v1597 = vunpack.c.l.s4 1934713408
      %v1598 = vunpack.c.0.s8 %v1597
      %v1599 = vperm.slane %v1591, %v1598
      %v1600 = vrot.slane %v1595, 4
      %v1601 = vsel %vm1324, 0, %v1600
      %v1602 = vrot.slane %v1599, 4
      %v1603 = vsel %vm1324, 0, %v1602
      %v1604 = vrot.slane %v1105, 4
      %v1605 = vsel %vm1324, %v1604, %v1089
      %v1607 = vunpack.c.l.s4 1983009808
      %v1608 = vunpack.c.0.s8 %v1607
      %v1609 = vperm.slane %v1605, %v1608
      %v1610 = vrot.slane %v1113, 4
      %v1611 = vsel %vm1324, %v1610, %v1097
      %v1613 = vunpack.c.l.s4 1983009808
      %v1614 = vunpack.c.0.s8 %v1613
      %v1615 = vperm.slane %v1611, %v1614
      %v1616 = vrot.slane %v1615, 4
      %v1617 = vsel %vm1324, %v1616, %v1609
      %v1618 = vrot.slane %v1609, 4
      %v1619 = vsel %vm1324, %v1615, %v1618
      %v1621 = vunpack.c.l.s4 1934713408
      %v1622 = vunpack.c.0.s8 %v1621
      %v1623 = vperm.slane %v1617, %v1622
      %v1625 = vunpack.c.l.s4 1934713408
      %v1626 = vunpack.c.0.s8 %v1625
      %v1627 = vperm.slane %v1619, %v1626
      %v1628 = vrot.slane %v1623, 4
      %v1629 = vsel %vm1324, 0, %v1628
      %v1630 = vrot.slane %v1627, 4
      %v1631 = vsel %vm1324, 0, %v1630
      %v1632 = vrot.slane %v1109, 4
      %v1633 = vsel %vm1324, %v1632, %v1093
      %v1635 = vunpack.c.l.s4 1983009808
      %v1636 = vunpack.c.0.s8 %v1635
      %v1637 = vperm.slane %v1633, %v1636
      %v1638 = vrot.slane %v1117, 4
      %v1639 = vsel %vm1324, %v1638, %v1101
      %v1641 = vunpack.c.l.s4 1983009808
      %v1642 = vunpack.c.0.s8 %v1641
      %v1643 = vperm.slane %v1639, %v1642
      %v1644 = vrot.slane %v1643, 4
      %v1645 = vsel %vm1324, %v1644, %v1637
      %v1646 = vrot.slane %v1637, 4
      %v1647 = vsel %vm1324, %v1643, %v1646
      %v1649 = vunpack.c.l.s4 1934713408
      %v1650 = vunpack.c.0.s8 %v1649
      %v1651 = vperm.slane %v1645, %v1650
      %v1653 = vunpack.c.l.s4 1934713408
      %v1654 = vunpack.c.0.s8 %v1653
      %v1655 = vperm.slane %v1647, %v1654
      %v1656 = vrot.slane %v1651, 4
      %v1657 = vsel %vm1324, 0, %v1656
      %v1658 = vrot.slane %v1655, 4
      %v1659 = vsel %vm1324, 0, %v1658
      %v1660 = vrot.slane %v1186, 4
      %v1661 = vsel %vm1324, %v1660, %v1158
      %v1663 = vunpack.c.l.s4 1983009808
      %v1664 = vunpack.c.0.s8 %v1663
      %v1665 = vperm.slane %v1661, %v1664
      %v1666 = vrot.slane %v1200, 4
      %v1667 = vsel %vm1324, %v1666, %v1172
      %v1669 = vunpack.c.l.s4 1983009808
      %v1670 = vunpack.c.0.s8 %v1669
      %v1671 = vperm.slane %v1667, %v1670
      %v1672 = vrot.slane %v1671, 4
      %v1673 = vsel %vm1324, %v1672, %v1665
      %v1674 = vrot.slane %v1665, 4
      %v1675 = vsel %vm1324, %v1671, %v1674
      %v1677 = vunpack.c.l.s4 1934713408
      %v1678 = vunpack.c.0.s8 %v1677
      %v1679 = vperm.slane %v1673, %v1678
      %v1681 = vunpack.c.l.s4 1934713408
      %v1682 = vunpack.c.0.s8 %v1681
      %v1683 = vperm.slane %v1675, %v1682
      %v1684 = vrot.slane %v1679, 4
      %v1685 = vsel %vm1324, 0, %v1684
      %v1686 = vrot.slane %v1683, 4
      %v1687 = vsel %vm1324, 0, %v1686
      %v1688 = vrot.slane %v1193, 4
      %v1689 = vsel %vm1324, %v1688, %v1165
      %v1691 = vunpack.c.l.s4 1983009808
      %v1692 = vunpack.c.0.s8 %v1691
      %v1693 = vperm.slane %v1689, %v1692
      %v1694 = vrot.slane %v1207, 4
      %v1695 = vsel %vm1324, %v1694, %v1179
      %v1697 = vunpack.c.l.s4 1983009808
      %v1698 = vunpack.c.0.s8 %v1697
      %v1699 = vperm.slane %v1695, %v1698
      %v1700 = vrot.slane %v1699, 4
      %v1701 = vsel %vm1324, %v1700, %v1693
      %v1702 = vrot.slane %v1693, 4
      %v1703 = vsel %vm1324, %v1699, %v1702
      %v1705 = vunpack.c.l.s4 1934713408
      %v1706 = vunpack.c.0.s8 %v1705
      %v1707 = vperm.slane %v1701, %v1706
      %v1709 = vunpack.c.l.s4 1934713408
      %v1710 = vunpack.c.0.s8 %v1709
      %v1711 = vperm.slane %v1703, %v1710
      %v1712 = vrot.slane %v1707, 4
      %v1713 = vsel %vm1324, 0, %v1712
      %v1714 = vrot.slane %v1711, 4
      %v1715 = vsel %vm1324, 0, %v1714
      %v1716 = vrot.slane %v1244, 4
      %v1717 = vsel %vm1324, %v1716, %v1228
      %v1719 = vunpack.c.l.s4 1983009808
      %v1720 = vunpack.c.0.s8 %v1719
      %v1721 = vperm.slane %v1717, %v1720
      %v1722 = vrot.slane %v1252, 4
      %v1723 = vsel %vm1324, %v1722, %v1236
      %v1725 = vunpack.c.l.s4 1983009808
      %v1726 = vunpack.c.0.s8 %v1725
      %v1727 = vperm.slane %v1723, %v1726
      %v1728 = vrot.slane %v1727, 4
      %v1729 = vsel %vm1324, %v1728, %v1721
      %v1730 = vrot.slane %v1721, 4
      %v1731 = vsel %vm1324, %v1727, %v1730
      %v1733 = vunpack.c.l.s4 1934713408
      %v1734 = vunpack.c.0.s8 %v1733
      %v1735 = vperm.slane %v1729, %v1734
      %v1737 = vunpack.c.l.s4 1934713408
      %v1738 = vunpack.c.0.s8 %v1737
      %v1739 = vperm.slane %v1731, %v1738
      %v1740 = vrot.slane %v1735, 4
      %v1741 = vsel %vm1324, 0, %v1740
      %v1742 = vrot.slane %v1739, 4
      %v1743 = vsel %vm1324, 0, %v1742
      %v1744 = vrot.slane %v1248, 4
      %v1745 = vsel %vm1324, %v1744, %v1232
      %v1747 = vunpack.c.l.s4 1983009808
      %v1748 = vunpack.c.0.s8 %v1747
      %v1749 = vperm.slane %v1745, %v1748
      %v1750 = vrot.slane %v1256, 4
      %v1751 = vsel %vm1324, %v1750, %v1240
      %v1753 = vunpack.c.l.s4 1983009808
      %v1754 = vunpack.c.0.s8 %v1753
      %v1755 = vperm.slane %v1751, %v1754
      %v1756 = vrot.slane %v1755, 4
      %v1757 = vsel %vm1324, %v1756, %v1749
      %v1758 = vrot.slane %v1749, 4
      %v1759 = vsel %vm1324, %v1755, %v1758
      %v1761 = vunpack.c.l.s4 1934713408
      %v1762 = vunpack.c.0.s8 %v1761
      %v1763 = vperm.slane %v1757, %v1762
      %v1765 = vunpack.c.l.s4 1934713408
      %v1766 = vunpack.c.0.s8 %v1765
      %v1767 = vperm.slane %v1759, %v1766
      %v1768 = vrot.slane %v1763, 4
      %v1769 = vsel %vm1324, 0, %v1768
      %v1770 = vrot.slane %v1767, 4
      %v1771 = vsel %vm1324, 0, %v1770
      %v1772 = vrot.slane %v1292, 4
      %v1773 = vsel %vm1324, %v1772, %v1276
      %v1775 = vunpack.c.l.s4 1983009808
      %v1776 = vunpack.c.0.s8 %v1775
      %v1777 = vperm.slane %v1773, %v1776
      %v1778 = vrot.slane %v1300, 4
      %v1779 = vsel %vm1324, %v1778, %v1284
      %v1781 = vunpack.c.l.s4 1983009808
      %v1782 = vunpack.c.0.s8 %v1781
      %v1783 = vperm.slane %v1779, %v1782
      %v1784 = vrot.slane %v1783, 4
      %v1785 = vsel %vm1324, %v1784, %v1777
      %v1786 = vrot.slane %v1777, 4
      %v1787 = vsel %vm1324, %v1783, %v1786
      %v1789 = vunpack.c.l.s4 1934713408
      %v1790 = vunpack.c.0.s8 %v1789
      %v1791 = vperm.slane %v1785, %v1790
      %v1793 = vunpack.c.l.s4 1934713408
      %v1794 = vunpack.c.0.s8 %v1793
      %v1795 = vperm.slane %v1787, %v1794
      %v1796 = vrot.slane %v1791, 4
      %v1797 = vsel %vm1324, 0, %v1796
      %v1798 = vrot.slane %v1795, 4
      %v1799 = vsel %vm1324, 0, %v1798
      %v1800 = vrot.slane %v1296, 4
      %v1801 = vsel %vm1324, %v1800, %v1280
      %v1803 = vunpack.c.l.s4 1983009808
      %v1804 = vunpack.c.0.s8 %v1803
      %v1805 = vperm.slane %v1801, %v1804
      %v1806 = vrot.slane %v1304, 4
      %v1807 = vsel %vm1324, %v1806, %v1288
      %v1809 = vunpack.c.l.s4 1983009808
      %v1810 = vunpack.c.0.s8 %v1809
      %v1811 = vperm.slane %v1807, %v1810
      %v1812 = vrot.slane %v1811, 4
      %v1813 = vsel %vm1324, %v1812, %v1805
      %v1814 = vrot.slane %v1805, 4
      %v1815 = vsel %vm1324, %v1811, %v1814
      %v1817 = vunpack.c.l.s4 1934713408
      %v1818 = vunpack.c.0.s8 %v1817
      %v1819 = vperm.slane %v1813, %v1818
      %v1821 = vunpack.c.l.s4 1934713408
      %v1822 = vunpack.c.0.s8 %v1821
      %v1823 = vperm.slane %v1815, %v1822
      %v1824 = vrot.slane %v1819, 4
      %v1825 = vsel %vm1324, 0, %v1824
      %v1826 = vrot.slane %v1823, 4
      %v1827 = vsel %vm1324, 0, %v1826
      %v1828 = vrot.slane %v694, 4
      %v1829 = vsel %vm1324, %v1828, %v686
      %v1831 = vunpack.c.l.s4 1983009808
      %v1832 = vunpack.c.0.s8 %v1831
      %v1833 = vperm.slane %v1829, %v1832
      %v1834 = vrot.slane %v698, 4
      %v1835 = vsel %vm1324, %v1834, %v690
      %v1837 = vunpack.c.l.s4 1983009808
      %v1838 = vunpack.c.0.s8 %v1837
      %v1839 = vperm.slane %v1835, %v1838
      %v1840 = vrot.slane %v1839, 4
      %v1841 = vsel %vm1324, %v1840, %v1833
      %v1842 = vrot.slane %v1833, 4
      %v1843 = vsel %vm1324, %v1839, %v1842
      %v1845 = vunpack.c.l.s4 1934713408
      %v1846 = vunpack.c.0.s8 %v1845
      %v1847 = vperm.slane %v1841, %v1846
      %v1849 = vunpack.c.l.s4 1934713408
      %v1850 = vunpack.c.0.s8 %v1849
      %v1851 = vperm.slane %v1843, %v1850
      %v1852 = vrot.slane %v1847, 4
      %v1853 = vsel %vm1324, 0, %v1852
      %v1854 = vrot.slane %v1851, 4
      %v1855 = vsel %vm1324, 0, %v1854
      %v1856 = vrot.slane %v696, 4
      %v1857 = vsel %vm1324, %v1856, %v688
      %v1859 = vunpack.c.l.s4 1983009808
      %v1860 = vunpack.c.0.s8 %v1859
      %v1861 = vperm.slane %v1857, %v1860
      %v1862 = vrot.slane %v700, 4
      %v1863 = vsel %vm1324, %v1862, %v692
      %v1865 = vunpack.c.l.s4 1983009808
      %v1866 = vunpack.c.0.s8 %v1865
      %v1867 = vperm.slane %v1863, %v1866
      %v1868 = vrot.slane %v1867, 4
      %v1869 = vsel %vm1324, %v1868, %v1861
      %v1870 = vrot.slane %v1861, 4
      %v1871 = vsel %vm1324, %v1867, %v1870
      %v1873 = vunpack.c.l.s4 1934713408
      %v1874 = vunpack.c.0.s8 %v1873
      %v1875 = vperm.slane %v1869, %v1874
      %v1877 = vunpack.c.l.s4 1934713408
      %v1878 = vunpack.c.0.s8 %v1877
      %v1879 = vperm.slane %v1871, %v1878
      %v1880 = vrot.slane %v1875, 4
      %v1881 = vsel %vm1324, 0, %v1880
      %v1882 = vrot.slane %v1879, 4
      %v1883 = vsel %vm1324, 0, %v1882
      %v1884 = vrot.slane %v752, 4
      %v1885 = vsel %vm1324, %v1884, %v736
      %v1887 = vunpack.c.l.s4 1983009808
      %v1888 = vunpack.c.0.s8 %v1887
      %v1889 = vperm.slane %v1885, %v1888
      %v1890 = vrot.slane %v760, 4
      %v1891 = vsel %vm1324, %v1890, %v744
      %v1893 = vunpack.c.l.s4 1983009808
      %v1894 = vunpack.c.0.s8 %v1893
      %v1895 = vperm.slane %v1891, %v1894
      %v1896 = vrot.slane %v1895, 4
      %v1897 = vsel %vm1324, %v1896, %v1889
      %v1898 = vrot.slane %v1889, 4
      %v1899 = vsel %vm1324, %v1895, %v1898
      %v1901 = vunpack.c.l.s4 1934713408
      %v1902 = vunpack.c.0.s8 %v1901
      %v1903 = vperm.slane %v1897, %v1902
      %v1905 = vunpack.c.l.s4 1934713408
      %v1906 = vunpack.c.0.s8 %v1905
      %v1907 = vperm.slane %v1899, %v1906
      %v1908 = vrot.slane %v1903, 4
      %v1909 = vsel %vm1324, 0, %v1908
      %v1910 = vrot.slane %v1907, 4
      %v1911 = vsel %vm1324, 0, %v1910
      %v1912 = vrot.slane %v756, 4
      %v1913 = vsel %vm1324, %v1912, %v740
      %v1915 = vunpack.c.l.s4 1983009808
      %v1916 = vunpack.c.0.s8 %v1915
      %v1917 = vperm.slane %v1913, %v1916
      %v1918 = vrot.slane %v764, 4
      %v1919 = vsel %vm1324, %v1918, %v748
      %v1921 = vunpack.c.l.s4 1983009808
      %v1922 = vunpack.c.0.s8 %v1921
      %v1923 = vperm.slane %v1919, %v1922
      %v1924 = vrot.slane %v1923, 4
      %v1925 = vsel %vm1324, %v1924, %v1917
      %v1926 = vrot.slane %v1917, 4
      %v1927 = vsel %vm1324, %v1923, %v1926
      %v1929 = vunpack.c.l.s4 1934713408
      %v1930 = vunpack.c.0.s8 %v1929
      %v1931 = vperm.slane %v1925, %v1930
      %v1933 = vunpack.c.l.s4 1934713408
      %v1934 = vunpack.c.0.s8 %v1933
      %v1935 = vperm.slane %v1927, %v1934
      %v1936 = vrot.slane %v1931, 4
      %v1937 = vsel %vm1324, 0, %v1936
      %v1938 = vrot.slane %v1935, 4
      %v1939 = vsel %vm1324, 0, %v1938
      %v1940 = vrot.slane %v800, 4
      %v1941 = vsel %vm1324, %v1940, %v784
      %v1943 = vunpack.c.l.s4 1983009808
      %v1944 = vunpack.c.0.s8 %v1943
      %v1945 = vperm.slane %v1941, %v1944
      %v1946 = vrot.slane %v808, 4
      %v1947 = vsel %vm1324, %v1946, %v792
      %v1949 = vunpack.c.l.s4 1983009808
      %v1950 = vunpack.c.0.s8 %v1949
      %v1951 = vperm.slane %v1947, %v1950
      %v1952 = vrot.slane %v1951, 4
      %v1953 = vsel %vm1324, %v1952, %v1945
      %v1954 = vrot.slane %v1945, 4
      %v1955 = vsel %vm1324, %v1951, %v1954
      %v1957 = vunpack.c.l.s4 1934713408
      %v1958 = vunpack.c.0.s8 %v1957
      %v1959 = vperm.slane %v1953, %v1958
      %v1961 = vunpack.c.l.s4 1934713408
      %v1962 = vunpack.c.0.s8 %v1961
      %v1963 = vperm.slane %v1955, %v1962
      %v1964 = vrot.slane %v1959, 4
      %v1965 = vsel %vm1324, 0, %v1964
      %v1966 = vrot.slane %v1963, 4
      %v1967 = vsel %vm1324, 0, %v1966
      %v1968 = vrot.slane %v804, 4
      %v1969 = vsel %vm1324, %v1968, %v788
      %v1971 = vunpack.c.l.s4 1983009808
      %v1972 = vunpack.c.0.s8 %v1971
      %v1973 = vperm.slane %v1969, %v1972
      %v1974 = vrot.slane %v812, 4
      %v1975 = vsel %vm1324, %v1974, %v796
      %v1977 = vunpack.c.l.s4 1983009808
      %v1978 = vunpack.c.0.s8 %v1977
      %v1979 = vperm.slane %v1975, %v1978
      %v1980 = vrot.slane %v1979, 4
      %v1981 = vsel %vm1324, %v1980, %v1973
      %v1982 = vrot.slane %v1973, 4
      %v1983 = vsel %vm1324, %v1979, %v1982
      %v1985 = vunpack.c.l.s4 1934713408
      %v1986 = vunpack.c.0.s8 %v1985
      %v1987 = vperm.slane %v1981, %v1986
      %v1989 = vunpack.c.l.s4 1934713408
      %v1990 = vunpack.c.0.s8 %v1989
      %v1991 = vperm.slane %v1983, %v1990
      %v1992 = vrot.slane %v1987, 4
      %v1993 = vsel %vm1324, 0, %v1992
      %v1994 = vrot.slane %v1991, 4
      %v1995 = vsel %vm1324, 0, %v1994
      %v1996 = vrot.slane %v951, 4
      %v1997 = vsel %vm1324, %v1996, %v855
      %v1999 = vunpack.c.l.s4 1983009808
      %v2000 = vunpack.c.0.s8 %v1999
      %v2001 = vperm.slane %v1997, %v2000
      %v2002 = vrot.slane %v999, 4
      %v2003 = vsel %vm1324, %v2002, %v903
      %v2005 = vunpack.c.l.s4 1983009808
      %v2006 = vunpack.c.0.s8 %v2005
      %v2007 = vperm.slane %v2003, %v2006
      %v2008 = vrot.slane %v2007, 4
      %v2009 = vsel %vm1324, %v2008, %v2001
      %v2010 = vrot.slane %v2001, 4
      %v2011 = vsel %vm1324, %v2007, %v2010
      %v2013 = vunpack.c.l.s4 1934713408
      %v2014 = vunpack.c.0.s8 %v2013
      %v2015 = vperm.slane %v2009, %v2014
      %v2017 = vunpack.c.l.s4 1934713408
      %v2018 = vunpack.c.0.s8 %v2017
      %v2019 = vperm.slane %v2011, %v2018
      %v2020 = vrot.slane %v2015, 4
      %v2021 = vsel %vm1324, 0, %v2020
      %v2022 = vrot.slane %v2019, 4
      %v2023 = vsel %vm1324, 0, %v2022
      %v2024 = vrot.slane %v975, 4
      %v2025 = vsel %vm1324, %v2024, %v879
      %v2027 = vunpack.c.l.s4 1983009808
      %v2028 = vunpack.c.0.s8 %v2027
      %v2029 = vperm.slane %v2025, %v2028
      %v2030 = vrot.slane %v1023, 4
      %v2031 = vsel %vm1324, %v2030, %v927
      %v2033 = vunpack.c.l.s4 1983009808
      %v2034 = vunpack.c.0.s8 %v2033
      %v2035 = vperm.slane %v2031, %v2034
      %v2036 = vrot.slane %v2035, 4
      %v2037 = vsel %vm1324, %v2036, %v2029
      %v2038 = vrot.slane %v2029, 4
      %v2039 = vsel %vm1324, %v2035, %v2038
      %v2041 = vunpack.c.l.s4 1934713408
      %v2042 = vunpack.c.0.s8 %v2041
      %v2043 = vperm.slane %v2037, %v2042
      %v2045 = vunpack.c.l.s4 1934713408
      %v2046 = vunpack.c.0.s8 %v2045
      %v2047 = vperm.slane %v2039, %v2046
      %v2048 = vrot.slane %v2043, 4
      %v2049 = vsel %vm1324, 0, %v2048
      %v2050 = vrot.slane %v2047, 4
      %v2051 = vsel %vm1324, 0, %v2050
      %v2052 = vrot.slane %v1059, 4
      %v2053 = vsel %vm1324, %v2052, %v1043
      %v2055 = vunpack.c.l.s4 1983009808
      %v2056 = vunpack.c.0.s8 %v2055
      %v2057 = vperm.slane %v2053, %v2056
      %v2058 = vrot.slane %v1067, 4
      %v2059 = vsel %vm1324, %v2058, %v1051
      %v2061 = vunpack.c.l.s4 1983009808
      %v2062 = vunpack.c.0.s8 %v2061
      %v2063 = vperm.slane %v2059, %v2062
      %v2064 = vrot.slane %v2063, 4
      %v2065 = vsel %vm1324, %v2064, %v2057
      %v2066 = vrot.slane %v2057, 4
      %v2067 = vsel %vm1324, %v2063, %v2066
      %v2069 = vunpack.c.l.s4 1934713408
      %v2070 = vunpack.c.0.s8 %v2069
      %v2071 = vperm.slane %v2065, %v2070
      %v2073 = vunpack.c.l.s4 1934713408
      %v2074 = vunpack.c.0.s8 %v2073
      %v2075 = vperm.slane %v2067, %v2074
      %v2076 = vrot.slane %v2071, 4
      %v2077 = vsel %vm1324, 0, %v2076
      %v2078 = vrot.slane %v2075, 4
      %v2079 = vsel %vm1324, 0, %v2078
      %v2080 = vrot.slane %v1063, 4
      %v2081 = vsel %vm1324, %v2080, %v1047
      %v2083 = vunpack.c.l.s4 1983009808
      %v2084 = vunpack.c.0.s8 %v2083
      %v2085 = vperm.slane %v2081, %v2084
      %v2086 = vrot.slane %v1071, 4
      %v2087 = vsel %vm1324, %v2086, %v1055
      %v2089 = vunpack.c.l.s4 1983009808
      %v2090 = vunpack.c.0.s8 %v2089
      %v2091 = vperm.slane %v2087, %v2090
      %v2092 = vrot.slane %v2091, 4
      %v2093 = vsel %vm1324, %v2092, %v2085
      %v2094 = vrot.slane %v2085, 4
      %v2095 = vsel %vm1324, %v2091, %v2094
      %v2097 = vunpack.c.l.s4 1934713408
      %v2098 = vunpack.c.0.s8 %v2097
      %v2099 = vperm.slane %v2093, %v2098
      %v2101 = vunpack.c.l.s4 1934713408
      %v2102 = vunpack.c.0.s8 %v2101
      %v2103 = vperm.slane %v2095, %v2102
      %v2104 = vrot.slane %v2099, 4
      %v2105 = vsel %vm1324, 0, %v2104
      %v2106 = vrot.slane %v2103, 4
      %v2107 = vsel %vm1324, 0, %v2106
      %v2108 = vrot.slane %v1107, 4
      %v2109 = vsel %vm1324, %v2108, %v1091
      %v2111 = vunpack.c.l.s4 1983009808
      %v2112 = vunpack.c.0.s8 %v2111
      %v2113 = vperm.slane %v2109, %v2112
      %v2114 = vrot.slane %v1115, 4
      %v2115 = vsel %vm1324, %v2114, %v1099
      %v2117 = vunpack.c.l.s4 1983009808
      %v2118 = vunpack.c.0.s8 %v2117
      %v2119 = vperm.slane %v2115, %v2118
      %v2120 = vrot.slane %v2119, 4
      %v2121 = vsel %vm1324, %v2120, %v2113
      %v2122 = vrot.slane %v2113, 4
      %v2123 = vsel %vm1324, %v2119, %v2122
      %v2125 = vunpack.c.l.s4 1934713408
      %v2126 = vunpack.c.0.s8 %v2125
      %v2127 = vperm.slane %v2121, %v2126
      %v2129 = vunpack.c.l.s4 1934713408
      %v2130 = vunpack.c.0.s8 %v2129
      %v2131 = vperm.slane %v2123, %v2130
      %v2132 = vrot.slane %v2127, 4
      %v2133 = vsel %vm1324, 0, %v2132
      %v2134 = vrot.slane %v2131, 4
      %v2135 = vsel %vm1324, 0, %v2134
      %v2136 = vrot.slane %v1111, 4
      %v2137 = vsel %vm1324, %v2136, %v1095
      %v2139 = vunpack.c.l.s4 1983009808
      %v2140 = vunpack.c.0.s8 %v2139
      %v2141 = vperm.slane %v2137, %v2140
      %v2142 = vrot.slane %v1119, 4
      %v2143 = vsel %vm1324, %v2142, %v1103
      %v2145 = vunpack.c.l.s4 1983009808
      %v2146 = vunpack.c.0.s8 %v2145
      %v2147 = vperm.slane %v2143, %v2146
      %v2148 = vrot.slane %v2147, 4
      %v2149 = vsel %vm1324, %v2148, %v2141
      %v2150 = vrot.slane %v2141, 4
      %v2151 = vsel %vm1324, %v2147, %v2150
      %v2153 = vunpack.c.l.s4 1934713408
      %v2154 = vunpack.c.0.s8 %v2153
      %v2155 = vperm.slane %v2149, %v2154
      %v2157 = vunpack.c.l.s4 1934713408
      %v2158 = vunpack.c.0.s8 %v2157
      %v2159 = vperm.slane %v2151, %v2158
      %v2160 = vrot.slane %v2155, 4
      %v2161 = vsel %vm1324, 0, %v2160
      %v2162 = vrot.slane %v2159, 4
      %v2163 = vsel %vm1324, 0, %v2162
      %v2164 = vrot.slane %v1189, 4
      %v2165 = vsel %vm1324, %v2164, %v1161
      %v2167 = vunpack.c.l.s4 1983009808
      %v2168 = vunpack.c.0.s8 %v2167
      %v2169 = vperm.slane %v2165, %v2168
      %v2170 = vrot.slane %v1203, 4
      %v2171 = vsel %vm1324, %v2170, %v1175
      %v2173 = vunpack.c.l.s4 1983009808
      %v2174 = vunpack.c.0.s8 %v2173
      %v2175 = vperm.slane %v2171, %v2174
      %v2176 = vrot.slane %v2175, 4
      %v2177 = vsel %vm1324, %v2176, %v2169
      %v2178 = vrot.slane %v2169, 4
      %v2179 = vsel %vm1324, %v2175, %v2178
      %v2181 = vunpack.c.l.s4 1934713408
      %v2182 = vunpack.c.0.s8 %v2181
      %v2183 = vperm.slane %v2177, %v2182
      %v2185 = vunpack.c.l.s4 1934713408
      %v2186 = vunpack.c.0.s8 %v2185
      %v2187 = vperm.slane %v2179, %v2186
      %v2188 = vrot.slane %v2183, 4
      %v2189 = vsel %vm1324, 0, %v2188
      %v2190 = vrot.slane %v2187, 4
      %v2191 = vsel %vm1324, 0, %v2190
      %v2192 = vrot.slane %v1196, 4
      %v2193 = vsel %vm1324, %v2192, %v1168
      %v2195 = vunpack.c.l.s4 1983009808
      %v2196 = vunpack.c.0.s8 %v2195
      %v2197 = vperm.slane %v2193, %v2196
      %v2198 = vrot.slane %v1210, 4
      %v2199 = vsel %vm1324, %v2198, %v1182
      %v2201 = vunpack.c.l.s4 1983009808
      %v2202 = vunpack.c.0.s8 %v2201
      %v2203 = vperm.slane %v2199, %v2202
      %v2204 = vrot.slane %v2203, 4
      %v2205 = vsel %vm1324, %v2204, %v2197
      %v2206 = vrot.slane %v2197, 4
      %v2207 = vsel %vm1324, %v2203, %v2206
      %v2209 = vunpack.c.l.s4 1934713408
      %v2210 = vunpack.c.0.s8 %v2209
      %v2211 = vperm.slane %v2205, %v2210
      %v2213 = vunpack.c.l.s4 1934713408
      %v2214 = vunpack.c.0.s8 %v2213
      %v2215 = vperm.slane %v2207, %v2214
      %v2216 = vrot.slane %v2211, 4
      %v2217 = vsel %vm1324, 0, %v2216
      %v2218 = vrot.slane %v2215, 4
      %v2219 = vsel %vm1324, 0, %v2218
      %v2220 = vrot.slane %v1246, 4
      %v2221 = vsel %vm1324, %v2220, %v1230
      %v2223 = vunpack.c.l.s4 1983009808
      %v2224 = vunpack.c.0.s8 %v2223
      %v2225 = vperm.slane %v2221, %v2224
      %v2226 = vrot.slane %v1254, 4
      %v2227 = vsel %vm1324, %v2226, %v1238
      %v2229 = vunpack.c.l.s4 1983009808
      %v2230 = vunpack.c.0.s8 %v2229
      %v2231 = vperm.slane %v2227, %v2230
      %v2232 = vrot.slane %v2231, 4
      %v2233 = vsel %vm1324, %v2232, %v2225
      %v2234 = vrot.slane %v2225, 4
      %v2235 = vsel %vm1324, %v2231, %v2234
      %v2237 = vunpack.c.l.s4 1934713408
      %v2238 = vunpack.c.0.s8 %v2237
      %v2239 = vperm.slane %v2233, %v2238
      %v2241 = vunpack.c.l.s4 1934713408
      %v2242 = vunpack.c.0.s8 %v2241
      %v2243 = vperm.slane %v2235, %v2242
      %v2244 = vrot.slane %v2239, 4
      %v2245 = vsel %vm1324, 0, %v2244
      %v2246 = vrot.slane %v2243, 4
      %v2247 = vsel %vm1324, 0, %v2246
      %v2248 = vrot.slane %v1250, 4
      %v2249 = vsel %vm1324, %v2248, %v1234
      %v2251 = vunpack.c.l.s4 1983009808
      %v2252 = vunpack.c.0.s8 %v2251
      %v2253 = vperm.slane %v2249, %v2252
      %v2254 = vrot.slane %v1258, 4
      %v2255 = vsel %vm1324, %v2254, %v1242
      %v2257 = vunpack.c.l.s4 1983009808
      %v2258 = vunpack.c.0.s8 %v2257
      %v2259 = vperm.slane %v2255, %v2258
      %v2260 = vrot.slane %v2259, 4
      %v2261 = vsel %vm1324, %v2260, %v2253
      %v2262 = vrot.slane %v2253, 4
      %v2263 = vsel %vm1324, %v2259, %v2262
      %v2265 = vunpack.c.l.s4 1934713408
      %v2266 = vunpack.c.0.s8 %v2265
      %v2267 = vperm.slane %v2261, %v2266
      %v2269 = vunpack.c.l.s4 1934713408
      %v2270 = vunpack.c.0.s8 %v2269
      %v2271 = vperm.slane %v2263, %v2270
      %v2272 = vrot.slane %v2267, 4
      %v2273 = vsel %vm1324, 0, %v2272
      %v2274 = vrot.slane %v2271, 4
      %v2275 = vsel %vm1324, 0, %v2274
      %v2276 = vrot.slane %v1294, 4
      %v2277 = vsel %vm1324, %v2276, %v1278
      %v2279 = vunpack.c.l.s4 1983009808
      %v2280 = vunpack.c.0.s8 %v2279
      %v2281 = vperm.slane %v2277, %v2280
      %v2282 = vrot.slane %v1302, 4
      %v2283 = vsel %vm1324, %v2282, %v1286
      %v2285 = vunpack.c.l.s4 1983009808
      %v2286 = vunpack.c.0.s8 %v2285
      %v2287 = vperm.slane %v2283, %v2286
      %v2288 = vrot.slane %v2287, 4
      %v2289 = vsel %vm1324, %v2288, %v2281
      %v2290 = vrot.slane %v2281, 4
      %v2291 = vsel %vm1324, %v2287, %v2290
      %v2293 = vunpack.c.l.s4 1934713408
      %v2294 = vunpack.c.0.s8 %v2293
      %v2295 = vperm.slane %v2289, %v2294
      %v2297 = vunpack.c.l.s4 1934713408
      %v2298 = vunpack.c.0.s8 %v2297
      %v2299 = vperm.slane %v2291, %v2298
      %v2300 = vrot.slane %v2295, 4
      %v2301 = vsel %vm1324, 0, %v2300
      %v2302 = vrot.slane %v2299, 4
      %v2303 = vsel %vm1324, 0, %v2302
      %v2304 = vrot.slane %v1298, 4
      %v2305 = vsel %vm1324, %v2304, %v1282
      %v2307 = vunpack.c.l.s4 1983009808
      %v2308 = vunpack.c.0.s8 %v2307
      %v2309 = vperm.slane %v2305, %v2308
      %v2310 = vrot.slane %v1306, 4
      %v2311 = vsel %vm1324, %v2310, %v1290
      %v2313 = vunpack.c.l.s4 1983009808
      %v2314 = vunpack.c.0.s8 %v2313
      %v2315 = vperm.slane %v2311, %v2314
      %v2316 = vrot.slane %v2315, 4
      %v2317 = vsel %vm1324, %v2316, %v2309
      %v2318 = vrot.slane %v2309, 4
      %v2319 = vsel %vm1324, %v2315, %v2318
      %v2321 = vunpack.c.l.s4 1934713408
      %v2322 = vunpack.c.0.s8 %v2321
      %v2323 = vperm.slane %v2317, %v2322
      %v2325 = vunpack.c.l.s4 1934713408
      %v2326 = vunpack.c.0.s8 %v2325
      %v2327 = vperm.slane %v2319, %v2326
      %v2328 = vrot.slane %v2323, 4
      %v2329 = vsel %vm1324, 0, %v2328
      %v2330 = vrot.slane %v2327, 4
      %v2331 = vsel %vm1324, 0, %v2330
      %v2334 = vpack.i.b16 %v1371, %v1343
      %v2335 = vshrl.u32 %v1343, 16
      %v2336 = vshrl.u32 %v1371, 16
      %v2337 = vpack.i.b16 %v2336, %v2335
      %v2340 = vpack.i.b16 %v1377, %v1349
      %v2341 = vshrl.u32 %v1349, 16
      %v2342 = vshrl.u32 %v1377, 16
      %v2343 = vpack.i.b16 %v2342, %v2341
      %v2346 = vpack.i.b16 %v1375, %v1347
      %v2347 = vshrl.u32 %v1347, 16
      %v2348 = vshrl.u32 %v1375, 16
      %v2349 = vpack.i.b16 %v2348, %v2347
      %v2352 = vpack.i.b16 %v1379, %v1351
      %v2353 = vshrl.u32 %v1351, 16
      %v2354 = vshrl.u32 %v1379, 16
      %v2355 = vpack.i.b16 %v2354, %v2353
      %v2358 = vpack.i.b16 %v1875, %v1847
      %v2359 = vshrl.u32 %v1847, 16
      %v2360 = vshrl.u32 %v1875, 16
      %v2361 = vpack.i.b16 %v2360, %v2359
      %v2364 = vpack.i.b16 %v1881, %v1853
      %v2365 = vshrl.u32 %v1853, 16
      %v2366 = vshrl.u32 %v1881, 16
      %v2367 = vpack.i.b16 %v2366, %v2365
      %v2370 = vpack.i.b16 %v1879, %v1851
      %v2371 = vshrl.u32 %v1851, 16
      %v2372 = vshrl.u32 %v1879, 16
      %v2373 = vpack.i.b16 %v2372, %v2371
      %v2376 = vpack.i.b16 %v1883, %v1855
      %v2377 = vshrl.u32 %v1855, 16
      %v2378 = vshrl.u32 %v1883, 16
      %v2379 = vpack.i.b16 %v2378, %v2377
      %v2382 = vpack.i.b16 %v1427, %v1399
      %v2383 = vshrl.u32 %v1399, 16
      %v2384 = vshrl.u32 %v1427, 16
      %v2385 = vpack.i.b16 %v2384, %v2383
      %v2388 = vpack.i.b16 %v1433, %v1405
      %v2389 = vshrl.u32 %v1405, 16
      %v2390 = vshrl.u32 %v1433, 16
      %v2391 = vpack.i.b16 %v2390, %v2389
      %v2394 = vpack.i.b16 %v1431, %v1403
      %v2395 = vshrl.u32 %v1403, 16
      %v2396 = vshrl.u32 %v1431, 16
      %v2397 = vpack.i.b16 %v2396, %v2395
      %v2400 = vpack.i.b16 %v1435, %v1407
      %v2401 = vshrl.u32 %v1407, 16
      %v2402 = vshrl.u32 %v1435, 16
      %v2403 = vpack.i.b16 %v2402, %v2401
      %v2406 = vpack.i.b16 %v1931, %v1903
      %v2407 = vshrl.u32 %v1903, 16
      %v2408 = vshrl.u32 %v1931, 16
      %v2409 = vpack.i.b16 %v2408, %v2407
      %v2412 = vpack.i.b16 %v1937, %v1909
      %v2413 = vshrl.u32 %v1909, 16
      %v2414 = vshrl.u32 %v1937, 16
      %v2415 = vpack.i.b16 %v2414, %v2413
      %v2418 = vpack.i.b16 %v1935, %v1907
      %v2419 = vshrl.u32 %v1907, 16
      %v2420 = vshrl.u32 %v1935, 16
      %v2421 = vpack.i.b16 %v2420, %v2419
      %v2424 = vpack.i.b16 %v1939, %v1911
      %v2425 = vshrl.u32 %v1911, 16
      %v2426 = vshrl.u32 %v1939, 16
      %v2427 = vpack.i.b16 %v2426, %v2425
      %v2430 = vpack.i.b16 %v1483, %v1455
      %v2431 = vshrl.u32 %v1455, 16
      %v2432 = vshrl.u32 %v1483, 16
      %v2433 = vpack.i.b16 %v2432, %v2431
      %v2436 = vpack.i.b16 %v1489, %v1461
      %v2437 = vshrl.u32 %v1461, 16
      %v2438 = vshrl.u32 %v1489, 16
      %v2439 = vpack.i.b16 %v2438, %v2437
      %v2442 = vpack.i.b16 %v1487, %v1459
      %v2443 = vshrl.u32 %v1459, 16
      %v2444 = vshrl.u32 %v1487, 16
      %v2445 = vpack.i.b16 %v2444, %v2443
      %v2448 = vpack.i.b16 %v1491, %v1463
      %v2449 = vshrl.u32 %v1463, 16
      %v2450 = vshrl.u32 %v1491, 16
      %v2451 = vpack.i.b16 %v2450, %v2449
      %v2454 = vpack.i.b16 %v1987, %v1959
      %v2455 = vshrl.u32 %v1959, 16
      %v2456 = vshrl.u32 %v1987, 16
      %v2457 = vpack.i.b16 %v2456, %v2455
      %v2460 = vpack.i.b16 %v1993, %v1965
      %v2461 = vshrl.u32 %v1965, 16
      %v2462 = vshrl.u32 %v1993, 16
      %v2463 = vpack.i.b16 %v2462, %v2461
      %v2466 = vpack.i.b16 %v1991, %v1963
      %v2467 = vshrl.u32 %v1963, 16
      %v2468 = vshrl.u32 %v1991, 16
      %v2469 = vpack.i.b16 %v2468, %v2467
      %v2472 = vpack.i.b16 %v1995, %v1967
      %v2473 = vshrl.u32 %v1967, 16
      %v2474 = vshrl.u32 %v1995, 16
      %v2475 = vpack.i.b16 %v2474, %v2473
      %v2478 = vpack.i.b16 %v1539, %v1511
      %v2479 = vshrl.u32 %v1511, 16
      %v2480 = vshrl.u32 %v1539, 16
      %v2481 = vpack.i.b16 %v2480, %v2479
      %v2484 = vpack.i.b16 %v1545, %v1517
      %v2485 = vshrl.u32 %v1517, 16
      %v2486 = vshrl.u32 %v1545, 16
      %v2487 = vpack.i.b16 %v2486, %v2485
      %v2490 = vpack.i.b16 %v1543, %v1515
      %v2491 = vshrl.u32 %v1515, 16
      %v2492 = vshrl.u32 %v1543, 16
      %v2493 = vpack.i.b16 %v2492, %v2491
      %v2496 = vpack.i.b16 %v1547, %v1519
      %v2497 = vshrl.u32 %v1519, 16
      %v2498 = vshrl.u32 %v1547, 16
      %v2499 = vpack.i.b16 %v2498, %v2497
      %v2502 = vpack.i.b16 %v2043, %v2015
      %v2503 = vshrl.u32 %v2015, 16
      %v2504 = vshrl.u32 %v2043, 16
      %v2505 = vpack.i.b16 %v2504, %v2503
      %v2508 = vpack.i.b16 %v2049, %v2021
      %v2509 = vshrl.u32 %v2021, 16
      %v2510 = vshrl.u32 %v2049, 16
      %v2511 = vpack.i.b16 %v2510, %v2509
      %v2514 = vpack.i.b16 %v2047, %v2019
      %v2515 = vshrl.u32 %v2019, 16
      %v2516 = vshrl.u32 %v2047, 16
      %v2517 = vpack.i.b16 %v2516, %v2515
      %v2520 = vpack.i.b16 %v2051, %v2023
      %v2521 = vshrl.u32 %v2023, 16
      %v2522 = vshrl.u32 %v2051, 16
      %v2523 = vpack.i.b16 %v2522, %v2521
      %v2526 = vpack.i.b16 %v1595, %v1567
      %v2527 = vshrl.u32 %v1567, 16
      %v2528 = vshrl.u32 %v1595, 16
      %v2529 = vpack.i.b16 %v2528, %v2527
      %v2532 = vpack.i.b16 %v1601, %v1573
      %v2533 = vshrl.u32 %v1573, 16
      %v2534 = vshrl.u32 %v1601, 16
      %v2535 = vpack.i.b16 %v2534, %v2533
      %v2538 = vpack.i.b16 %v1599, %v1571
      %v2539 = vshrl.u32 %v1571, 16
      %v2540 = vshrl.u32 %v1599, 16
      %v2541 = vpack.i.b16 %v2540, %v2539
      %v2544 = vpack.i.b16 %v1603, %v1575
      %v2545 = vshrl.u32 %v1575, 16
      %v2546 = vshrl.u32 %v1603, 16
      %v2547 = vpack.i.b16 %v2546, %v2545
      %v2550 = vpack.i.b16 %v2099, %v2071
      %v2551 = vshrl.u32 %v2071, 16
      %v2552 = vshrl.u32 %v2099, 16
      %v2553 = vpack.i.b16 %v2552, %v2551
      %v2556 = vpack.i.b16 %v2105, %v2077
      %v2557 = vshrl.u32 %v2077, 16
      %v2558 = vshrl.u32 %v2105, 16
      %v2559 = vpack.i.b16 %v2558, %v2557
      %v2562 = vpack.i.b16 %v2103, %v2075
      %v2563 = vshrl.u32 %v2075, 16
      %v2564 = vshrl.u32 %v2103, 16
      %v2565 = vpack.i.b16 %v2564, %v2563
      %v2568 = vpack.i.b16 %v2107, %v2079
      %v2569 = vshrl.u32 %v2079, 16
      %v2570 = vshrl.u32 %v2107, 16
      %v2571 = vpack.i.b16 %v2570, %v2569
      %v2574 = vpack.i.b16 %v1651, %v1623
      %v2575 = vshrl.u32 %v1623, 16
      %v2576 = vshrl.u32 %v1651, 16
      %v2577 = vpack.i.b16 %v2576, %v2575
      %v2580 = vpack.i.b16 %v1657, %v1629
      %v2581 = vshrl.u32 %v1629, 16
      %v2582 = vshrl.u32 %v1657, 16
      %v2583 = vpack.i.b16 %v2582, %v2581
      %v2586 = vpack.i.b16 %v1655, %v1627
      %v2587 = vshrl.u32 %v1627, 16
      %v2588 = vshrl.u32 %v1655, 16
      %v2589 = vpack.i.b16 %v2588, %v2587
      %v2592 = vpack.i.b16 %v1659, %v1631
      %v2593 = vshrl.u32 %v1631, 16
      %v2594 = vshrl.u32 %v1659, 16
      %v2595 = vpack.i.b16 %v2594, %v2593
      %v2598 = vpack.i.b16 %v2155, %v2127
      %v2599 = vshrl.u32 %v2127, 16
      %v2600 = vshrl.u32 %v2155, 16
      %v2601 = vpack.i.b16 %v2600, %v2599
      %v2604 = vpack.i.b16 %v2161, %v2133
      %v2605 = vshrl.u32 %v2133, 16
      %v2606 = vshrl.u32 %v2161, 16
      %v2607 = vpack.i.b16 %v2606, %v2605
      %v2610 = vpack.i.b16 %v2159, %v2131
      %v2611 = vshrl.u32 %v2131, 16
      %v2612 = vshrl.u32 %v2159, 16
      %v2613 = vpack.i.b16 %v2612, %v2611
      %v2616 = vpack.i.b16 %v2163, %v2135
      %v2617 = vshrl.u32 %v2135, 16
      %v2618 = vshrl.u32 %v2163, 16
      %v2619 = vpack.i.b16 %v2618, %v2617
      %v2622 = vpack.i.b16 %v1707, %v1679
      %v2623 = vshrl.u32 %v1679, 16
      %v2624 = vshrl.u32 %v1707, 16
      %v2625 = vpack.i.b16 %v2624, %v2623
      %v2628 = vpack.i.b16 %v1713, %v1685
      %v2629 = vshrl.u32 %v1685, 16
      %v2630 = vshrl.u32 %v1713, 16
      %v2631 = vpack.i.b16 %v2630, %v2629
      %v2634 = vpack.i.b16 %v1711, %v1683
      %v2635 = vshrl.u32 %v1683, 16
      %v2636 = vshrl.u32 %v1711, 16
      %v2637 = vpack.i.b16 %v2636, %v2635
      %v2640 = vpack.i.b16 %v1715, %v1687
      %v2641 = vshrl.u32 %v1687, 16
      %v2642 = vshrl.u32 %v1715, 16
      %v2643 = vpack.i.b16 %v2642, %v2641
      %v2646 = vpack.i.b16 %v2211, %v2183
      %v2647 = vshrl.u32 %v2183, 16
      %v2648 = vshrl.u32 %v2211, 16
      %v2649 = vpack.i.b16 %v2648, %v2647
      %v2652 = vpack.i.b16 %v2217, %v2189
      %v2653 = vshrl.u32 %v2189, 16
      %v2654 = vshrl.u32 %v2217, 16
      %v2655 = vpack.i.b16 %v2654, %v2653
      %v2658 = vpack.i.b16 %v2215, %v2187
      %v2659 = vshrl.u32 %v2187, 16
      %v2660 = vshrl.u32 %v2215, 16
      %v2661 = vpack.i.b16 %v2660, %v2659
      %v2664 = vpack.i.b16 %v2219, %v2191
      %v2665 = vshrl.u32 %v2191, 16
      %v2666 = vshrl.u32 %v2219, 16
      %v2667 = vpack.i.b16 %v2666, %v2665
      %v2670 = vpack.i.b16 %v1763, %v1735
      %v2671 = vshrl.u32 %v1735, 16
      %v2672 = vshrl.u32 %v1763, 16
      %v2673 = vpack.i.b16 %v2672, %v2671
      %v2676 = vpack.i.b16 %v1769, %v1741
      %v2677 = vshrl.u32 %v1741, 16
      %v2678 = vshrl.u32 %v1769, 16
      %v2679 = vpack.i.b16 %v2678, %v2677
      %v2682 = vpack.i.b16 %v1767, %v1739
      %v2683 = vshrl.u32 %v1739, 16
      %v2684 = vshrl.u32 %v1767, 16
      %v2685 = vpack.i.b16 %v2684, %v2683
      %v2688 = vpack.i.b16 %v1771, %v1743
      %v2689 = vshrl.u32 %v1743, 16
      %v2690 = vshrl.u32 %v1771, 16
      %v2691 = vpack.i.b16 %v2690, %v2689
      %v2694 = vpack.i.b16 %v2267, %v2239
      %v2695 = vshrl.u32 %v2239, 16
      %v2696 = vshrl.u32 %v2267, 16
      %v2697 = vpack.i.b16 %v2696, %v2695
      %v2700 = vpack.i.b16 %v2273, %v2245
      %v2701 = vshrl.u32 %v2245, 16
      %v2702 = vshrl.u32 %v2273, 16
      %v2703 = vpack.i.b16 %v2702, %v2701
      %v2706 = vpack.i.b16 %v2271, %v2243
      %v2707 = vshrl.u32 %v2243, 16
      %v2708 = vshrl.u32 %v2271, 16
      %v2709 = vpack.i.b16 %v2708, %v2707
      %v2712 = vpack.i.b16 %v2275, %v2247
      %v2713 = vshrl.u32 %v2247, 16
      %v2714 = vshrl.u32 %v2275, 16
      %v2715 = vpack.i.b16 %v2714, %v2713
      %v2718 = vpack.i.b16 %v1819, %v1791
      %v2719 = vshrl.u32 %v1791, 16
      %v2720 = vshrl.u32 %v1819, 16
      %v2721 = vpack.i.b16 %v2720, %v2719
      %v2724 = vpack.i.b16 %v1825, %v1797
      %v2725 = vshrl.u32 %v1797, 16
      %v2726 = vshrl.u32 %v1825, 16
      %v2727 = vpack.i.b16 %v2726, %v2725
      %v2730 = vpack.i.b16 %v1823, %v1795
      %v2731 = vshrl.u32 %v1795, 16
      %v2732 = vshrl.u32 %v1823, 16
      %v2733 = vpack.i.b16 %v2732, %v2731
      %v2736 = vpack.i.b16 %v1827, %v1799
      %v2737 = vshrl.u32 %v1799, 16
      %v2738 = vshrl.u32 %v1827, 16
      %v2739 = vpack.i.b16 %v2738, %v2737
      %v2742 = vpack.i.b16 %v2323, %v2295
      %v2743 = vshrl.u32 %v2295, 16
      %v2744 = vshrl.u32 %v2323, 16
      %v2745 = vpack.i.b16 %v2744, %v2743
      %v2748 = vpack.i.b16 %v2329, %v2301
      %v2749 = vshrl.u32 %v2301, 16
      %v2750 = vshrl.u32 %v2329, 16
      %v2751 = vpack.i.b16 %v2750, %v2749
      %v2754 = vpack.i.b16 %v2327, %v2299
      %v2755 = vshrl.u32 %v2299, 16
      %v2756 = vshrl.u32 %v2327, 16
      %v2757 = vpack.i.b16 %v2756, %v2755
      %v2760 = vpack.i.b16 %v2331, %v2303
      %v2761 = vshrl.u32 %v2303, 16
      %v2762 = vshrl.u32 %v2331, 16
      %v2763 = vpack.i.b16 %v2762, %v2761
      %v2764 = vunpack.c.l.b16 %v2334
      %v2765 = vunpack.c.l.b16 %v2382
      %v2766 = vunpack.c.l.b16 %v2430
      %v2767 = vunpack.c.l.b16 %v2478
      %v2768 = vunpack.c.l.b16 %v2526
      %v2769 = vunpack.c.l.b16 %v2574
      %v2770 = vunpack.c.l.b16 %v2622
      %v2771 = vunpack.c.l.b16 %v2670
      %v2772 = vunpack.c.l.b16 %v2718
      %v2773 = vpack.c.b16 %v2765, %v2764
      %v2774 = vpack.c.b16 %v2767, %v2766
      %v2775 = vpack.c.b16 %v2769, %v2768
      %v2776 = vpack.c.b16 %v2771, %v2770
      %v2777 = vpack.c.b16 %v2772, %v2772
      %v2778 = vunpack.c.l.b16 %v2337
      %v2779 = vunpack.c.l.b16 %v2385
      %v2780 = vunpack.c.l.b16 %v2433
      %v2781 = vunpack.c.l.b16 %v2481
      %v2782 = vunpack.c.l.b16 %v2529
      %v2783 = vunpack.c.l.b16 %v2577
      %v2784 = vunpack.c.l.b16 %v2625
      %v2785 = vunpack.c.l.b16 %v2673
      %v2786 = vunpack.c.l.b16 %v2721
      %v2787 = vpack.c.b16 %v2779, %v2778
      %v2788 = vpack.c.b16 %v2781, %v2780
      %v2789 = vpack.c.b16 %v2783, %v2782
      %v2790 = vpack.c.b16 %v2785, %v2784
      %v2791 = vpack.c.b16 %v2786, %v2786
      %2792 = vrot.lane.b32.xlu0 %v2787, 16
      %v2793 = vpop.permute.xlu0 %2792
      %2794 = vrot.lane.b32.xlu0 %v2788, 16
      %v2795 = vpop.permute.xlu0 %2794
      %2796 = vrot.lane.b32.xlu0 %v2789, 16
      %v2797 = vpop.permute.xlu0 %2796
      %2798 = vrot.lane.b32.xlu0 %v2790, 16
      %v2799 = vpop.permute.xlu0 %2798
      %2800 = vrot.lane.b32.xlu0 %v2791, 16
      %v2801 = vpop.permute.xlu0 %2800
      %v2802 = vunpack.c.l.b16 %v2340
      %v2803 = vunpack.c.l.b16 %v2388
      %v2804 = vunpack.c.l.b16 %v2436
      %v2805 = vunpack.c.l.b16 %v2484
      %v2806 = vunpack.c.l.b16 %v2532
      %v2807 = vunpack.c.l.b16 %v2580
      %v2808 = vunpack.c.l.b16 %v2628
      %v2809 = vunpack.c.l.b16 %v2676
      %v2810 = vunpack.c.l.b16 %v2724
      %v2811 = vpack.c.b16 %v2803, %v2802
      %v2812 = vpack.c.b16 %v2805, %v2804
      %v2813 = vpack.c.b16 %v2807, %v2806
      %v2814 = vpack.c.b16 %v2809, %v2808
      %v2815 = vpack.c.b16 %v2810, %v2810
      %2816 = vrot.lane.b32.xlu0 %v2811, 32
      %v2817 = vpop.permute.xlu0 %2816
      %2818 = vrot.lane.b32.xlu0 %v2812, 32
      %v2819 = vpop.permute.xlu0 %2818
      %2820 = vrot.lane.b32.xlu0 %v2813, 32
      %v2821 = vpop.permute.xlu0 %2820
      %2822 = vrot.lane.b32.xlu0 %v2814, 32
      %v2823 = vpop.permute.xlu0 %2822
      %2824 = vrot.lane.b32.xlu0 %v2815, 32
      %v2825 = vpop.permute.xlu0 %2824
      %v2826 = vunpack.c.l.b16 %v2343
      %v2827 = vunpack.c.l.b16 %v2391
      %v2828 = vunpack.c.l.b16 %v2439
      %v2829 = vunpack.c.l.b16 %v2487
      %v2830 = vunpack.c.l.b16 %v2535
      %v2831 = vunpack.c.l.b16 %v2583
      %v2832 = vunpack.c.l.b16 %v2631
      %v2833 = vunpack.c.l.b16 %v2679
      %v2834 = vunpack.c.l.b16 %v2727
      %v2835 = vpack.c.b16 %v2827, %v2826
      %v2836 = vpack.c.b16 %v2829, %v2828
      %v2837 = vpack.c.b16 %v2831, %v2830
      %v2838 = vpack.c.b16 %v2833, %v2832
      %v2839 = vpack.c.b16 %v2834, %v2834
      %2840 = vrot.lane.b32.xlu0 %v2835, 48
      %v2841 = vpop.permute.xlu0 %2840
      %2842 = vrot.lane.b32.xlu0 %v2836, 48
      %v2843 = vpop.permute.xlu0 %2842
      %2844 = vrot.lane.b32.xlu0 %v2837, 48
      %v2845 = vpop.permute.xlu0 %2844
      %2846 = vrot.lane.b32.xlu0 %v2838, 48
      %v2847 = vpop.permute.xlu0 %2846
      %2848 = vrot.lane.b32.xlu0 %v2839, 48
      %v2849 = vpop.permute.xlu0 %2848
      %v2850 = vunpack.c.l.b16 %v2346
      %v2851 = vunpack.c.l.b16 %v2394
      %v2852 = vunpack.c.l.b16 %v2442
      %v2853 = vunpack.c.l.b16 %v2490
      %v2854 = vunpack.c.l.b16 %v2538
      %v2855 = vunpack.c.l.b16 %v2586
      %v2856 = vunpack.c.l.b16 %v2634
      %v2857 = vunpack.c.l.b16 %v2682
      %v2858 = vunpack.c.l.b16 %v2730
      %v2859 = vpack.c.b16 %v2851, %v2850
      %v2860 = vpack.c.b16 %v2853, %v2852
      %v2861 = vpack.c.b16 %v2855, %v2854
      %v2862 = vpack.c.b16 %v2857, %v2856
      %v2863 = vpack.c.b16 %v2858, %v2858
      %2864 = vrot.lane.b32.xlu0 %v2859, 64
      %v2865 = vpop.permute.xlu0 %2864
      %2866 = vrot.lane.b32.xlu0 %v2860, 64
      %v2867 = vpop.permute.xlu0 %2866
      %2868 = vrot.lane.b32.xlu0 %v2861, 64
      %v2869 = vpop.permute.xlu0 %2868
      %2870 = vrot.lane.b32.xlu0 %v2862, 64
      %v2871 = vpop.permute.xlu0 %2870
      %2872 = vrot.lane.b32.xlu0 %v2863, 64
      %v2873 = vpop.permute.xlu0 %2872
      %v2874 = vunpack.c.l.b16 %v2349
      %v2875 = vunpack.c.l.b16 %v2397
      %v2876 = vunpack.c.l.b16 %v2445
      %v2877 = vunpack.c.l.b16 %v2493
      %v2878 = vunpack.c.l.b16 %v2541
      %v2879 = vunpack.c.l.b16 %v2589
      %v2880 = vunpack.c.l.b16 %v2637
      %v2881 = vunpack.c.l.b16 %v2685
      %v2882 = vunpack.c.l.b16 %v2733
      %v2883 = vpack.c.b16 %v2875, %v2874
      %v2884 = vpack.c.b16 %v2877, %v2876
      %v2885 = vpack.c.b16 %v2879, %v2878
      %v2886 = vpack.c.b16 %v2881, %v2880
      %v2887 = vpack.c.b16 %v2882, %v2882
      %2888 = vrot.lane.b32.xlu0 %v2883, 80
      %v2889 = vpop.permute.xlu0 %2888
      %2890 = vrot.lane.b32.xlu0 %v2884, 80
      %v2891 = vpop.permute.xlu0 %2890
      %2892 = vrot.lane.b32.xlu0 %v2885, 80
      %v2893 = vpop.permute.xlu0 %2892
      %2894 = vrot.lane.b32.xlu0 %v2886, 80
      %v2895 = vpop.permute.xlu0 %2894
      %2896 = vrot.lane.b32.xlu0 %v2887, 80
      %v2897 = vpop.permute.xlu0 %2896
      %v2898 = vunpack.c.l.b16 %v2352
      %v2899 = vunpack.c.l.b16 %v2400
      %v2900 = vunpack.c.l.b16 %v2448
      %v2901 = vunpack.c.l.b16 %v2496
      %v2902 = vunpack.c.l.b16 %v2544
      %v2903 = vunpack.c.l.b16 %v2592
      %v2904 = vunpack.c.l.b16 %v2640
      %v2905 = vunpack.c.l.b16 %v2688
      %v2906 = vunpack.c.l.b16 %v2736
      %v2907 = vpack.c.b16 %v2899, %v2898
      %v2908 = vpack.c.b16 %v2901, %v2900
      %v2909 = vpack.c.b16 %v2903, %v2902
      %v2910 = vpack.c.b16 %v2905, %v2904
      %v2911 = vpack.c.b16 %v2906, %v2906
      %2912 = vrot.lane.b32.xlu0 %v2907, 96
      %v2913 = vpop.permute.xlu0 %2912
      %2914 = vrot.lane.b32.xlu0 %v2908, 96
      %v2915 = vpop.permute.xlu0 %2914
      %2916 = vrot.lane.b32.xlu0 %v2909, 96
      %v2917 = vpop.permute.xlu0 %2916
      %2918 = vrot.lane.b32.xlu0 %v2910, 96
      %v2919 = vpop.permute.xlu0 %2918
      %2920 = vrot.lane.b32.xlu0 %v2911, 96
      %v2921 = vpop.permute.xlu0 %2920
      %v2922 = vunpack.c.l.b16 %v2355
      %v2923 = vunpack.c.l.b16 %v2403
      %v2924 = vunpack.c.l.b16 %v2451
      %v2925 = vunpack.c.l.b16 %v2499
      %v2926 = vunpack.c.l.b16 %v2547
      %v2927 = vunpack.c.l.b16 %v2595
      %v2928 = vunpack.c.l.b16 %v2643
      %v2929 = vunpack.c.l.b16 %v2691
      %v2930 = vunpack.c.l.b16 %v2739
      %v2931 = vpack.c.b16 %v2923, %v2922
      %v2932 = vpack.c.b16 %v2925, %v2924
      %v2933 = vpack.c.b16 %v2927, %v2926
      %v2934 = vpack.c.b16 %v2929, %v2928
      %v2935 = vpack.c.b16 %v2930, %v2930
      %2936 = vrot.lane.b32.xlu0 %v2931, 112
      %v2937 = vpop.permute.xlu0 %2936
      %2938 = vrot.lane.b32.xlu0 %v2932, 112
      %v2939 = vpop.permute.xlu0 %2938
      %2940 = vrot.lane.b32.xlu0 %v2933, 112
      %v2941 = vpop.permute.xlu0 %2940
      %2942 = vrot.lane.b32.xlu0 %v2934, 112
      %v2943 = vpop.permute.xlu0 %2942
      %2944 = vrot.lane.b32.xlu0 %v2935, 112
      %v2945 = vpop.permute.xlu0 %2944
      %v2946 = vunpack.c.l.b16 %v2358
      %v2947 = vunpack.c.l.b16 %v2406
      %v2948 = vunpack.c.l.b16 %v2454
      %v2949 = vunpack.c.l.b16 %v2502
      %v2950 = vunpack.c.l.b16 %v2550
      %v2951 = vunpack.c.l.b16 %v2598
      %v2952 = vunpack.c.l.b16 %v2646
      %v2953 = vunpack.c.l.b16 %v2694
      %v2954 = vunpack.c.l.b16 %v2742
      %v2955 = vpack.c.b16 %v2947, %v2946
      %v2956 = vpack.c.b16 %v2949, %v2948
      %v2957 = vpack.c.b16 %v2951, %v2950
      %v2958 = vpack.c.b16 %v2953, %v2952
      %v2959 = vpack.c.b16 %v2954, %v2954
      %v2960 = vunpack.c.l.b16 %v2361
      %v2961 = vunpack.c.l.b16 %v2409
      %v2962 = vunpack.c.l.b16 %v2457
      %v2963 = vunpack.c.l.b16 %v2505
      %v2964 = vunpack.c.l.b16 %v2553
      %v2965 = vunpack.c.l.b16 %v2601
      %v2966 = vunpack.c.l.b16 %v2649
      %v2967 = vunpack.c.l.b16 %v2697
      %v2968 = vunpack.c.l.b16 %v2745
      %v2969 = vpack.c.b16 %v2961, %v2960
      %v2970 = vpack.c.b16 %v2963, %v2962
      %v2971 = vpack.c.b16 %v2965, %v2964
      %v2972 = vpack.c.b16 %v2967, %v2966
      %v2973 = vpack.c.b16 %v2968, %v2968
      %2974 = vrot.lane.b32.xlu0 %v2969, 16
      %v2975 = vpop.permute.xlu0 %2974
      %2976 = vrot.lane.b32.xlu0 %v2970, 16
      %v2977 = vpop.permute.xlu0 %2976
      %2978 = vrot.lane.b32.xlu0 %v2971, 16
      %v2979 = vpop.permute.xlu0 %2978
      %2980 = vrot.lane.b32.xlu0 %v2972, 16
      %v2981 = vpop.permute.xlu0 %2980
      %2982 = vrot.lane.b32.xlu0 %v2973, 16
      %v2983 = vpop.permute.xlu0 %2982
      %v2984 = vunpack.c.l.b16 %v2364
      %v2985 = vunpack.c.l.b16 %v2412
      %v2986 = vunpack.c.l.b16 %v2460
      %v2987 = vunpack.c.l.b16 %v2508
      %v2988 = vunpack.c.l.b16 %v2556
      %v2989 = vunpack.c.l.b16 %v2604
      %v2990 = vunpack.c.l.b16 %v2652
      %v2991 = vunpack.c.l.b16 %v2700
      %v2992 = vunpack.c.l.b16 %v2748
      %v2993 = vpack.c.b16 %v2985, %v2984
      %v2994 = vpack.c.b16 %v2987, %v2986
      %v2995 = vpack.c.b16 %v2989, %v2988
      %v2996 = vpack.c.b16 %v2991, %v2990
      %v2997 = vpack.c.b16 %v2992, %v2992
      %2998 = vrot.lane.b32.xlu0 %v2993, 32
      %v2999 = vpop.permute.xlu0 %2998
      %3000 = vrot.lane.b32.xlu0 %v2994, 32
      %v3001 = vpop.permute.xlu0 %3000
      %3002 = vrot.lane.b32.xlu0 %v2995, 32
      %v3003 = vpop.permute.xlu0 %3002
      %3004 = vrot.lane.b32.xlu0 %v2996, 32
      %v3005 = vpop.permute.xlu0 %3004
      %3006 = vrot.lane.b32.xlu0 %v2997, 32
      %v3007 = vpop.permute.xlu0 %3006
      %v3008 = vunpack.c.l.b16 %v2367
      %v3009 = vunpack.c.l.b16 %v2415
      %v3010 = vunpack.c.l.b16 %v2463
      %v3011 = vunpack.c.l.b16 %v2511
      %v3012 = vunpack.c.l.b16 %v2559
      %v3013 = vunpack.c.l.b16 %v2607
      %v3014 = vunpack.c.l.b16 %v2655
      %v3015 = vunpack.c.l.b16 %v2703
      %v3016 = vunpack.c.l.b16 %v2751
      %v3017 = vpack.c.b16 %v3009, %v3008
      %v3018 = vpack.c.b16 %v3011, %v3010
      %v3019 = vpack.c.b16 %v3013, %v3012
      %v3020 = vpack.c.b16 %v3015, %v3014
      %v3021 = vpack.c.b16 %v3016, %v3016
      %3022 = vrot.lane.b32.xlu0 %v3017, 48
      %v3023 = vpop.permute.xlu0 %3022
      %3024 = vrot.lane.b32.xlu0 %v3018, 48
      %v3025 = vpop.permute.xlu0 %3024
      %3026 = vrot.lane.b32.xlu0 %v3019, 48
      %v3027 = vpop.permute.xlu0 %3026
      %3028 = vrot.lane.b32.xlu0 %v3020, 48
      %v3029 = vpop.permute.xlu0 %3028
      %3030 = vrot.lane.b32.xlu0 %v3021, 48
      %v3031 = vpop.permute.xlu0 %3030
      %v3032 = vunpack.c.l.b16 %v2370
      %v3033 = vunpack.c.l.b16 %v2418
      %v3034 = vunpack.c.l.b16 %v2466
      %v3035 = vunpack.c.l.b16 %v2514
      %v3036 = vunpack.c.l.b16 %v2562
      %v3037 = vunpack.c.l.b16 %v2610
      %v3038 = vunpack.c.l.b16 %v2658
      %v3039 = vunpack.c.l.b16 %v2706
      %v3040 = vunpack.c.l.b16 %v2754
      %v3041 = vpack.c.b16 %v3033, %v3032
      %v3042 = vpack.c.b16 %v3035, %v3034
      %v3043 = vpack.c.b16 %v3037, %v3036
      %v3044 = vpack.c.b16 %v3039, %v3038
      %v3045 = vpack.c.b16 %v3040, %v3040
      %3046 = vrot.lane.b32.xlu0 %v3041, 64
      %v3047 = vpop.permute.xlu0 %3046
      %3048 = vrot.lane.b32.xlu0 %v3042, 64
      %v3049 = vpop.permute.xlu0 %3048
      %3050 = vrot.lane.b32.xlu0 %v3043, 64
      %v3051 = vpop.permute.xlu0 %3050
      %3052 = vrot.lane.b32.xlu0 %v3044, 64
      %v3053 = vpop.permute.xlu0 %3052
      %3054 = vrot.lane.b32.xlu0 %v3045, 64
      %v3055 = vpop.permute.xlu0 %3054
      %v3056 = vunpack.c.l.b16 %v2373
      %v3057 = vunpack.c.l.b16 %v2421
      %v3058 = vunpack.c.l.b16 %v2469
      %v3059 = vunpack.c.l.b16 %v2517
      %v3060 = vunpack.c.l.b16 %v2565
      %v3061 = vunpack.c.l.b16 %v2613
      %v3062 = vunpack.c.l.b16 %v2661
      %v3063 = vunpack.c.l.b16 %v2709
      %v3064 = vunpack.c.l.b16 %v2757
      %v3065 = vpack.c.b16 %v3057, %v3056
      %v3066 = vpack.c.b16 %v3059, %v3058
      %v3067 = vpack.c.b16 %v3061, %v3060
      %v3068 = vpack.c.b16 %v3063, %v3062
      %v3069 = vpack.c.b16 %v3064, %v3064
      %3070 = vrot.lane.b32.xlu0 %v3065, 80
      %v3071 = vpop.permute.xlu0 %3070
      %3072 = vrot.lane.b32.xlu0 %v3066, 80
      %v3073 = vpop.permute.xlu0 %3072
      %3074 = vrot.lane.b32.xlu0 %v3067, 80
      %v3075 = vpop.permute.xlu0 %3074
      %3076 = vrot.lane.b32.xlu0 %v3068, 80
      %v3077 = vpop.permute.xlu0 %3076
      %3078 = vrot.lane.b32.xlu0 %v3069, 80
      %v3079 = vpop.permute.xlu0 %3078
      %v3080 = vunpack.c.l.b16 %v2376
      %v3081 = vunpack.c.l.b16 %v2424
      %v3082 = vunpack.c.l.b16 %v2472
      %v3083 = vunpack.c.l.b16 %v2520
      %v3084 = vunpack.c.l.b16 %v2568
      %v3085 = vunpack.c.l.b16 %v2616
      %v3086 = vunpack.c.l.b16 %v2664
      %v3087 = vunpack.c.l.b16 %v2712
      %v3088 = vunpack.c.l.b16 %v2760
      %v3089 = vpack.c.b16 %v3081, %v3080
      %v3090 = vpack.c.b16 %v3083, %v3082
      %v3091 = vpack.c.b16 %v3085, %v3084
      %v3092 = vpack.c.b16 %v3087, %v3086
      %v3093 = vpack.c.b16 %v3088, %v3088
      %3094 = vrot.lane.b32.xlu0 %v3089, 96
      %v3095 = vpop.permute.xlu0 %3094
      %3096 = vrot.lane.b32.xlu0 %v3090, 96
      %v3097 = vpop.permute.xlu0 %3096
      %3098 = vrot.lane.b32.xlu0 %v3091, 96
      %v3099 = vpop.permute.xlu0 %3098
      %3100 = vrot.lane.b32.xlu0 %v3092, 96
      %v3101 = vpop.permute.xlu0 %3100
      %3102 = vrot.lane.b32.xlu0 %v3093, 96
      %v3103 = vpop.permute.xlu0 %3102
      %v3104 = vunpack.c.l.b16 %v2379
      %v3105 = vunpack.c.l.b16 %v2427
      %v3106 = vunpack.c.l.b16 %v2475
      %v3107 = vunpack.c.l.b16 %v2523
      %v3108 = vunpack.c.l.b16 %v2571
      %v3109 = vunpack.c.l.b16 %v2619
      %v3110 = vunpack.c.l.b16 %v2667
      %v3111 = vunpack.c.l.b16 %v2715
      %v3112 = vunpack.c.l.b16 %v2763
      %v3113 = vpack.c.b16 %v3105, %v3104
      %v3114 = vpack.c.b16 %v3107, %v3106
      %v3115 = vpack.c.b16 %v3109, %v3108
      %v3116 = vpack.c.b16 %v3111, %v3110
      %v3117 = vpack.c.b16 %v3112, %v3112
      %3118 = vrot.lane.b32.xlu0 %v3113, 112
      %v3119 = vpop.permute.xlu0 %3118
      %3120 = vrot.lane.b32.xlu0 %v3114, 112
      %v3121 = vpop.permute.xlu0 %3120
      %3122 = vrot.lane.b32.xlu0 %v3115, 112
      %v3123 = vpop.permute.xlu0 %3122
      %3124 = vrot.lane.b32.xlu0 %v3116, 112
      %v3125 = vpop.permute.xlu0 %3124
      %3126 = vrot.lane.b32.xlu0 %v3117, 112
      %v3127 = vpop.permute.xlu0 %3126
      %vm3128 = vcmask 130048
      %v3131 = vsel %vm3128, %v2773, %v2793
      %v3134 = vsel %vm3128, %v2774, %v2795
      %v3137 = vsel %vm3128, %v2775, %v2797
      %v3140 = vsel %vm3128, %v2776, %v2799
      %v3143 = vsel %vm3128, %v2777, %v2801
      %vm3144 = vcmask 261120
      %v3146 = vsel %vm3144, %v3131, %v2817
      %v3148 = vsel %vm3144, %v3134, %v2819
      %v3150 = vsel %vm3144, %v3137, %v2821
      %v3152 = vsel %vm3144, %v3140, %v2823
      %v3154 = vsel %vm3144, %v3143, %v2825
      %vm3155 = vcmask 392192
      %v3157 = vsel %vm3155, %v3146, %v2841
      %v3159 = vsel %vm3155, %v3148, %v2843
      %v3161 = vsel %vm3155, %v3150, %v2845
      %v3163 = vsel %vm3155, %v3152, %v2847
      %v3165 = vsel %vm3155, %v3154, %v2849
      %vm3166 = vcmask 523264
      %v3168 = vsel %vm3166, %v3157, %v2865
      %v3170 = vsel %vm3166, %v3159, %v2867
      %v3172 = vsel %vm3166, %v3161, %v2869
      %v3174 = vsel %vm3166, %v3163, %v2871
      %v3176 = vsel %vm3166, %v3165, %v2873
      %vm3177 = vcmask 654336
      %v3179 = vsel %vm3177, %v3168, %v2889
      %v3181 = vsel %vm3177, %v3170, %v2891
      %v3183 = vsel %vm3177, %v3172, %v2893
      %v3185 = vsel %vm3177, %v3174, %v2895
      %v3187 = vsel %vm3177, %v3176, %v2897
      %vm3188 = vcmask 785408
      %v3190 = vsel %vm3188, %v3179, %v2913
      %v3192 = vsel %vm3188, %v3181, %v2915
      %v3194 = vsel %vm3188, %v3183, %v2917
      %v3196 = vsel %vm3188, %v3185, %v2919
      %v3198 = vsel %vm3188, %v3187, %v2921
      %vm3199 = vcmask 916480
      %v3201 = vsel %vm3199, %v3190, %v2937
      %v3204 = vsel %vm3199, %v3192, %v2939
      %v3207 = vsel %vm3199, %v3194, %v2941
      %v3210 = vsel %vm3199, %v3196, %v2943
      %v3213 = vsel %vm3199, %v3198, %v2945
      %v3216 = vsel %vm3128, %v2955, %v2975
      %v3219 = vsel %vm3128, %v2956, %v2977
      %v3222 = vsel %vm3128, %v2957, %v2979
      %v3225 = vsel %vm3128, %v2958, %v2981
      %v3228 = vsel %vm3128, %v2959, %v2983
      %v3230 = vsel %vm3144, %v3216, %v2999
      %v3232 = vsel %vm3144, %v3219, %v3001
      %v3234 = vsel %vm3144, %v3222, %v3003
      %v3236 = vsel %vm3144, %v3225, %v3005
      %v3238 = vsel %vm3144, %v3228, %v3007
      %v3240 = vsel %vm3155, %v3230, %v3023
      %v3242 = vsel %vm3155, %v3232, %v3025
      %v3244 = vsel %vm3155, %v3234, %v3027
      %v3246 = vsel %vm3155, %v3236, %v3029
      %v3248 = vsel %vm3155, %v3238, %v3031
      %v3250 = vsel %vm3166, %v3240, %v3047
      %v3252 = vsel %vm3166, %v3242, %v3049
      %v3254 = vsel %vm3166, %v3244, %v3051
      %v3256 = vsel %vm3166, %v3246, %v3053
      %v3258 = vsel %vm3166, %v3248, %v3055
      %v3260 = vsel %vm3177, %v3250, %v3071
      %v3262 = vsel %vm3177, %v3252, %v3073
      %v3264 = vsel %vm3177, %v3254, %v3075
      %v3266 = vsel %vm3177, %v3256, %v3077
      %v3268 = vsel %vm3177, %v3258, %v3079
      %v3270 = vsel %vm3188, %v3260, %v3095
      %v3272 = vsel %vm3188, %v3262, %v3097
      %v3274 = vsel %vm3188, %v3264, %v3099
      %v3276 = vsel %vm3188, %v3266, %v3101
      %v3278 = vsel %vm3188, %v3268, %v3103
      %v3280 = vsel %vm3199, %v3270, %v3119
      %v3283 = vsel %vm3199, %v3272, %v3121
      %v3286 = vsel %vm3199, %v3274, %v3123
      %v3289 = vsel %vm3199, %v3276, %v3125
      %v3292 = vsel %vm3199, %v3278, %v3127
      %v3293 = vld [vmem:[%s2] sm:$0x3]
      %vm3294 = vcmask 588800
      %v3296 = vsel %vm3294, %v3293, 0
      %vm3298 = vcmask 1043456
      %v3299 = vsel %vm3298, %v3213, 0
      %v3301 = vsel %vm3298, %v3292, 0
      %3303 = vmatpush.bf16.msra.mxu0 0
      %3304 = vmatpush.bf16.msra.mxu0 0
      %3305 = vmatpush.bf16.msra.mxu0 0
      %3306 = vmatpush.bf16.msra.mxu0 %v3299
      %3307 = vmatpush.bf16.msra.mxu0 %v3210
      %3308 = vmatpush.bf16.msra.mxu0 %v3207
      %3309 = vmatpush.bf16.msra.mxu0 %v3204
      %3310 = vmatpush.bf16.msra.mxu0 %v3201
      %3311 = vmatmul.bf16.gmra.mxu0 %v3296
      %v3312 = vpop.f32.mrf.mxu0
      %v3313 = vadd.f32 0.0, %v3312
      %v3314 = vpop.f32.mrf.mxu0
      %3315 = vdwg.mxu0
      %3316 = vmatpush.bf16.msra.mxu0 0
      %3317 = vmatpush.bf16.msra.mxu0 0
      %3318 = vmatpush.bf16.msra.mxu0 0
      %3319 = vmatpush.bf16.msra.mxu0 %v3301
      %3320 = vmatpush.bf16.msra.mxu0 %v3289
      %3321 = vmatpush.bf16.msra.mxu0 %v3286
      %3322 = vmatpush.bf16.msra.mxu0 %v3283
      %3323 = vmatpush.bf16.msra.mxu0 %v3280
      %3324 = vmatmul.bf16.gmra.mxu0 %v3296
      %v3325 = vpop.f32.mrf.mxu0
      %v3326 = vadd.f32 0.0, %v3325
      %v3327 = vpop.f32.mrf.mxu0
      %3328 = vdwg.mxu0
      %v3331 = vrot.slane %v3326, 4
      %v3332 = vsel %vm3298, %v3313, %v3331
      %3334 = vst [vmem:[%s270] sm:$0xff] %v3332
      %v3335 = vsel %vm3298, %v3313, 0.0
      %v3336 = vsel %vm3298, %v3326, 0.0
      %v3337 = vadd.f32 %v3335, %v3336
      %3338 = vadd.xlane.f32.xlu0 %v3337
      %v3339 = vpop.xlane.xlu0 %3338
      %v3340 = vmul.f32 %v3313, %v3313
      %v3341 = vmul.f32 %v3326, %v3326
      %v3342 = vsel %vm3298, %v3340, 0.0
      %v3343 = vsel %vm3298, %v3341, 0.0
      %v3344 = vadd.f32 %v3342, %v3343
      %3345 = vadd.xlane.f32.xlu0 %v3344
      %v3346 = vpop.xlane.xlu0 %3345
      %vm3347 = vcmask 7168
      %v3348 = vsel %vm3347, %v3339, %v3346
      %vm3349 = vcmask 11264
      %3350 = vst.msk [vmem:[%s275] sm:$0xf] %vm3349, %v3348
      %s3351 = smul.u32 2, %s23
      %p3352 = scmp.lt.s32.totalorder %s22, 1
      %s3353 = scalar_select %p3352, %s22, 1
      %p3354 = scmp.lt.s32.totalorder %s3351, 1
      %s3355 = scalar_select %p3354, %s3351, 1
      %s3356 = smul.addr %s3353, 2
      %s3357 = sadd.s32 %s3355, %s3356
      %s3358 = smul.addr %s3357, 4
      %s3359 = scalar_lea.vmem %s5, %s3358
      %p3360 = scmp.lt.s32.totalorder %s22, 1
      %s3361 = scalar_select %p3360, %s22, 1
      %s3362 = smul.addr %s3361, 4
      %s3363 = scalar_lea.vmem %s6, %s3362
      // Predicated region
      $region37: #{up_forward.3} parent=35 // pred_check
        %p3364 = pneg %p141
      $region38: #{up_forward.3} parent=35 // pred_check_branch
        %3366 = sbr.rel (%p3364) target = $region40
      $region39: #{up_forward.3} parent=35 // pred_region
        %s3367 = smul.u32 2, %s23
      $region40: #{up_forward.3} parent=35 // pred_fallthru
        _
      // Predicated region
      $region41: #{up_forward.3} parent=35 // pred_check
        %p3368 = pneg %p167
      $region42: #{up_forward.3} parent=35 // pred_check_branch
        %3370 = sbr.rel (%p3368) target = $region44
      $region43: #{up_forward.3} parent=35 // pred_region
        _
      $region44: #{up_forward.3} parent=35 // pred_fallthru
        _
    $region36: #{up_forward.3} parent=5 // pred_fallthru
      _
    %p3371 = scmp.le.s32.totalorder 2, %s13
    // Predicated region
    $region45: #{up_forward.3} parent=5 // pred_check
      %p3372 = pneg %p3371
    $region46: #{up_forward.3} parent=5 // pred_check_branch
      %3374 = sbr.rel (%p3372) target = $region48
    $region47: #{up_forward.3} parent=5 // pred_region
      %s3375 = ssub.s32 %s13, 2
      // Predicated region
      $region49: #{up_forward.3} parent=47 // pred_check
        %p3376 = pneg %p147
      $region50: #{up_forward.3} parent=47 // pred_check_branch
        %3378 = sbr.rel (%p3376) target = $region52
      $region51: #{up_forward.3} parent=47 // pred_region
        %s3379 = smul.u32 2, %s25
        %p3380 = scmp.lt.s32.totalorder %s24, 1
        %s3381 = scalar_select %p3380, %s24, 1
        %p3382 = scmp.lt.s32.totalorder %s3379, 1
        %s3383 = scalar_select %p3382, %s3379, 1
        %s3384 = smul.addr %s3381, 2
        %s3385 = sadd.s32 %s3383, %s3384
        %s3386 = smul.addr %s3385, 4
        %s3387 = scalar_lea.vmem %s5, %s3386
      $region52: #{up_forward.3} parent=47 // pred_fallthru
        _
      // Predicated region
      $region53: #{up_forward.3} parent=47 // pred_check
        %p3388 = pneg %p173
      $region54: #{up_forward.3} parent=47 // pred_check_branch
        %3390 = sbr.rel (%p3388) target = $region56
      $region55: #{up_forward.3} parent=47 // pred_region
        %p3391 = scmp.lt.s32.totalorder %s24, 1
        %s3392 = scalar_select %p3391, %s24, 1
        %s3393 = smul.addr %s3392, 4
        %s3394 = scalar_lea.vmem %s6, %s3393
      $region56: #{up_forward.3} parent=47 // pred_fallthru
        _
    $region48: #{up_forward.3} parent=5 // pred_fallthru
      _
  $region6: #{up_forward.3} parent=0 // loop_footer
    %s17 = sadd.s32 1, %s13
  $region7: #{up_forward.3} parent=0 // loop_footer_branch
    %12 = sbr.rel target = $region3
  $region8: #{up_forward.3} parent=0 // loop_exit
    _
  %3395 = vsyncmov [#allocation4]
  %s3396 = vpop.sfrf %3395
  %p3397 = scmp.eq.s32.totalorder %s3396, 0
  %p3398 = pneg %p3397
  %3400 = shalt.err (%p3398)
  %s3401 = scalar_lea.sflag [#allocation4], 1
  %3402 = vsyncmov %s3401
  %s3403 = vpop.sfrf %3402
  %p3404 = scmp.eq.s32.totalorder %s3403, 0
  %p3405 = pneg %p3404
  %3407 = shalt.err (%p3405)

</llo_original>
